<compile_context>
chip_gen: v7x
topology: tpu7x:2x2x1
jax: 0.10.0
libtpu: 0.0.40
codegen_flags: <defaults>
</compile_context>

<pallas_src>
import functools
import math

import jax
import jax.numpy as jnp
from jax.experimental import pallas as pl
from jax.experimental.pallas import tpu as pltpu


# ---------------------------------------------------------------------------
# In-kernel helpers (all f32 math)
# ---------------------------------------------------------------------------
def _layer_norm(x, g, b, eps):
    mu = jnp.mean(x, axis=-1, keepdims=True)
    xc = x - mu
    var = jnp.mean(xc * xc, axis=-1, keepdims=True)
    return (xc * jax.lax.rsqrt(var + eps)) * g + b


def _gelu_tanh(x):
    # TODO(synk): HF BertModel uses exact erf-GELU; tanh approximation is
    # used here (EUP path, kept in f32 so it lowers on v5e as well).
    return 0.5 * x * (1.0 + jnp.tanh(
        0.7978845608028654 * (x + 0.044715 * x * x * x)))


# ---------------------------------------------------------------------------
# Fused whole-encoder kernel: one grid step == one transformer layer
# ---------------------------------------------------------------------------
def _encoder_kernel(emb_ref, mask_ref, emb_g_ref, emb_b_ref,
                    w_qkv_ref, b_qkv_ref, w_o_ref, b_o_ref,
                    ln1_g_ref, ln1_b_ref,
                    w_ffn1_ref, b_ffn1_ref, w_ffn2_ref, b_ffn2_ref,
                    ln2_g_ref, ln2_b_ref,
                    o_ref, *, B, S, H, Dh, eps):
    l = pl.program_id(0)
    Hd = H * Dh
    scale = 1.0 / math.sqrt(Dh)

    # Layer 0: embedding add + LayerNorm initialises the resident activation
    # (accumulator pattern: the output block index is constant across the
    # "arbitrary" layer axis, so o_ref stays in VMEM until the grid ends).
    @pl.when(l == 0)
    def _():
        o_ref[...] = _layer_norm(emb_ref[...], emb_g_ref[...],
                                 emb_b_ref[...], eps)

    x = o_ref[...]                                   # (B*S, Hd) f32

    # ---- self-attention -----------------------------------------------
    # fused QKV projection: single full-K / full-N MXU GEMM, bias fused
    qkv = jnp.dot(x.astype(jnp.bfloat16), w_qkv_ref[0],
                  preferred_element_type=jnp.float32) + b_qkv_ref[0]

    mask = mask_ref[...]                             # (B, S) additive bias
    ctx_batches = []
    for b in range(B):                               # static unroll (tiny)
        rows = slice(b * S, (b + 1) * S)
        mb = mask[b:b + 1, :]                        # (1, S)
        head_out = []
        for h in range(H):
            q = qkv[rows, h * Dh:(h + 1) * Dh].astype(jnp.bfloat16)
            k = qkv[rows, Hd + h * Dh:Hd + (h + 1) * Dh].astype(jnp.bfloat16)
            v = qkv[rows, 2 * Hd + h * Dh:
                    2 * Hd + (h + 1) * Dh].astype(jnp.bfloat16)
            # scores = q @ k^T  (MXU handles the transposed contraction)
            s = jax.lax.dot_general(q, k, (((1,), (1,)), ((), ())),
                                    preferred_element_type=jnp.float32)
            s = s * scale + mb
            s = s - jnp.max(s, axis=-1, keepdims=True)
            p = jnp.exp(s)
            p = p / jnp.sum(p, axis=-1, keepdims=True)   # exact division
            head_out.append(jnp.dot(p.astype(jnp.bfloat16), v,
                                    preferred_element_type=jnp.float32))
        ctx_batches.append(jnp.concatenate(head_out, axis=-1))   # (S, Hd)
    ctx = jnp.concatenate(ctx_batches, axis=0)                   # (B*S, Hd)

    # attention output projection with fused bias + residual + LayerNorm
    attn = jnp.dot(ctx.astype(jnp.bfloat16), w_o_ref[0],
                   preferred_element_type=jnp.float32) + b_o_ref[0]
    x = _layer_norm(x + attn, ln1_g_ref[0], ln1_b_ref[0], eps)

    # ---- FFN ------------------------------------------------------------
    h1 = jnp.dot(x.astype(jnp.bfloat16), w_ffn1_ref[0],
                 preferred_element_type=jnp.float32) + b_ffn1_ref[0]
    h1 = _gelu_tanh(h1)
    ffn = jnp.dot(h1.astype(jnp.bfloat16), w_ffn2_ref[0],
                  preferred_element_type=jnp.float32) + b_ffn2_ref[0]
    # fused residual + LayerNorm epilogue, written to the resident block
    o_ref[...] = _layer_norm(x + ffn, ln2_g_ref[0], ln2_b_ref[0], eps)


# ---------------------------------------------------------------------------
# Parameters (deterministic, synthetic small-BERT config)
# ---------------------------------------------------------------------------
def init_params(key, cfg):
    Hd, I, L = cfg["hidden"], cfg["intermediate"], cfg["layers"]
    V, P = cfg["vocab"], cfg["max_pos"]
    std = 0.02
    keys = jax.random.split(key, 11)

    def w(k, shape):   # pre-transposed (K, N) layout, pre-cast to bf16 once
        return (std * jax.random.normal(k, shape, jnp.float32)
                ).astype(jnp.bfloat16)

    def b(k, shape):
        return 0.01 * jax.random.normal(k, shape, jnp.float32)

    return {
        "word_emb": std * jax.random.normal(keys[0], (V, Hd), jnp.float32),
        "pos_emb": std * jax.random.normal(keys[1], (P, Hd), jnp.float32),
        "type_emb": std * jax.random.normal(keys[2], (2, Hd), jnp.float32),
        "emb_ln_g": jnp.ones((1, Hd), jnp.float32),
        "emb_ln_b": jnp.zeros((1, Hd), jnp.float32),
        # per-layer weights stacked on a leading L axis (streamed by layer)
        "w_qkv": w(keys[3], (L, Hd, 3 * Hd)),
        "b_qkv": b(keys[4], (L, 1, 3 * Hd)),
        "w_o": w(keys[5], (L, Hd, Hd)),
        "b_o": b(keys[6], (L, 1, Hd)),
        "ln1_g": jnp.ones((L, 1, Hd), jnp.float32),
        "ln1_b": jnp.zeros((L, 1, Hd), jnp.float32),
        "w_ffn1": w(keys[7], (L, Hd, I)),
        "b_ffn1": b(keys[8], (L, 1, I)),
        "w_ffn2": w(keys[9], (L, I, Hd)),
        "b_ffn2": b(keys[10], (L, 1, Hd)),
        "ln2_g": jnp.ones((L, 1, Hd), jnp.float32),
        "ln2_b": jnp.zeros((L, 1, Hd), jnp.float32),
    }


# ---------------------------------------------------------------------------
# Forward pass: BertModel(x, mask).last_hidden_state[:, 0, :]
# ---------------------------------------------------------------------------
def text_encoder_forward(input_ids, attention_mask, params, cfg):
    B, S = input_ids.shape
    Hd, H = cfg["hidden"], cfg["heads"]
    L, I = cfg["layers"], cfg["intermediate"]
    Dh = Hd // H
    BS = B * S
    assert Hd % 128 == 0 and I % 128 == 0 and BS % 8 == 0 and S % 8 == 0

    # Embedding id-gather + pos/type add: XLA glue (no clean small Pallas
    # equivalent for an nn.Embedding gather); fuses into one op under jit.
    # TODO(synk): id-gather done with jnp.take instead of a Pallas kernel.
    word = jnp.take(params["word_emb"], input_ids.reshape(-1), axis=0)
    pos_typ = params["pos_emb"][:S] + params["type_emb"][0]
    emb = (word.reshape(B, S, Hd) + pos_typ[None]).reshape(BS, Hd)

    # additive attention bias, kept at its raw (B, S) shape
    mask_bias = (1.0 - attention_mask.astype(jnp.float32)) * -1e9

    def wspec(shape):          # per-layer stacked weight / bias / LN param
        return pl.BlockSpec((1,) + shape, lambda l: (l, 0, 0))

    def const2(shape):         # layer-invariant 2-D input (fetched once)
        return pl.BlockSpec(shape, lambda l: (0, 0))

    grid_spec = pltpu.PrefetchScalarGridSpec(
        num_scalar_prefetch=0,
        grid=(L,),
        in_specs=[
            const2((BS, Hd)),            # emb
            const2((B, S)),              # mask bias
            const2((1, Hd)),             # emb LN gamma
            const2((1, Hd)),             # emb LN beta
            wspec((Hd, 3 * Hd)),         # w_qkv
            wspec((1, 3 * Hd)),          # b_qkv
            wspec((Hd, Hd)),             # w_o
            wspec((1, Hd)),              # b_o
            wspec((1, Hd)),              # ln1 gamma
            wspec((1, Hd)),              # ln1 beta
            wspec((Hd, I)),              # w_ffn1
            wspec((1, I)),               # b_ffn1
            wspec((I, Hd)),              # w_ffn2
            wspec((1, Hd)),              # b_ffn2
            wspec((1, Hd)),              # ln2 gamma
            wspec((1, Hd)),              # ln2 beta
        ],
        out_specs=pl.BlockSpec((BS, Hd), lambda l: (0, 0)),
    )

    out = pl.pallas_call(
        functools.partial(_encoder_kernel, B=B, S=S, H=H, Dh=Dh, eps=1e-12),
        out_shape=jax.ShapeDtypeStruct((BS, Hd), jnp.float32),
        grid_spec=grid_spec,
        compiler_params=pltpu.CompilerParams(
            # Layer axis carries the resident activation -> sequential.
            dimension_semantics=("arbitrary",),
            # Peak usage ~3.5 MiB (double-buffered per-layer weights +
            # activations); explicit limit is safe on v5e/v6e/v7x.
            vmem_limit_bytes=32 * 1024 * 1024,
        ),
    )(emb, mask_bias,
      params["emb_ln_g"], params["emb_ln_b"],
      params["w_qkv"], params["b_qkv"],
      params["w_o"], params["b_o"],
      params["ln1_g"], params["ln1_b"],
      params["w_ffn1"], params["b_ffn1"],
      params["w_ffn2"], params["b_ffn2"],
      params["ln2_g"], params["ln2_b"])

    # out.last_hidden_state[:, 0, :]  (CLS token)
    return out.reshape(B, S, Hd)[:, 0, :]


if __name__ == "__main__":
    cfg = dict(vocab=512, hidden=256, heads=4, intermediate=1024,
               layers=4, max_pos=64)

    key = jax.random.PRNGKey(0)
    k_param, k_ids = jax.random.split(key)
    params = init_params(k_param, cfg)

    B, S = 2, 16
    input_ids = jax.random.randint(k_ids, (B, S), 0, cfg["vocab"],
                                   dtype=jnp.int32)
    # second sequence has 4 padding positions masked out
    attention_mask = jnp.ones((B, S), jnp.int32).at[1, 12:].set(0)

    fwd = jax.jit(functools.partial(text_encoder_forward, cfg=cfg))
    out = fwd(input_ids, attention_mask, params)
    out = jax.block_until_ready(out)

    assert out.shape == (B, cfg["hidden"]), out.shape
    assert bool(jnp.all(jnp.isfinite(out)))
    print("KERNEL_OK")
</pallas_src>

<mosaic_0001>
module attributes {stable_mosaic.version = 11 : i64} {
  func.func @_encoder_kernel(%arg0: i32, %arg1: memref<32x256xf32, #tpu.memory_space<vmem>>, %arg2: memref<2x16xf32, #tpu.memory_space<vmem>>, %arg3: memref<1x256xf32, #tpu.memory_space<vmem>>, %arg4: memref<1x256xf32, #tpu.memory_space<vmem>>, %arg5: memref<1x256x768xbf16, #tpu.memory_space<vmem>>, %arg6: memref<1x1x768xf32, #tpu.memory_space<vmem>>, %arg7: memref<1x256x256xbf16, #tpu.memory_space<vmem>>, %arg8: memref<1x1x256xf32, #tpu.memory_space<vmem>>, %arg9: memref<1x1x256xf32, #tpu.memory_space<vmem>>, %arg10: memref<1x1x256xf32, #tpu.memory_space<vmem>>, %arg11: memref<1x256x1024xbf16, #tpu.memory_space<vmem>>, %arg12: memref<1x1x1024xf32, #tpu.memory_space<vmem>>, %arg13: memref<1x1024x256xbf16, #tpu.memory_space<vmem>>, %arg14: memref<1x1x256xf32, #tpu.memory_space<vmem>>, %arg15: memref<1x1x256xf32, #tpu.memory_space<vmem>>, %arg16: memref<1x1x256xf32, #tpu.memory_space<vmem>>, %arg17: memref<32x256xf32, #tpu.memory_space<vmem>>) attributes {dimension_semantics = [#tpu.dimension_semantics<arbitrary>], iteration_bounds = array<i64: 4>, scalar_prefetch = 0 : i64, scratch_operands = 0 : i64, tpu.core_type = #tpu.core_type<tc>, window_params = [{pipeline_mode = #tpu.pipeline_mode<synchronous>, transform_indices = @transform_0, window_bounds = array<i64: 32, 256>}, {pipeline_mode = #tpu.pipeline_mode<synchronous>, transform_indices = @transform_1, window_bounds = array<i64: 2, 16>}, {pipeline_mode = #tpu.pipeline_mode<synchronous>, transform_indices = @transform_2, window_bounds = array<i64: 1, 256>}, {pipeline_mode = #tpu.pipeline_mode<synchronous>, transform_indices = @transform_3, window_bounds = array<i64: 1, 256>}, {transform_indices = @transform_4, window_bounds = array<i64: 1, 256, 768>}, {transform_indices = @transform_5, window_bounds = array<i64: 1, 1, 768>}, {transform_indices = @transform_6, window_bounds = array<i64: 1, 256, 256>}, {transform_indices = @transform_7, window_bounds = array<i64: 1, 1, 256>}, {transform_indices = @transform_8, window_bounds = array<i64: 1, 1, 256>}, {transform_indices = @transform_9, window_bounds = array<i64: 1, 1, 256>}, {transform_indices = @transform_10, window_bounds = array<i64: 1, 256, 1024>}, {transform_indices = @transform_11, window_bounds = array<i64: 1, 1, 1024>}, {transform_indices = @transform_12, window_bounds = array<i64: 1, 1024, 256>}, {transform_indices = @transform_13, window_bounds = array<i64: 1, 1, 256>}, {transform_indices = @transform_14, window_bounds = array<i64: 1, 1, 256>}, {transform_indices = @transform_15, window_bounds = array<i64: 1, 1, 256>}, {pipeline_mode = #tpu.pipeline_mode<synchronous>, transform_indices = @transform_16, window_bounds = array<i64: 32, 256>}]} {
    %c0_i32 = arith.constant 0 : i32
    %0 = arith.cmpi eq, %arg0, %c0_i32 : i32
    %1 = arith.extui %0 : i1 to i32
    %c0_i32_0 = arith.constant 0 : i32
    %2 = arith.cmpi ne, %1, %c0_i32_0 : i32
    scf.if %2 {
      %c0_99 = arith.constant 0 : index
      %c0_100 = arith.constant 0 : index
      %282 = vector.load %arg1[%c0_99, %c0_100] : memref<32x256xf32, #tpu.memory_space<vmem>>, vector<32x256xf32>
      %c0_101 = arith.constant 0 : index
      %c0_102 = arith.constant 0 : index
      %283 = vector.load %arg3[%c0_101, %c0_102] : memref<1x256xf32, #tpu.memory_space<vmem>>, vector<1x256xf32>
      %c0_103 = arith.constant 0 : index
      %c0_104 = arith.constant 0 : index
      %284 = vector.load %arg4[%c0_103, %c0_104] : memref<1x256xf32, #tpu.memory_space<vmem>>, vector<1x256xf32>
      %cst_105 = arith.constant dense<0.000000e+00> : vector<32xf32>
      %285 = vector.multi_reduction <add>, %282, %cst_105 [1] : vector<32x256xf32> to vector<32xf32>
      %286 = vector.shape_cast %285 : vector<32xf32> to vector<32x1xf32>
      %cst_106 = arith.constant 2.560000e+02 : f32
      %287 = vector.broadcast %cst_106 : f32 to vector<32x1xf32>
      %288 = arith.divf %286, %287 : vector<32x1xf32>
      %289 = vector.broadcast %288 : vector<32x1xf32> to vector<32x256xf32>
      %290 = arith.subf %282, %289 : vector<32x256xf32>
      %291 = arith.mulf %290, %290 : vector<32x256xf32>
      %cst_107 = arith.constant dense<0.000000e+00> : vector<32xf32>
      %292 = vector.multi_reduction <add>, %291, %cst_107 [1] : vector<32x256xf32> to vector<32xf32>
      %293 = vector.shape_cast %292 : vector<32xf32> to vector<32x1xf32>
      %cst_108 = arith.constant 2.560000e+02 : f32
      %294 = vector.broadcast %cst_108 : f32 to vector<32x1xf32>
      %295 = arith.divf %293, %294 : vector<32x1xf32>
      %cst_109 = arith.constant 9.99999996E-13 : f32
      %296 = vector.broadcast %cst_109 : f32 to vector<32x1xf32>
      %297 = arith.addf %295, %296 : vector<32x1xf32>
      %298 = math.rsqrt %297 : vector<32x1xf32>
      %299 = vector.broadcast %298 : vector<32x1xf32> to vector<32x256xf32>
      %300 = arith.mulf %290, %299 : vector<32x256xf32>
      %301 = vector.broadcast %283 : vector<1x256xf32> to vector<32x256xf32>
      %302 = arith.mulf %300, %301 : vector<32x256xf32>
      %303 = vector.broadcast %284 : vector<1x256xf32> to vector<32x256xf32>
      %304 = arith.addf %302, %303 : vector<32x256xf32>
      %c0_110 = arith.constant 0 : index
      %c0_111 = arith.constant 0 : index
      %305 = vector.load %arg17[%c0_110, %c0_111] : memref<32x256xf32, #tpu.memory_space<vmem>>, vector<32x256xf32>
      tpu.vector_store %arg17[%c0_110, %c0_111], %304 {strides = array<i32>} : memref<32x256xf32, #tpu.memory_space<vmem>>, vector<32x256xf32>,
    } else {
    }
    %c0 = arith.constant 0 : index
    %c0_1 = arith.constant 0 : index
    %3 = vector.load %arg17[%c0, %c0_1] : memref<32x256xf32, #tpu.memory_space<vmem>>, vector<32x256xf32>
    %4 = arith.truncf %3 : vector<32x256xf32> to vector<32x256xbf16>
    %c0_2 = arith.constant 0 : index
    %c0_3 = arith.constant 0 : index
    %c0_4 = arith.constant 0 : index
    %5 = vector.load %arg5[%c0_2, %c0_3, %c0_4] : memref<1x256x768xbf16, #tpu.memory_space<vmem>>, vector<1x256x768xbf16>
    %6 = vector.shape_cast %5 : vector<1x256x768xbf16> to vector<256x768xbf16>
    %cst = arith.constant dense<0.000000e+00> : vector<32x768xf32>
    %7 = tpu.matmul %4, %6, %cst {dimension_numbers = #tpu.dot_dimension_numbers<[1], [0], [0], [1], [0, 0, 1, 1], [], []>} : vector<32x256xbf16>, vector<256x768xbf16>, vector<32x768xf32> -> vector<32x768xf32>
    %c0_5 = arith.constant 0 : index
    %c0_6 = arith.constant 0 : index
    %c0_7 = arith.constant 0 : index
    %8 = vector.load %arg6[%c0_5, %c0_6, %c0_7] : memref<1x1x768xf32, #tpu.memory_space<vmem>>, vector<1x1x768xf32>
    %9 = vector.shape_cast %8 : vector<1x1x768xf32> to vector<1x768xf32>
    %10 = vector.broadcast %9 : vector<1x768xf32> to vector<32x768xf32>
    %11 = arith.addf %7, %10 : vector<32x768xf32>
    %c0_8 = arith.constant 0 : index
    %c0_9 = arith.constant 0 : index
    %12 = vector.load %arg2[%c0_8, %c0_9] : memref<2x16xf32, #tpu.memory_space<vmem>>, vector<2x16xf32>
    %13 = vector.extract_strided_slice %12 {offsets = [0, 0], sizes = [1, 16], strides = [1, 1]} : vector<2x16xf32> to vector<1x16xf32>
    %14 = vector.extract_strided_slice %11 {offsets = [0, 0], sizes = [16, 64], strides = [1, 1]} : vector<32x768xf32> to vector<16x64xf32>
    %15 = arith.truncf %14 : vector<16x64xf32> to vector<16x64xbf16>
    %16 = vector.extract_strided_slice %11 {offsets = [0, 256], sizes = [16, 64], strides = [1, 1]} : vector<32x768xf32> to vector<16x64xf32>
    %17 = arith.truncf %16 : vector<16x64xf32> to vector<16x64xbf16>
    %18 = vector.extract_strided_slice %11 {offsets = [0, 512], sizes = [16, 64], strides = [1, 1]} : vector<32x768xf32> to vector<16x64xf32>
    %19 = arith.truncf %18 : vector<16x64xf32> to vector<16x64xbf16>
    %cst_10 = arith.constant dense<0.000000e+00> : vector<16x16xf32>
    %20 = tpu.matmul %15, %17, %cst_10 {dimension_numbers = #tpu.dot_dimension_numbers<[1], [1], [0], [0], [0, 0, 1, 0], [], []>} : vector<16x64xbf16>, vector<16x64xbf16>, vector<16x16xf32> -> vector<16x16xf32>
    %cst_11 = arith.constant 1.250000e-01 : f32
    %21 = vector.broadcast %cst_11 : f32 to vector<16x16xf32>
    %22 = arith.mulf %20, %21 : vector<16x16xf32>
    %23 = vector.broadcast %13 : vector<1x16xf32> to vector<16x16xf32>
    %24 = arith.addf %22, %23 : vector<16x16xf32>
    %cst_12 = arith.constant dense<0xFF800000> : vector<16xf32>
    %25 = vector.multi_reduction <maximumf>, %24, %cst_12 [1] : vector<16x16xf32> to vector<16xf32>
    %26 = vector.shape_cast %25 : vector<16xf32> to vector<16x1xf32>
    %27 = vector.broadcast %26 : vector<16x1xf32> to vector<16x16xf32>
    %28 = arith.subf %24, %27 : vector<16x16xf32>
    %29 = math.exp %28 : vector<16x16xf32>
    %cst_13 = arith.constant dense<0.000000e+00> : vector<16xf32>
    %30 = vector.multi_reduction <add>, %29, %cst_13 [1] : vector<16x16xf32> to vector<16xf32>
    %31 = vector.shape_cast %30 : vector<16xf32> to vector<16x1xf32>
    %32 = vector.broadcast %31 : vector<16x1xf32> to vector<16x16xf32>
    %33 = arith.divf %29, %32 : vector<16x16xf32>
    %34 = arith.truncf %33 : vector<16x16xf32> to vector<16x16xbf16>
    %cst_14 = arith.constant dense<0.000000e+00> : vector<16x64xf32>
    %35 = tpu.matmul %34, %19, %cst_14 {dimension_numbers = #tpu.dot_dimension_numbers<[1], [0], [0], [1], [0, 0, 1, 1], [], []>} : vector<16x16xbf16>, vector<16x64xbf16>, vector<16x64xf32> -> vector<16x64xf32>
    %36 = vector.extract_strided_slice %11 {offsets = [0, 64], sizes = [16, 64], strides = [1, 1]} : vector<32x768xf32> to vector<16x64xf32>
    %37 = arith.truncf %36 : vector<16x64xf32> to vector<16x64xbf16>
    %38 = vector.extract_strided_slice %11 {offsets = [0, 320], sizes = [16, 64], strides = [1, 1]} : vector<32x768xf32> to vector<16x64xf32>
    %39 = arith.truncf %38 : vector<16x64xf32> to vector<16x64xbf16>
    %40 = vector.extract_strided_slice %11 {offsets = [0, 576], sizes = [16, 64], strides = [1, 1]} : vector<32x768xf32> to vector<16x64xf32>
    %41 = arith.truncf %40 : vector<16x64xf32> to vector<16x64xbf16>
    %cst_15 = arith.constant dense<0.000000e+00> : vector<16x16xf32>
    %42 = tpu.matmul %37, %39, %cst_15 {dimension_numbers = #tpu.dot_dimension_numbers<[1], [1], [0], [0], [0, 0, 1, 0], [], []>} : vector<16x64xbf16>, vector<16x64xbf16>, vector<16x16xf32> -> vector<16x16xf32>
    %cst_16 = arith.constant 1.250000e-01 : f32
    %43 = vector.broadcast %cst_16 : f32 to vector<16x16xf32>
    %44 = arith.mulf %42, %43 : vector<16x16xf32>
    %45 = vector.broadcast %13 : vector<1x16xf32> to vector<16x16xf32>
    %46 = arith.addf %44, %45 : vector<16x16xf32>
    %cst_17 = arith.constant dense<0xFF800000> : vector<16xf32>
    %47 = vector.multi_reduction <maximumf>, %46, %cst_17 [1] : vector<16x16xf32> to vector<16xf32>
    %48 = vector.shape_cast %47 : vector<16xf32> to vector<16x1xf32>
    %49 = vector.broadcast %48 : vector<16x1xf32> to vector<16x16xf32>
    %50 = arith.subf %46, %49 : vector<16x16xf32>
    %51 = math.exp %50 : vector<16x16xf32>
    %cst_18 = arith.constant dense<0.000000e+00> : vector<16xf32>
    %52 = vector.multi_reduction <add>, %51, %cst_18 [1] : vector<16x16xf32> to vector<16xf32>
    %53 = vector.shape_cast %52 : vector<16xf32> to vector<16x1xf32>
    %54 = vector.broadcast %53 : vector<16x1xf32> to vector<16x16xf32>
    %55 = arith.divf %51, %54 : vector<16x16xf32>
    %56 = arith.truncf %55 : vector<16x16xf32> to vector<16x16xbf16>
    %cst_19 = arith.constant dense<0.000000e+00> : vector<16x64xf32>
    %57 = tpu.matmul %56, %41, %cst_19 {dimension_numbers = #tpu.dot_dimension_numbers<[1], [0], [0], [1], [0, 0, 1, 1], [], []>} : vector<16x16xbf16>, vector<16x64xbf16>, vector<16x64xf32> -> vector<16x64xf32>
    %58 = vector.extract_strided_slice %11 {offsets = [0, 128], sizes = [16, 64], strides = [1, 1]} : vector<32x768xf32> to vector<16x64xf32>
    %59 = arith.truncf %58 : vector<16x64xf32> to vector<16x64xbf16>
    %60 = vector.extract_strided_slice %11 {offsets = [0, 384], sizes = [16, 64], strides = [1, 1]} : vector<32x768xf32> to vector<16x64xf32>
    %61 = arith.truncf %60 : vector<16x64xf32> to vector<16x64xbf16>
    %62 = vector.extract_strided_slice %11 {offsets = [0, 640], sizes = [16, 64], strides = [1, 1]} : vector<32x768xf32> to vector<16x64xf32>
    %63 = arith.truncf %62 : vector<16x64xf32> to vector<16x64xbf16>
    %cst_20 = arith.constant dense<0.000000e+00> : vector<16x16xf32>
    %64 = tpu.matmul %59, %61, %cst_20 {dimension_numbers = #tpu.dot_dimension_numbers<[1], [1], [0], [0], [0, 0, 1, 0], [], []>} : vector<16x64xbf16>, vector<16x64xbf16>, vector<16x16xf32> -> vector<16x16xf32>
    %cst_21 = arith.constant 1.250000e-01 : f32
    %65 = vector.broadcast %cst_21 : f32 to vector<16x16xf32>
    %66 = arith.mulf %64, %65 : vector<16x16xf32>
    %67 = vector.broadcast %13 : vector<1x16xf32> to vector<16x16xf32>
    %68 = arith.addf %66, %67 : vector<16x16xf32>
    %cst_22 = arith.constant dense<0xFF800000> : vector<16xf32>
    %69 = vector.multi_reduction <maximumf>, %68, %cst_22 [1] : vector<16x16xf32> to vector<16xf32>
    %70 = vector.shape_cast %69 : vector<16xf32> to vector<16x1xf32>
    %71 = vector.broadcast %70 : vector<16x1xf32> to vector<16x16xf32>
    %72 = arith.subf %68, %71 : vector<16x16xf32>
    %73 = math.exp %72 : vector<16x16xf32>
    %cst_23 = arith.constant dense<0.000000e+00> : vector<16xf32>
    %74 = vector.multi_reduction <add>, %73, %cst_23 [1] : vector<16x16xf32> to vector<16xf32>
    %75 = vector.shape_cast %74 : vector<16xf32> to vector<16x1xf32>
    %76 = vector.broadcast %75 : vector<16x1xf32> to vector<16x16xf32>
    %77 = arith.divf %73, %76 : vector<16x16xf32>
    %78 = arith.truncf %77 : vector<16x16xf32> to vector<16x16xbf16>
    %cst_24 = arith.constant dense<0.000000e+00> : vector<16x64xf32>
    %79 = tpu.matmul %78, %63, %cst_24 {dimension_numbers = #tpu.dot_dimension_numbers<[1], [0], [0], [1], [0, 0, 1, 1], [], []>} : vector<16x16xbf16>, vector<16x64xbf16>, vector<16x64xf32> -> vector<16x64xf32>
    %80 = vector.extract_strided_slice %11 {offsets = [0, 192], sizes = [16, 64], strides = [1, 1]} : vector<32x768xf32> to vector<16x64xf32>
    %81 = arith.truncf %80 : vector<16x64xf32> to vector<16x64xbf16>
    %82 = vector.extract_strided_slice %11 {offsets = [0, 448], sizes = [16, 64], strides = [1, 1]} : vector<32x768xf32> to vector<16x64xf32>
    %83 = arith.truncf %82 : vector<16x64xf32> to vector<16x64xbf16>
    %84 = vector.extract_strided_slice %11 {offsets = [0, 704], sizes = [16, 64], strides = [1, 1]} : vector<32x768xf32> to vector<16x64xf32>
    %85 = arith.truncf %84 : vector<16x64xf32> to vector<16x64xbf16>
    %cst_25 = arith.constant dense<0.000000e+00> : vector<16x16xf32>
    %86 = tpu.matmul %81, %83, %cst_25 {dimension_numbers = #tpu.dot_dimension_numbers<[1], [1], [0], [0], [0, 0, 1, 0], [], []>} : vector<16x64xbf16>, vector<16x64xbf16>, vector<16x16xf32> -> vector<16x16xf32>
    %cst_26 = arith.constant 1.250000e-01 : f32
    %87 = vector.broadcast %cst_26 : f32 to vector<16x16xf32>
    %88 = arith.mulf %86, %87 : vector<16x16xf32>
    %89 = vector.broadcast %13 : vector<1x16xf32> to vector<16x16xf32>
    %90 = arith.addf %88, %89 : vector<16x16xf32>
    %cst_27 = arith.constant dense<0xFF800000> : vector<16xf32>
    %91 = vector.multi_reduction <maximumf>, %90, %cst_27 [1] : vector<16x16xf32> to vector<16xf32>
    %92 = vector.shape_cast %91 : vector<16xf32> to vector<16x1xf32>
    %93 = vector.broadcast %92 : vector<16x1xf32> to vector<16x16xf32>
    %94 = arith.subf %90, %93 : vector<16x16xf32>
    %95 = math.exp %94 : vector<16x16xf32>
    %cst_28 = arith.constant dense<0.000000e+00> : vector<16xf32>
    %96 = vector.multi_reduction <add>, %95, %cst_28 [1] : vector<16x16xf32> to vector<16xf32>
    %97 = vector.shape_cast %96 : vector<16xf32> to vector<16x1xf32>
    %98 = vector.broadcast %97 : vector<16x1xf32> to vector<16x16xf32>
    %99 = arith.divf %95, %98 : vector<16x16xf32>
    %100 = arith.truncf %99 : vector<16x16xf32> to vector<16x16xbf16>
    %cst_29 = arith.constant dense<0.000000e+00> : vector<16x64xf32>
    %101 = tpu.matmul %100, %85, %cst_29 {dimension_numbers = #tpu.dot_dimension_numbers<[1], [0], [0], [1], [0, 0, 1, 1], [], []>} : vector<16x16xbf16>, vector<16x64xbf16>, vector<16x64xf32> -> vector<16x64xf32>
    %102 = tpu.concatenate %35, %57, %79, %101 in 1 : vector<16x64xf32>, vector<16x64xf32>, vector<16x64xf32>, vector<16x64xf32> -> vector<16x256xf32>
    %103 = vector.extract_strided_slice %12 {offsets = [1, 0], sizes = [1, 16], strides = [1, 1]} : vector<2x16xf32> to vector<1x16xf32>
    %104 = vector.extract_strided_slice %11 {offsets = [16, 0], sizes = [16, 64], strides = [1, 1]} : vector<32x768xf32> to vector<16x64xf32>
    %105 = arith.truncf %104 : vector<16x64xf32> to vector<16x64xbf16>
    %106 = vector.extract_strided_slice %11 {offsets = [16, 256], sizes = [16, 64], strides = [1, 1]} : vector<32x768xf32> to vector<16x64xf32>
    %107 = arith.truncf %106 : vector<16x64xf32> to vector<16x64xbf16>
    %108 = vector.extract_strided_slice %11 {offsets = [16, 512], sizes = [16, 64], strides = [1, 1]} : vector<32x768xf32> to vector<16x64xf32>
    %109 = arith.truncf %108 : vector<16x64xf32> to vector<16x64xbf16>
    %cst_30 = arith.constant dense<0.000000e+00> : vector<16x16xf32>
    %110 = tpu.matmul %105, %107, %cst_30 {dimension_numbers = #tpu.dot_dimension_numbers<[1], [1], [0], [0], [0, 0, 1, 0], [], []>} : vector<16x64xbf16>, vector<16x64xbf16>, vector<16x16xf32> -> vector<16x16xf32>
    %cst_31 = arith.constant 1.250000e-01 : f32
    %111 = vector.broadcast %cst_31 : f32 to vector<16x16xf32>
    %112 = arith.mulf %110, %111 : vector<16x16xf32>
    %113 = vector.broadcast %103 : vector<1x16xf32> to vector<16x16xf32>
    %114 = arith.addf %112, %113 : vector<16x16xf32>
    %cst_32 = arith.constant dense<0xFF800000> : vector<16xf32>
    %115 = vector.multi_reduction <maximumf>, %114, %cst_32 [1] : vector<16x16xf32> to vector<16xf32>
    %116 = vector.shape_cast %115 : vector<16xf32> to vector<16x1xf32>
    %117 = vector.broadcast %116 : vector<16x1xf32> to vector<16x16xf32>
    %118 = arith.subf %114, %117 : vector<16x16xf32>
    %119 = math.exp %118 : vector<16x16xf32>
    %cst_33 = arith.constant dense<0.000000e+00> : vector<16xf32>
    %120 = vector.multi_reduction <add>, %119, %cst_33 [1] : vector<16x16xf32> to vector<16xf32>
    %121 = vector.shape_cast %120 : vector<16xf32> to vector<16x1xf32>
    %122 = vector.broadcast %121 : vector<16x1xf32> to vector<16x16xf32>
    %123 = arith.divf %119, %122 : vector<16x16xf32>
    %124 = arith.truncf %123 : vector<16x16xf32> to vector<16x16xbf16>
    %cst_34 = arith.constant dense<0.000000e+00> : vector<16x64xf32>
    %125 = tpu.matmul %124, %109, %cst_34 {dimension_numbers = #tpu.dot_dimension_numbers<[1], [0], [0], [1], [0, 0, 1, 1], [], []>} : vector<16x16xbf16>, vector<16x64xbf16>, vector<16x64xf32> -> vector<16x64xf32>
    %126 = vector.extract_strided_slice %11 {offsets = [16, 64], sizes = [16, 64], strides = [1, 1]} : vector<32x768xf32> to vector<16x64xf32>
    %127 = arith.truncf %126 : vector<16x64xf32> to vector<16x64xbf16>
    %128 = vector.extract_strided_slice %11 {offsets = [16, 320], sizes = [16, 64], strides = [1, 1]} : vector<32x768xf32> to vector<16x64xf32>
    %129 = arith.truncf %128 : vector<16x64xf32> to vector<16x64xbf16>
    %130 = vector.extract_strided_slice %11 {offsets = [16, 576], sizes = [16, 64], strides = [1, 1]} : vector<32x768xf32> to vector<16x64xf32>
    %131 = arith.truncf %130 : vector<16x64xf32> to vector<16x64xbf16>
    %cst_35 = arith.constant dense<0.000000e+00> : vector<16x16xf32>
    %132 = tpu.matmul %127, %129, %cst_35 {dimension_numbers = #tpu.dot_dimension_numbers<[1], [1], [0], [0], [0, 0, 1, 0], [], []>} : vector<16x64xbf16>, vector<16x64xbf16>, vector<16x16xf32> -> vector<16x16xf32>
    %cst_36 = arith.constant 1.250000e-01 : f32
    %133 = vector.broadcast %cst_36 : f32 to vector<16x16xf32>
    %134 = arith.mulf %132, %133 : vector<16x16xf32>
    %135 = vector.broadcast %103 : vector<1x16xf32> to vector<16x16xf32>
    %136 = arith.addf %134, %135 : vector<16x16xf32>
    %cst_37 = arith.constant dense<0xFF800000> : vector<16xf32>
    %137 = vector.multi_reduction <maximumf>, %136, %cst_37 [1] : vector<16x16xf32> to vector<16xf32>
    %138 = vector.shape_cast %137 : vector<16xf32> to vector<16x1xf32>
    %139 = vector.broadcast %138 : vector<16x1xf32> to vector<16x16xf32>
    %140 = arith.subf %136, %139 : vector<16x16xf32>
    %141 = math.exp %140 : vector<16x16xf32>
    %cst_38 = arith.constant dense<0.000000e+00> : vector<16xf32>
    %142 = vector.multi_reduction <add>, %141, %cst_38 [1] : vector<16x16xf32> to vector<16xf32>
    %143 = vector.shape_cast %142 : vector<16xf32> to vector<16x1xf32>
    %144 = vector.broadcast %143 : vector<16x1xf32> to vector<16x16xf32>
    %145 = arith.divf %141, %144 : vector<16x16xf32>
    %146 = arith.truncf %145 : vector<16x16xf32> to vector<16x16xbf16>
    %cst_39 = arith.constant dense<0.000000e+00> : vector<16x64xf32>
    %147 = tpu.matmul %146, %131, %cst_39 {dimension_numbers = #tpu.dot_dimension_numbers<[1], [0], [0], [1], [0, 0, 1, 1], [], []>} : vector<16x16xbf16>, vector<16x64xbf16>, vector<16x64xf32> -> vector<16x64xf32>
    %148 = vector.extract_strided_slice %11 {offsets = [16, 128], sizes = [16, 64], strides = [1, 1]} : vector<32x768xf32> to vector<16x64xf32>
    %149 = arith.truncf %148 : vector<16x64xf32> to vector<16x64xbf16>
    %150 = vector.extract_strided_slice %11 {offsets = [16, 384], sizes = [16, 64], strides = [1, 1]} : vector<32x768xf32> to vector<16x64xf32>
    %151 = arith.truncf %150 : vector<16x64xf32> to vector<16x64xbf16>
    %152 = vector.extract_strided_slice %11 {offsets = [16, 640], sizes = [16, 64], strides = [1, 1]} : vector<32x768xf32> to vector<16x64xf32>
    %153 = arith.truncf %152 : vector<16x64xf32> to vector<16x64xbf16>
    %cst_40 = arith.constant dense<0.000000e+00> : vector<16x16xf32>
    %154 = tpu.matmul %149, %151, %cst_40 {dimension_numbers = #tpu.dot_dimension_numbers<[1], [1], [0], [0], [0, 0, 1, 0], [], []>} : vector<16x64xbf16>, vector<16x64xbf16>, vector<16x16xf32> -> vector<16x16xf32>
    %cst_41 = arith.constant 1.250000e-01 : f32
    %155 = vector.broadcast %cst_41 : f32 to vector<16x16xf32>
    %156 = arith.mulf %154, %155 : vector<16x16xf32>
    %157 = vector.broadcast %103 : vector<1x16xf32> to vector<16x16xf32>
    %158 = arith.addf %156, %157 : vector<16x16xf32>
    %cst_42 = arith.constant dense<0xFF800000> : vector<16xf32>
    %159 = vector.multi_reduction <maximumf>, %158, %cst_42 [1] : vector<16x16xf32> to vector<16xf32>
    %160 = vector.shape_cast %159 : vector<16xf32> to vector<16x1xf32>
    %161 = vector.broadcast %160 : vector<16x1xf32> to vector<16x16xf32>
    %162 = arith.subf %158, %161 : vector<16x16xf32>
    %163 = math.exp %162 : vector<16x16xf32>
    %cst_43 = arith.constant dense<0.000000e+00> : vector<16xf32>
    %164 = vector.multi_reduction <add>, %163, %cst_43 [1] : vector<16x16xf32> to vector<16xf32>
    %165 = vector.shape_cast %164 : vector<16xf32> to vector<16x1xf32>
    %166 = vector.broadcast %165 : vector<16x1xf32> to vector<16x16xf32>
    %167 = arith.divf %163, %166 : vector<16x16xf32>
    %168 = arith.truncf %167 : vector<16x16xf32> to vector<16x16xbf16>
    %cst_44 = arith.constant dense<0.000000e+00> : vector<16x64xf32>
    %169 = tpu.matmul %168, %153, %cst_44 {dimension_numbers = #tpu.dot_dimension_numbers<[1], [0], [0], [1], [0, 0, 1, 1], [], []>} : vector<16x16xbf16>, vector<16x64xbf16>, vector<16x64xf32> -> vector<16x64xf32>
    %170 = vector.extract_strided_slice %11 {offsets = [16, 192], sizes = [16, 64], strides = [1, 1]} : vector<32x768xf32> to vector<16x64xf32>
    %171 = arith.truncf %170 : vector<16x64xf32> to vector<16x64xbf16>
    %172 = vector.extract_strided_slice %11 {offsets = [16, 448], sizes = [16, 64], strides = [1, 1]} : vector<32x768xf32> to vector<16x64xf32>
    %173 = arith.truncf %172 : vector<16x64xf32> to vector<16x64xbf16>
    %174 = vector.extract_strided_slice %11 {offsets = [16, 704], sizes = [16, 64], strides = [1, 1]} : vector<32x768xf32> to vector<16x64xf32>
    %175 = arith.truncf %174 : vector<16x64xf32> to vector<16x64xbf16>
    %cst_45 = arith.constant dense<0.000000e+00> : vector<16x16xf32>
    %176 = tpu.matmul %171, %173, %cst_45 {dimension_numbers = #tpu.dot_dimension_numbers<[1], [1], [0], [0], [0, 0, 1, 0], [], []>} : vector<16x64xbf16>, vector<16x64xbf16>, vector<16x16xf32> -> vector<16x16xf32>
    %cst_46 = arith.constant 1.250000e-01 : f32
    %177 = vector.broadcast %cst_46 : f32 to vector<16x16xf32>
    %178 = arith.mulf %176, %177 : vector<16x16xf32>
    %179 = vector.broadcast %103 : vector<1x16xf32> to vector<16x16xf32>
    %180 = arith.addf %178, %179 : vector<16x16xf32>
    %cst_47 = arith.constant dense<0xFF800000> : vector<16xf32>
    %181 = vector.multi_reduction <maximumf>, %180, %cst_47 [1] : vector<16x16xf32> to vector<16xf32>
    %182 = vector.shape_cast %181 : vector<16xf32> to vector<16x1xf32>
    %183 = vector.broadcast %182 : vector<16x1xf32> to vector<16x16xf32>
    %184 = arith.subf %180, %183 : vector<16x16xf32>
    %185 = math.exp %184 : vector<16x16xf32>
    %cst_48 = arith.constant dense<0.000000e+00> : vector<16xf32>
    %186 = vector.multi_reduction <add>, %185, %cst_48 [1] : vector<16x16xf32> to vector<16xf32>
    %187 = vector.shape_cast %186 : vector<16xf32> to vector<16x1xf32>
    %188 = vector.broadcast %187 : vector<16x1xf32> to vector<16x16xf32>
    %189 = arith.divf %185, %188 : vector<16x16xf32>
    %190 = arith.truncf %189 : vector<16x16xf32> to vector<16x16xbf16>
    %cst_49 = arith.constant dense<0.000000e+00> : vector<16x64xf32>
    %191 = tpu.matmul %190, %175, %cst_49 {dimension_numbers = #tpu.dot_dimension_numbers<[1], [0], [0], [1], [0, 0, 1, 1], [], []>} : vector<16x16xbf16>, vector<16x64xbf16>, vector<16x64xf32> -> vector<16x64xf32>
    %192 = tpu.concatenate %125, %147, %169, %191 in 1 : vector<16x64xf32>, vector<16x64xf32>, vector<16x64xf32>, vector<16x64xf32> -> vector<16x256xf32>
    %193 = tpu.concatenate %102, %192 in 0 : vector<16x256xf32>, vector<16x256xf32> -> vector<32x256xf32>
    %194 = arith.truncf %193 : vector<32x256xf32> to vector<32x256xbf16>
    %c0_50 = arith.constant 0 : index
    %c0_51 = arith.constant 0 : index
    %c0_52 = arith.constant 0 : index
    %195 = vector.load %arg7[%c0_50, %c0_51, %c0_52] : memref<1x256x256xbf16, #tpu.memory_space<vmem>>, vector<1x256x256xbf16>
    %196 = vector.shape_cast %195 : vector<1x256x256xbf16> to vector<256x256xbf16>
    %cst_53 = arith.constant dense<0.000000e+00> : vector<32x256xf32>
    %197 = tpu.matmul %194, %196, %cst_53 {dimension_numbers = #tpu.dot_dimension_numbers<[1], [0], [0], [1], [0, 0, 1, 1], [], []>} : vector<32x256xbf16>, vector<256x256xbf16>, vector<32x256xf32> -> vector<32x256xf32>
    %c0_54 = arith.constant 0 : index
    %c0_55 = arith.constant 0 : index
    %c0_56 = arith.constant 0 : index
    %198 = vector.load %arg8[%c0_54, %c0_55, %c0_56] : memref<1x1x256xf32, #tpu.memory_space<vmem>>, vector<1x1x256xf32>
    %199 = vector.shape_cast %198 : vector<1x1x256xf32> to vector<1x256xf32>
    %200 = vector.broadcast %199 : vector<1x256xf32> to vector<32x256xf32>
    %201 = arith.addf %197, %200 : vector<32x256xf32>
    %202 = arith.addf %3, %201 : vector<32x256xf32>
    %c0_57 = arith.constant 0 : index
    %c0_58 = arith.constant 0 : index
    %c0_59 = arith.constant 0 : index
    %203 = vector.load %arg9[%c0_57, %c0_58, %c0_59] : memref<1x1x256xf32, #tpu.memory_space<vmem>>, vector<1x1x256xf32>
    %204 = vector.shape_cast %203 : vector<1x1x256xf32> to vector<1x256xf32>
    %c0_60 = arith.constant 0 : index
    %c0_61 = arith.constant 0 : index
    %c0_62 = arith.constant 0 : index
    %205 = vector.load %arg10[%c0_60, %c0_61, %c0_62] : memref<1x1x256xf32, #tpu.memory_space<vmem>>, vector<1x1x256xf32>
    %206 = vector.shape_cast %205 : vector<1x1x256xf32> to vector<1x256xf32>
    %cst_63 = arith.constant dense<0.000000e+00> : vector<32xf32>
    %207 = vector.multi_reduction <add>, %202, %cst_63 [1] : vector<32x256xf32> to vector<32xf32>
    %208 = vector.shape_cast %207 : vector<32xf32> to vector<32x1xf32>
    %cst_64 = arith.constant 2.560000e+02 : f32
    %209 = vector.broadcast %cst_64 : f32 to vector<32x1xf32>
    %210 = arith.divf %208, %209 : vector<32x1xf32>
    %211 = vector.broadcast %210 : vector<32x1xf32> to vector<32x256xf32>
    %212 = arith.subf %202, %211 : vector<32x256xf32>
    %213 = arith.mulf %212, %212 : vector<32x256xf32>
    %cst_65 = arith.constant dense<0.000000e+00> : vector<32xf32>
    %214 = vector.multi_reduction <add>, %213, %cst_65 [1] : vector<32x256xf32> to vector<32xf32>
    %215 = vector.shape_cast %214 : vector<32xf32> to vector<32x1xf32>
    %cst_66 = arith.constant 2.560000e+02 : f32
    %216 = vector.broadcast %cst_66 : f32 to vector<32x1xf32>
    %217 = arith.divf %215, %216 : vector<32x1xf32>
    %cst_67 = arith.constant 9.99999996E-13 : f32
    %218 = vector.broadcast %cst_67 : f32 to vector<32x1xf32>
    %219 = arith.addf %217, %218 : vector<32x1xf32>
    %220 = math.rsqrt %219 : vector<32x1xf32>
    %221 = vector.broadcast %220 : vector<32x1xf32> to vector<32x256xf32>
    %222 = arith.mulf %212, %221 : vector<32x256xf32>
    %223 = vector.broadcast %204 : vector<1x256xf32> to vector<32x256xf32>
    %224 = arith.mulf %222, %223 : vector<32x256xf32>
    %225 = vector.broadcast %206 : vector<1x256xf32> to vector<32x256xf32>
    %226 = arith.addf %224, %225 : vector<32x256xf32>
    %227 = arith.truncf %226 : vector<32x256xf32> to vector<32x256xbf16>
    %c0_68 = arith.constant 0 : index
    %c0_69 = arith.constant 0 : index
    %c0_70 = arith.constant 0 : index
    %228 = vector.load %arg11[%c0_68, %c0_69, %c0_70] : memref<1x256x1024xbf16, #tpu.memory_space<vmem>>, vector<1x256x1024xbf16>
    %229 = vector.shape_cast %228 : vector<1x256x1024xbf16> to vector<256x1024xbf16>
    %cst_71 = arith.constant dense<0.000000e+00> : vector<32x1024xf32>
    %230 = tpu.matmul %227, %229, %cst_71 {dimension_numbers = #tpu.dot_dimension_numbers<[1], [0], [0], [1], [0, 0, 1, 1], [], []>} : vector<32x256xbf16>, vector<256x1024xbf16>, vector<32x1024xf32> -> vector<32x1024xf32>
    %c0_72 = arith.constant 0 : index
    %c0_73 = arith.constant 0 : index
    %c0_74 = arith.constant 0 : index
    %231 = vector.load %arg12[%c0_72, %c0_73, %c0_74] : memref<1x1x1024xf32, #tpu.memory_space<vmem>>, vector<1x1x1024xf32>
    %232 = vector.shape_cast %231 : vector<1x1x1024xf32> to vector<1x1024xf32>
    %233 = vector.broadcast %232 : vector<1x1024xf32> to vector<32x1024xf32>
    %234 = arith.addf %230, %233 : vector<32x1024xf32>
    %cst_75 = arith.constant 5.000000e-01 : f32
    %235 = vector.broadcast %cst_75 : f32 to vector<32x1024xf32>
    %236 = arith.mulf %235, %234 : vector<32x1024xf32>
    %cst_76 = arith.constant 4.471500e-02 : f32
    %237 = vector.broadcast %cst_76 : f32 to vector<32x1024xf32>
    %238 = arith.mulf %237, %234 : vector<32x1024xf32>
    %239 = arith.mulf %238, %234 : vector<32x1024xf32>
    %240 = arith.mulf %239, %234 : vector<32x1024xf32>
    %241 = arith.addf %234, %240 : vector<32x1024xf32>
    %cst_77 = arith.constant 0.797884583 : f32
    %242 = vector.broadcast %cst_77 : f32 to vector<32x1024xf32>
    %243 = arith.mulf %242, %241 : vector<32x1024xf32>
    %244 = math.tanh %243 : vector<32x1024xf32>
    %cst_78 = arith.constant 1.000000e+00 : f32
    %245 = vector.broadcast %cst_78 : f32 to vector<32x1024xf32>
    %246 = arith.addf %245, %244 : vector<32x1024xf32>
    %247 = arith.mulf %236, %246 : vector<32x1024xf32>
    %248 = arith.truncf %247 : vector<32x1024xf32> to vector<32x1024xbf16>
    %c0_79 = arith.constant 0 : index
    %c0_80 = arith.constant 0 : index
    %c0_81 = arith.constant 0 : index
    %249 = vector.load %arg13[%c0_79, %c0_80, %c0_81] : memref<1x1024x256xbf16, #tpu.memory_space<vmem>>, vector<1x1024x256xbf16>
    %250 = vector.shape_cast %249 : vector<1x1024x256xbf16> to vector<1024x256xbf16>
    %cst_82 = arith.constant dense<0.000000e+00> : vector<32x256xf32>
    %251 = tpu.matmul %248, %250, %cst_82 {dimension_numbers = #tpu.dot_dimension_numbers<[1], [0], [0], [1], [0, 0, 1, 1], [], []>} : vector<32x1024xbf16>, vector<1024x256xbf16>, vector<32x256xf32> -> vector<32x256xf32>
    %c0_83 = arith.constant 0 : index
    %c0_84 = arith.constant 0 : index
    %c0_85 = arith.constant 0 : index
    %252 = vector.load %arg14[%c0_83, %c0_84, %c0_85] : memref<1x1x256xf32, #tpu.memory_space<vmem>>, vector<1x1x256xf32>
    %253 = vector.shape_cast %252 : vector<1x1x256xf32> to vector<1x256xf32>
    %254 = vector.broadcast %253 : vector<1x256xf32> to vector<32x256xf32>
    %255 = arith.addf %251, %254 : vector<32x256xf32>
    %256 = arith.addf %226, %255 : vector<32x256xf32>
    %c0_86 = arith.constant 0 : index
    %c0_87 = arith.constant 0 : index
    %c0_88 = arith.constant 0 : index
    %257 = vector.load %arg15[%c0_86, %c0_87, %c0_88] : memref<1x1x256xf32, #tpu.memory_space<vmem>>, vector<1x1x256xf32>
    %258 = vector.shape_cast %257 : vector<1x1x256xf32> to vector<1x256xf32>
    %c0_89 = arith.constant 0 : index
    %c0_90 = arith.constant 0 : index
    %c0_91 = arith.constant 0 : index
    %259 = vector.load %arg16[%c0_89, %c0_90, %c0_91] : memref<1x1x256xf32, #tpu.memory_space<vmem>>, vector<1x1x256xf32>
    %260 = vector.shape_cast %259 : vector<1x1x256xf32> to vector<1x256xf32>
    %cst_92 = arith.constant dense<0.000000e+00> : vector<32xf32>
    %261 = vector.multi_reduction <add>, %256, %cst_92 [1] : vector<32x256xf32> to vector<32xf32>
    %262 = vector.shape_cast %261 : vector<32xf32> to vector<32x1xf32>
    %cst_93 = arith.constant 2.560000e+02 : f32
    %263 = vector.broadcast %cst_93 : f32 to vector<32x1xf32>
    %264 = arith.divf %262, %263 : vector<32x1xf32>
    %265 = vector.broadcast %264 : vector<32x1xf32> to vector<32x256xf32>
    %266 = arith.subf %256, %265 : vector<32x256xf32>
    %267 = arith.mulf %266, %266 : vector<32x256xf32>
    %cst_94 = arith.constant dense<0.000000e+00> : vector<32xf32>
    %268 = vector.multi_reduction <add>, %267, %cst_94 [1] : vector<32x256xf32> to vector<32xf32>
    %269 = vector.shape_cast %268 : vector<32xf32> to vector<32x1xf32>
    %cst_95 = arith.constant 2.560000e+02 : f32
    %270 = vector.broadcast %cst_95 : f32 to vector<32x1xf32>
    %271 = arith.divf %269, %270 : vector<32x1xf32>
    %cst_96 = arith.constant 9.99999996E-13 : f32
    %272 = vector.broadcast %cst_96 : f32 to vector<32x1xf32>
    %273 = arith.addf %271, %272 : vector<32x1xf32>
    %274 = math.rsqrt %273 : vector<32x1xf32>
    %275 = vector.broadcast %274 : vector<32x1xf32> to vector<32x256xf32>
    %276 = arith.mulf %266, %275 : vector<32x256xf32>
    %277 = vector.broadcast %258 : vector<1x256xf32> to vector<32x256xf32>
    %278 = arith.mulf %276, %277 : vector<32x256xf32>
    %279 = vector.broadcast %260 : vector<1x256xf32> to vector<32x256xf32>
    %280 = arith.addf %278, %279 : vector<32x256xf32>
    %c0_97 = arith.constant 0 : index
    %c0_98 = arith.constant 0 : index
    %281 = vector.load %arg17[%c0_97, %c0_98] : memref<32x256xf32, #tpu.memory_space<vmem>>, vector<32x256xf32>
    tpu.vector_store %arg17[%c0_97, %c0_98], %280 {strides = array<i32>} : memref<32x256xf32, #tpu.memory_space<vmem>>, vector<32x256xf32>,
    return
  }
  func.func @transform_0(%arg0: i32) -> (i32, i32) {
    %c0_i32 = arith.constant 0 : i32
    %c0_i32_0 = arith.constant 0 : i32
    %c0_i32_1 = arith.constant 0 : i32
    return %c0_i32, %c0_i32_0 : i32, i32
  }
  func.func @transform_1(%arg0: i32) -> (i32, i32) {
    %c0_i32 = arith.constant 0 : i32
    %c0_i32_0 = arith.constant 0 : i32
    %c0_i32_1 = arith.constant 0 : i32
    return %c0_i32, %c0_i32_0 : i32, i32
  }
  func.func @transform_2(%arg0: i32) -> (i32, i32) {
    %c0_i32 = arith.constant 0 : i32
    %c0_i32_0 = arith.constant 0 : i32
    %c0_i32_1 = arith.constant 0 : i32
    return %c0_i32, %c0_i32_0 : i32, i32
  }
  func.func @transform_3(%arg0: i32) -> (i32, i32) {
    %c0_i32 = arith.constant 0 : i32
    %c0_i32_0 = arith.constant 0 : i32
    %c0_i32_1 = arith.constant 0 : i32
    return %c0_i32, %c0_i32_0 : i32, i32
  }
  func.func @transform_4(%arg0: i32) -> (i32, i32, i32) {
    %c0_i32 = arith.constant 0 : i32
    %c0_i32_0 = arith.constant 0 : i32
    %c0_i32_1 = arith.constant 0 : i32
    return %arg0, %c0_i32, %c0_i32_0 : i32, i32, i32
  }
  func.func @transform_5(%arg0: i32) -> (i32, i32, i32) {
    %c0_i32 = arith.constant 0 : i32
    %c0_i32_0 = arith.constant 0 : i32
    %c0_i32_1 = arith.constant 0 : i32
    return %arg0, %c0_i32, %c0_i32_0 : i32, i32, i32
  }
  func.func @transform_6(%arg0: i32) -> (i32, i32, i32) {
    %c0_i32 = arith.constant 0 : i32
    %c0_i32_0 = arith.constant 0 : i32
    %c0_i32_1 = arith.constant 0 : i32
    return %arg0, %c0_i32, %c0_i32_0 : i32, i32, i32
  }
  func.func @transform_7(%arg0: i32) -> (i32, i32, i32) {
    %c0_i32 = arith.constant 0 : i32
    %c0_i32_0 = arith.constant 0 : i32
    %c0_i32_1 = arith.constant 0 : i32
    return %arg0, %c0_i32, %c0_i32_0 : i32, i32, i32
  }
  func.func @transform_8(%arg0: i32) -> (i32, i32, i32) {
    %c0_i32 = arith.constant 0 : i32
    %c0_i32_0 = arith.constant 0 : i32
    %c0_i32_1 = arith.constant 0 : i32
    return %arg0, %c0_i32, %c0_i32_0 : i32, i32, i32
  }
  func.func @transform_9(%arg0: i32) -> (i32, i32, i32) {
    %c0_i32 = arith.constant 0 : i32
    %c0_i32_0 = arith.constant 0 : i32
    %c0_i32_1 = arith.constant 0 : i32
    return %arg0, %c0_i32, %c0_i32_0 : i32, i32, i32
  }
  func.func @transform_10(%arg0: i32) -> (i32, i32, i32) {
    %c0_i32 = arith.constant 0 : i32
    %c0_i32_0 = arith.constant 0 : i32
    %c0_i32_1 = arith.constant 0 : i32
    return %arg0, %c0_i32, %c0_i32_0 : i32, i32, i32
  }
  func.func @transform_11(%arg0: i32) -> (i32, i32, i32) {
    %c0_i32 = arith.constant 0 : i32
    %c0_i32_0 = arith.constant 0 : i32
    %c0_i32_1 = arith.constant 0 : i32
    return %arg0, %c0_i32, %c0_i32_0 : i32, i32, i32
  }
  func.func @transform_12(%arg0: i32) -> (i32, i32, i32) {
    %c0_i32 = arith.constant 0 : i32
    %c0_i32_0 = arith.constant 0 : i32
    %c0_i32_1 = arith.constant 0 : i32
    return %arg0, %c0_i32, %c0_i32_0 : i32, i32, i32
  }
  func.func @transform_13(%arg0: i32) -> (i32, i32, i32) {
    %c0_i32 = arith.constant 0 : i32
    %c0_i32_0 = arith.constant 0 : i32
    %c0_i32_1 = arith.constant 0 : i32
    return %arg0, %c0_i32, %c0_i32_0 : i32, i32, i32
  }
  func.func @transform_14(%arg0: i32) -> (i32, i32, i32) {
    %c0_i32 = arith.constant 0 : i32
    %c0_i32_0 = arith.constant 0 : i32
    %c0_i32_1 = arith.constant 0 : i32
    return %arg0, %c0_i32, %c0_i32_0 : i32, i32, i32
  }
  func.func @transform_15(%arg0: i32) -> (i32, i32, i32) {
    %c0_i32 = arith.constant 0 : i32
    %c0_i32_0 = arith.constant 0 : i32
    %c0_i32_1 = arith.constant 0 : i32
    return %arg0, %c0_i32, %c0_i32_0 : i32, i32, i32
  }
  func.func @transform_16(%arg0: i32) -> (i32, i32) {
    %c0_i32 = arith.constant 0 : i32
    %c0_i32_0 = arith.constant 0 : i32
    %c0_i32_1 = arith.constant 0 : i32
    return %c0_i32, %c0_i32_0 : i32, i32
  }
}

</mosaic_0001>

<llo_original>
// kernel: text_encoder_forward.1
$region0: #{text_encoder_forward.1}
  #allocation0 [shape = 'u32[]', space=smem, size = 0x4, offset = 0x4, fixed_abs, tag = 'smem constant byte address 0x4 - core index']
  #allocation1 [shape = 'u32[144,128]{1,0:T(1,128)}', space=vmem, size = 0x12000, scoped, tag = 'internal scratch']
  %s0 = inlined_call_operand.vmem [shape: f32[32,256], index: 0, kind: input, shape index: {}]
  %s1 = inlined_call_operand.vmem [shape: f32[2,16], index: 1, kind: input, shape index: {}]
  %s2 = inlined_call_operand.hbm [shape: f32[1,256], index: 2, kind: input, shape index: {}]
  %s3 = inlined_call_operand.hbm [shape: f32[1,256], index: 3, kind: input, shape index: {}]
  %s4 = inlined_call_operand.hbm [shape: bf16[4,256,768], index: 4, kind: input, shape index: {}]
  %s5 = inlined_call_operand.hbm [shape: f32[4,1,768], index: 5, kind: input, shape index: {}]
  %s6 = inlined_call_operand.hbm [shape: bf16[4,256,256], index: 6, kind: input, shape index: {}]
  %s7 = inlined_call_operand.hbm [shape: f32[4,1,256], index: 7, kind: input, shape index: {}]
  %s8 = inlined_call_operand.hbm [shape: f32[4,1,256], index: 8, kind: input, shape index: {}]
  %s9 = inlined_call_operand.hbm [shape: f32[4,1,256], index: 9, kind: input, shape index: {}]
  %s10 = inlined_call_operand.hbm [shape: bf16[4,256,1024], index: 10, kind: input, shape index: {}]
  %s11 = inlined_call_operand.hbm [shape: f32[4,1,1024], index: 11, kind: input, shape index: {}]
  %s12 = inlined_call_operand.hbm [shape: bf16[4,1024,256], index: 12, kind: input, shape index: {}]
  %s13 = inlined_call_operand.hbm [shape: f32[4,1,256], index: 13, kind: input, shape index: {}]
  %s14 = inlined_call_operand.hbm [shape: f32[4,1,256], index: 14, kind: input, shape index: {}]
  %s15 = inlined_call_operand.hbm [shape: f32[4,1,256], index: 15, kind: input, shape index: {}]
  %s16 = inlined_call_operand.vmem [shape: f32[32,256], index: 16, kind: output, shape index: {}]
  %s17 = sld [smem:[#allocation0]]
  $region157: #{text_encoder_forward.1} parent=0
    _
  %s19 = ssub.s32 1, %s17
  %s20 = scalar_select 0, %s19, %s17
  $region1: #{text_encoder_forward.1} parent=0
    #allocation2 [shape = 'u8[1024]{0}', space=vmem, size = 0x400, scoped, tag = 'input window, operand 2, single buffered']
    #allocation3 [shape = 's32[2]{0}', space=sflag, size = 0x8, scoped, tag = 'scoped memory for text_encoder_forward.1']
    #allocation4 [shape = 'u8[1024]{0}', space=vmem, size = 0x400, scoped, tag = 'input window, operand 3, single buffered']
    #allocation5 [shape = 's32[1]{0}', space=sflag, size = 0x4, scoped, tag = 'scoped memory for text_encoder_forward.1']
    #allocation6 [shape = 'u8[786432]{0}', space=vmem, size = 0xc0000, scoped, tag = 'input window, operand 4']
    #allocation7 [shape = 'u8[6144]{0}', space=vmem, size = 0x1800, scoped, tag = 'input window, operand 5']
    #allocation8 [shape = 'u8[262144]{0}', space=vmem, size = 0x40000, scoped, tag = 'input window, operand 6']
    #allocation9 [shape = 'u8[2048]{0}', space=vmem, size = 0x800, scoped, tag = 'input window, operand 7']
    #allocation10 [shape = 'u8[2048]{0}', space=vmem, size = 0x800, scoped, tag = 'input window, operand 8']
    #allocation11 [shape = 'u8[2048]{0}', space=vmem, size = 0x800, scoped, tag = 'input window, operand 9']
    #allocation12 [shape = 'u8[1048576]{0}', space=vmem, size = 0x100000, scoped, tag = 'input window, operand 10']
    #allocation13 [shape = 'u8[8192]{0}', space=vmem, size = 0x2000, scoped, tag = 'input window, operand 11']
    #allocation14 [shape = 'u8[1048576]{0}', space=vmem, size = 0x100000, scoped, tag = 'input window, operand 12']
    #allocation15 [shape = 'u8[2048]{0}', space=vmem, size = 0x800, scoped, tag = 'input window, operand 13']
    #allocation16 [shape = 'u8[2048]{0}', space=vmem, size = 0x800, scoped, tag = 'input window, operand 14']
    #allocation17 [shape = 'u8[2048]{0}', space=vmem, size = 0x800, scoped, tag = 'input window, operand 15']
    %21 = vsyncpa [#allocation3], 0
    %22 = vsyncpa [#allocation5], 0
    loop: start=0, step=1, limit=6
    $region2: #{text_encoder_forward.1} parent=1 // loop_pre_header
      _
    $region3: #{text_encoder_forward.1} parent=1 // loop_header
      %s24 = sphi 0, %s28
      %p25 = scmp.ge.s32.totalorder %s24, 6
      %s32 = sphi 0, %s32
      %s34 = sphi 0, %s32
      %s35 = sphi 0, %s34
      %s49 = sphi 0, %s35
      %s53 = sphi 0, %s53
      %s55 = sphi 0, %s53
      %s56 = sphi 0, %s55
      %s70 = sphi 0, %s56
      %s74 = sphi 0, %s74
      %s76 = sphi 0, %s74
      %s77 = sphi 0, %s76
      %s91 = sphi 0, %s77
      %s95 = sphi 0, %s95
      %s97 = sphi 0, %s95
      %s98 = sphi 0, %s97
      %s112 = sphi 0, %s98
      %s118 = sphi 0, %s120
      %s121 = sphi 0, %s118
      %s122 = sphi 0, %s121
      %s138 = sphi 0, %s122
      %s144 = sphi 0, %s146
      %s147 = sphi 0, %s144
      %s148 = sphi 0, %s147
      %s164 = sphi 0, %s148
      %s170 = sphi 0, %s172
      %s173 = sphi 0, %s170
      %s174 = sphi 0, %s173
      %s190 = sphi 0, %s174
      %s196 = sphi 0, %s198
      %s199 = sphi 0, %s196
      %s200 = sphi 0, %s199
      %s216 = sphi 0, %s200
      %s222 = sphi 0, %s224
      %s225 = sphi 0, %s222
      %s226 = sphi 0, %s225
      %s242 = sphi 0, %s226
      %s248 = sphi 0, %s250
      %s251 = sphi 0, %s248
      %s252 = sphi 0, %s251
      %s268 = sphi 0, %s252
      %s274 = sphi 0, %s276
      %s277 = sphi 0, %s274
      %s278 = sphi 0, %s277
      %s294 = sphi 0, %s278
      %s300 = sphi 0, %s302
      %s303 = sphi 0, %s300
      %s304 = sphi 0, %s303
      %s320 = sphi 0, %s304
      %s326 = sphi 0, %s328
      %s329 = sphi 0, %s326
      %s330 = sphi 0, %s329
      %s346 = sphi 0, %s330
      %s352 = sphi 0, %s354
      %s355 = sphi 0, %s352
      %s356 = sphi 0, %s355
      %s372 = sphi 0, %s356
      %s378 = sphi 0, %s380
      %s381 = sphi 0, %s378
      %s382 = sphi 0, %s381
      %s398 = sphi 0, %s382
      %s404 = sphi 0, %s406
      %s407 = sphi 0, %s404
      %s408 = sphi 0, %s407
      %s424 = sphi 0, %s408
      %s428 = sphi 0, %s428
      %s430 = sphi 0, %s428
      %s431 = sphi 0, %s430
      %s445 = sphi 0, %s431
    $region4: #{text_encoder_forward.1} parent=1 // loop_header_branch
      %27 = sbr.rel (%p25) target = $region8
    $region5: #{text_encoder_forward.1} parent=1 // loop_body
      %s29 = ssub.s32 %s24, 1
      %s30 = ssub.s32 %s24, 2
      %s31 = sadd.s32 %s24, 1
      %s33 = sadd.s32 %s32, 1
      %p36 = scmp.eq.s32.totalorder %s24, 3
      %p37 = scmp.ne.s32.totalorder %s32, %s34
      %p38 = scmp.eq.s32.totalorder %s24, 0
      %p39 = por %p37, %p38
      %p40 = scmp.ne.s32.totalorder %s32, %s34
      %p41 = scmp.eq.s32.totalorder %s29, 3
      %p42 = por %p40, %p41
      %p43 = scmp.ne.s32.totalorder %s34, %s35
      %p44 = scmp.eq.s32.totalorder %s29, 0
      %p45 = por %p43, %p44
      %p46 = scmp.ne.s32.totalorder %s34, %s35
      %p47 = scmp.eq.s32.totalorder %s30, 3
      %p48 = por %p46, %p47
      %p50 = scmp.ne.s32.totalorder %s35, %s49
      %p51 = scmp.eq.s32.totalorder %s30, 0
      %p52 = por %p50, %p51
      %s54 = sadd.s32 %s53, 1
      %p57 = scmp.eq.s32.totalorder %s24, 3
      %p58 = scmp.ne.s32.totalorder %s53, %s55
      %p59 = scmp.eq.s32.totalorder %s24, 0
      %p60 = por %p58, %p59
      %p61 = scmp.ne.s32.totalorder %s53, %s55
      %p62 = scmp.eq.s32.totalorder %s29, 3
      %p63 = por %p61, %p62
      %p64 = scmp.ne.s32.totalorder %s55, %s56
      %p65 = scmp.eq.s32.totalorder %s29, 0
      %p66 = por %p64, %p65
      %p67 = scmp.ne.s32.totalorder %s55, %s56
      %p68 = scmp.eq.s32.totalorder %s30, 3
      %p69 = por %p67, %p68
      %p71 = scmp.ne.s32.totalorder %s56, %s70
      %p72 = scmp.eq.s32.totalorder %s30, 0
      %p73 = por %p71, %p72
      %s75 = sadd.s32 %s74, 1
      %p78 = scmp.eq.s32.totalorder %s24, 3
      %p79 = scmp.ne.s32.totalorder %s74, %s76
      %p80 = scmp.eq.s32.totalorder %s24, 0
      %p81 = por %p79, %p80
      %p82 = scmp.ne.s32.totalorder %s74, %s76
      %p83 = scmp.eq.s32.totalorder %s29, 3
      %p84 = por %p82, %p83
      %p85 = scmp.ne.s32.totalorder %s76, %s77
      %p86 = scmp.eq.s32.totalorder %s29, 0
      %p87 = por %p85, %p86
      %p88 = scmp.ne.s32.totalorder %s76, %s77
      %p89 = scmp.eq.s32.totalorder %s30, 3
      %p90 = por %p88, %p89
      %p92 = scmp.ne.s32.totalorder %s77, %s91
      %p93 = scmp.eq.s32.totalorder %s30, 0
      %p94 = por %p92, %p93
      %s96 = sadd.s32 %s95, 1
      %p99 = scmp.eq.s32.totalorder %s24, 3
      %p100 = scmp.ne.s32.totalorder %s95, %s97
      %p101 = scmp.eq.s32.totalorder %s24, 0
      %p102 = por %p100, %p101
      %p103 = scmp.ne.s32.totalorder %s95, %s97
      %p104 = scmp.eq.s32.totalorder %s29, 3
      %p105 = por %p103, %p104
      %p106 = scmp.ne.s32.totalorder %s97, %s98
      %p107 = scmp.eq.s32.totalorder %s29, 0
      %p108 = por %p106, %p107
      %p109 = scmp.ne.s32.totalorder %s97, %s98
      %p110 = scmp.eq.s32.totalorder %s30, 3
      %p111 = por %p109, %p110
      %p113 = scmp.ne.s32.totalorder %s98, %s112
      %p114 = scmp.eq.s32.totalorder %s30, 0
      %p115 = por %p113, %p114
      %s116 = ssub.s32 %s24, %s31
      %p117 = scmp.eq.s32.totalorder %s116, 0
      %s119 = sadd.s32 %s118, 1
      %s120 = scalar_select %p117, %s118, %s119
      %p123 = pneg %p117
      %p124 = scmp.eq.s32.totalorder %s24, 3
      %p125 = por %p123, %p124
      %p126 = scmp.ne.s32.totalorder %s118, %s121
      %p127 = scmp.eq.s32.totalorder %s24, 0
      %p128 = por %p126, %p127
      %p129 = scmp.ne.s32.totalorder %s118, %s121
      %p130 = scmp.eq.s32.totalorder %s29, 3
      %p131 = por %p129, %p130
      %p132 = scmp.ne.s32.totalorder %s121, %s122
      %p133 = scmp.eq.s32.totalorder %s29, 0
      %p134 = por %p132, %p133
      %p135 = scmp.ne.s32.totalorder %s121, %s122
      %p136 = scmp.eq.s32.totalorder %s30, 3
      %p137 = por %p135, %p136
      %p139 = scmp.ne.s32.totalorder %s122, %s138
      %p140 = scmp.eq.s32.totalorder %s30, 0
      %p141 = por %p139, %p140
      %s142 = ssub.s32 %s24, %s31
      %p143 = scmp.eq.s32.totalorder %s142, 0
      %s145 = sadd.s32 %s144, 1
      %s146 = scalar_select %p143, %s144, %s145
      %p149 = pneg %p143
      %p150 = scmp.eq.s32.totalorder %s24, 3
      %p151 = por %p149, %p150
      %p152 = scmp.ne.s32.totalorder %s144, %s147
      %p153 = scmp.eq.s32.totalorder %s24, 0
      %p154 = por %p152, %p153
      %p155 = scmp.ne.s32.totalorder %s144, %s147
      %p156 = scmp.eq.s32.totalorder %s29, 3
      %p157 = por %p155, %p156
      %p158 = scmp.ne.s32.totalorder %s147, %s148
      %p159 = scmp.eq.s32.totalorder %s29, 0
      %p160 = por %p158, %p159
      %p161 = scmp.ne.s32.totalorder %s147, %s148
      %p162 = scmp.eq.s32.totalorder %s30, 3
      %p163 = por %p161, %p162
      %p165 = scmp.ne.s32.totalorder %s148, %s164
      %p166 = scmp.eq.s32.totalorder %s30, 0
      %p167 = por %p165, %p166
      %s168 = ssub.s32 %s24, %s31
      %p169 = scmp.eq.s32.totalorder %s168, 0
      %s171 = sadd.s32 %s170, 1
      %s172 = scalar_select %p169, %s170, %s171
      %p175 = pneg %p169
      %p176 = scmp.eq.s32.totalorder %s24, 3
      %p177 = por %p175, %p176
      %p178 = scmp.ne.s32.totalorder %s170, %s173
      %p179 = scmp.eq.s32.totalorder %s24, 0
      %p180 = por %p178, %p179
      %p181 = scmp.ne.s32.totalorder %s170, %s173
      %p182 = scmp.eq.s32.totalorder %s29, 3
      %p183 = por %p181, %p182
      %p184 = scmp.ne.s32.totalorder %s173, %s174
      %p185 = scmp.eq.s32.totalorder %s29, 0
      %p186 = por %p184, %p185
      %p187 = scmp.ne.s32.totalorder %s173, %s174
      %p188 = scmp.eq.s32.totalorder %s30, 3
      %p189 = por %p187, %p188
      %p191 = scmp.ne.s32.totalorder %s174, %s190
      %p192 = scmp.eq.s32.totalorder %s30, 0
      %p193 = por %p191, %p192
      %s194 = ssub.s32 %s24, %s31
      %p195 = scmp.eq.s32.totalorder %s194, 0
      %s197 = sadd.s32 %s196, 1
      %s198 = scalar_select %p195, %s196, %s197
      %p201 = pneg %p195
      %p202 = scmp.eq.s32.totalorder %s24, 3
      %p203 = por %p201, %p202
      %p204 = scmp.ne.s32.totalorder %s196, %s199
      %p205 = scmp.eq.s32.totalorder %s24, 0
      %p206 = por %p204, %p205
      %p207 = scmp.ne.s32.totalorder %s196, %s199
      %p208 = scmp.eq.s32.totalorder %s29, 3
      %p209 = por %p207, %p208
      %p210 = scmp.ne.s32.totalorder %s199, %s200
      %p211 = scmp.eq.s32.totalorder %s29, 0
      %p212 = por %p210, %p211
      %p213 = scmp.ne.s32.totalorder %s199, %s200
      %p214 = scmp.eq.s32.totalorder %s30, 3
      %p215 = por %p213, %p214
      %p217 = scmp.ne.s32.totalorder %s200, %s216
      %p218 = scmp.eq.s32.totalorder %s30, 0
      %p219 = por %p217, %p218
      %s220 = ssub.s32 %s24, %s31
      %p221 = scmp.eq.s32.totalorder %s220, 0
      %s223 = sadd.s32 %s222, 1
      %s224 = scalar_select %p221, %s222, %s223
      %p227 = pneg %p221
      %p228 = scmp.eq.s32.totalorder %s24, 3
      %p229 = por %p227, %p228
      %p230 = scmp.ne.s32.totalorder %s222, %s225
      %p231 = scmp.eq.s32.totalorder %s24, 0
      %p232 = por %p230, %p231
      %p233 = scmp.ne.s32.totalorder %s222, %s225
      %p234 = scmp.eq.s32.totalorder %s29, 3
      %p235 = por %p233, %p234
      %p236 = scmp.ne.s32.totalorder %s225, %s226
      %p237 = scmp.eq.s32.totalorder %s29, 0
      %p238 = por %p236, %p237
      %p239 = scmp.ne.s32.totalorder %s225, %s226
      %p240 = scmp.eq.s32.totalorder %s30, 3
      %p241 = por %p239, %p240
      %p243 = scmp.ne.s32.totalorder %s226, %s242
      %p244 = scmp.eq.s32.totalorder %s30, 0
      %p245 = por %p243, %p244
      %s246 = ssub.s32 %s24, %s31
      %p247 = scmp.eq.s32.totalorder %s246, 0
      %s249 = sadd.s32 %s248, 1
      %s250 = scalar_select %p247, %s248, %s249
      %p253 = pneg %p247
      %p254 = scmp.eq.s32.totalorder %s24, 3
      %p255 = por %p253, %p254
      %p256 = scmp.ne.s32.totalorder %s248, %s251
      %p257 = scmp.eq.s32.totalorder %s24, 0
      %p258 = por %p256, %p257
      %p259 = scmp.ne.s32.totalorder %s248, %s251
      %p260 = scmp.eq.s32.totalorder %s29, 3
      %p261 = por %p259, %p260
      %p262 = scmp.ne.s32.totalorder %s251, %s252
      %p263 = scmp.eq.s32.totalorder %s29, 0
      %p264 = por %p262, %p263
      %p265 = scmp.ne.s32.totalorder %s251, %s252
      %p266 = scmp.eq.s32.totalorder %s30, 3
      %p267 = por %p265, %p266
      %p269 = scmp.ne.s32.totalorder %s252, %s268
      %p270 = scmp.eq.s32.totalorder %s30, 0
      %p271 = por %p269, %p270
      %s272 = ssub.s32 %s24, %s31
      %p273 = scmp.eq.s32.totalorder %s272, 0
      %s275 = sadd.s32 %s274, 1
      %s276 = scalar_select %p273, %s274, %s275
      %p279 = pneg %p273
      %p280 = scmp.eq.s32.totalorder %s24, 3
      %p281 = por %p279, %p280
      %p282 = scmp.ne.s32.totalorder %s274, %s277
      %p283 = scmp.eq.s32.totalorder %s24, 0
      %p284 = por %p282, %p283
      %p285 = scmp.ne.s32.totalorder %s274, %s277
      %p286 = scmp.eq.s32.totalorder %s29, 3
      %p287 = por %p285, %p286
      %p288 = scmp.ne.s32.totalorder %s277, %s278
      %p289 = scmp.eq.s32.totalorder %s29, 0
      %p290 = por %p288, %p289
      %p291 = scmp.ne.s32.totalorder %s277, %s278
      %p292 = scmp.eq.s32.totalorder %s30, 3
      %p293 = por %p291, %p292
      %p295 = scmp.ne.s32.totalorder %s278, %s294
      %p296 = scmp.eq.s32.totalorder %s30, 0
      %p297 = por %p295, %p296
      %s298 = ssub.s32 %s24, %s31
      %p299 = scmp.eq.s32.totalorder %s298, 0
      %s301 = sadd.s32 %s300, 1
      %s302 = scalar_select %p299, %s300, %s301
      %p305 = pneg %p299
      %p306 = scmp.eq.s32.totalorder %s24, 3
      %p307 = por %p305, %p306
      %p308 = scmp.ne.s32.totalorder %s300, %s303
      %p309 = scmp.eq.s32.totalorder %s24, 0
      %p310 = por %p308, %p309
      %p311 = scmp.ne.s32.totalorder %s300, %s303
      %p312 = scmp.eq.s32.totalorder %s29, 3
      %p313 = por %p311, %p312
      %p314 = scmp.ne.s32.totalorder %s303, %s304
      %p315 = scmp.eq.s32.totalorder %s29, 0
      %p316 = por %p314, %p315
      %p317 = scmp.ne.s32.totalorder %s303, %s304
      %p318 = scmp.eq.s32.totalorder %s30, 3
      %p319 = por %p317, %p318
      %p321 = scmp.ne.s32.totalorder %s304, %s320
      %p322 = scmp.eq.s32.totalorder %s30, 0
      %p323 = por %p321, %p322
      %s324 = ssub.s32 %s24, %s31
      %p325 = scmp.eq.s32.totalorder %s324, 0
      %s327 = sadd.s32 %s326, 1
      %s328 = scalar_select %p325, %s326, %s327
      %p331 = pneg %p325
      %p332 = scmp.eq.s32.totalorder %s24, 3
      %p333 = por %p331, %p332
      %p334 = scmp.ne.s32.totalorder %s326, %s329
      %p335 = scmp.eq.s32.totalorder %s24, 0
      %p336 = por %p334, %p335
      %p337 = scmp.ne.s32.totalorder %s326, %s329
      %p338 = scmp.eq.s32.totalorder %s29, 3
      %p339 = por %p337, %p338
      %p340 = scmp.ne.s32.totalorder %s329, %s330
      %p341 = scmp.eq.s32.totalorder %s29, 0
      %p342 = por %p340, %p341
      %p343 = scmp.ne.s32.totalorder %s329, %s330
      %p344 = scmp.eq.s32.totalorder %s30, 3
      %p345 = por %p343, %p344
      %p347 = scmp.ne.s32.totalorder %s330, %s346
      %p348 = scmp.eq.s32.totalorder %s30, 0
      %p349 = por %p347, %p348
      %s350 = ssub.s32 %s24, %s31
      %p351 = scmp.eq.s32.totalorder %s350, 0
      %s353 = sadd.s32 %s352, 1
      %s354 = scalar_select %p351, %s352, %s353
      %p357 = pneg %p351
      %p358 = scmp.eq.s32.totalorder %s24, 3
      %p359 = por %p357, %p358
      %p360 = scmp.ne.s32.totalorder %s352, %s355
      %p361 = scmp.eq.s32.totalorder %s24, 0
      %p362 = por %p360, %p361
      %p363 = scmp.ne.s32.totalorder %s352, %s355
      %p364 = scmp.eq.s32.totalorder %s29, 3
      %p365 = por %p363, %p364
      %p366 = scmp.ne.s32.totalorder %s355, %s356
      %p367 = scmp.eq.s32.totalorder %s29, 0
      %p368 = por %p366, %p367
      %p369 = scmp.ne.s32.totalorder %s355, %s356
      %p370 = scmp.eq.s32.totalorder %s30, 3
      %p371 = por %p369, %p370
      %p373 = scmp.ne.s32.totalorder %s356, %s372
      %p374 = scmp.eq.s32.totalorder %s30, 0
      %p375 = por %p373, %p374
      %s376 = ssub.s32 %s24, %s31
      %p377 = scmp.eq.s32.totalorder %s376, 0
      %s379 = sadd.s32 %s378, 1
      %s380 = scalar_select %p377, %s378, %s379
      %p383 = pneg %p377
      %p384 = scmp.eq.s32.totalorder %s24, 3
      %p385 = por %p383, %p384
      %p386 = scmp.ne.s32.totalorder %s378, %s381
      %p387 = scmp.eq.s32.totalorder %s24, 0
      %p388 = por %p386, %p387
      %p389 = scmp.ne.s32.totalorder %s378, %s381
      %p390 = scmp.eq.s32.totalorder %s29, 3
      %p391 = por %p389, %p390
      %p392 = scmp.ne.s32.totalorder %s381, %s382
      %p393 = scmp.eq.s32.totalorder %s29, 0
      %p394 = por %p392, %p393
      %p395 = scmp.ne.s32.totalorder %s381, %s382
      %p396 = scmp.eq.s32.totalorder %s30, 3
      %p397 = por %p395, %p396
      %p399 = scmp.ne.s32.totalorder %s382, %s398
      %p400 = scmp.eq.s32.totalorder %s30, 0
      %p401 = por %p399, %p400
      %s402 = ssub.s32 %s24, %s31
      %p403 = scmp.eq.s32.totalorder %s402, 0
      %s405 = sadd.s32 %s404, 1
      %s406 = scalar_select %p403, %s404, %s405
      %p409 = pneg %p403
      %p410 = scmp.eq.s32.totalorder %s24, 3
      %p411 = por %p409, %p410
      %p412 = scmp.ne.s32.totalorder %s404, %s407
      %p413 = scmp.eq.s32.totalorder %s24, 0
      %p414 = por %p412, %p413
      %p415 = scmp.ne.s32.totalorder %s404, %s407
      %p416 = scmp.eq.s32.totalorder %s29, 3
      %p417 = por %p415, %p416
      %p418 = scmp.ne.s32.totalorder %s407, %s408
      %p419 = scmp.eq.s32.totalorder %s29, 0
      %p420 = por %p418, %p419
      %p421 = scmp.ne.s32.totalorder %s407, %s408
      %p422 = scmp.eq.s32.totalorder %s30, 3
      %p423 = por %p421, %p422
      %p425 = scmp.ne.s32.totalorder %s408, %s424
      %p426 = scmp.eq.s32.totalorder %s30, 0
      %p427 = por %p425, %p426
      %s429 = sadd.s32 %s428, 1
      %p432 = scmp.eq.s32.totalorder %s24, 3
      %p433 = scmp.ne.s32.totalorder %s428, %s430
      %p434 = scmp.eq.s32.totalorder %s24, 0
      %p435 = por %p433, %p434
      %p436 = scmp.ne.s32.totalorder %s428, %s430
      %p437 = scmp.eq.s32.totalorder %s29, 3
      %p438 = por %p436, %p437
      %p439 = scmp.ne.s32.totalorder %s430, %s431
      %p440 = scmp.eq.s32.totalorder %s29, 0
      %p441 = por %p439, %p440
      %p442 = scmp.ne.s32.totalorder %s430, %s431
      %p443 = scmp.eq.s32.totalorder %s30, 3
      %p444 = por %p442, %p443
      %p446 = scmp.ne.s32.totalorder %s431, %s445
      %p447 = scmp.eq.s32.totalorder %s30, 0
      %p448 = por %p446, %p447
      %p449 = scmp.le.s32.totalorder 1, %s24
      %p450 = scmp.lt.s32.totalorder %s24, 5
      %p451 = pnand %p449, %p450
      %p452 = pneg %p451
      // Predicated region
      $region9: #{text_encoder_forward.1} parent=5 // pred_check
        _
      $region10: #{text_encoder_forward.1} parent=5 // pred_check_branch
        %454 = sbr.rel (%p451) target = $region12
      $region11: #{text_encoder_forward.1} parent=5 // pred_region
        %s455 = ssub.s32 %s24, 1
        // Predicated region
        $region13: #{text_encoder_forward.1} parent=11 // pred_check
          %p456 = pneg %p45
        $region14: #{text_encoder_forward.1} parent=11 // pred_check_branch
          %458 = sbr.rel (%p456) target = $region16
        $region15: #{text_encoder_forward.1} parent=11 // pred_region
          _
        $region16: #{text_encoder_forward.1} parent=11 // pred_fallthru
          _
        // Predicated region
        $region17: #{text_encoder_forward.1} parent=11 // pred_check
          %p459 = pneg %p66
        $region18: #{text_encoder_forward.1} parent=11 // pred_check_branch
          %461 = sbr.rel (%p459) target = $region20
        $region19: #{text_encoder_forward.1} parent=11 // pred_region
          _
        $region20: #{text_encoder_forward.1} parent=11 // pred_fallthru
          _
        // Predicated region
        $region21: #{text_encoder_forward.1} parent=11 // pred_check
          %p462 = pneg %p87
        $region22: #{text_encoder_forward.1} parent=11 // pred_check_branch
          %464 = sbr.rel (%p462) target = $region24
        $region23: #{text_encoder_forward.1} parent=11 // pred_region
          %s466 = ssub.s32 32, 32
          %467 = vsyncadd [#allocation3], %s466
          %s469 = sshll.u32 [#allocation2], 4
          %s470 = int_to_ptr.vmem [resolvable:$true] %s469
          %472 = dma.hbm_to_vmem [thread:$0]  %s2, 32, %s470, [#allocation3]
        $region24: #{text_encoder_forward.1} parent=11 // pred_fallthru
          _
        // Predicated region
        $region25: #{text_encoder_forward.1} parent=11 // pred_check
          %p473 = pneg %p108
        $region26: #{text_encoder_forward.1} parent=11 // pred_check_branch
          %475 = sbr.rel (%p473) target = $region28
        $region27: #{text_encoder_forward.1} parent=11 // pred_region
          %s477 = ssub.s32 32, 32
          %478 = vsyncadd [#allocation5], %s477
          %s480 = sshll.u32 [#allocation4], 4
          %s481 = int_to_ptr.vmem [resolvable:$true] %s480
          %483 = dma.hbm_to_vmem [thread:$0]  %s3, 32, %s481, [#allocation5]
        $region28: #{text_encoder_forward.1} parent=11 // pred_fallthru
          _
      $region12: #{text_encoder_forward.1} parent=5 // pred_fallthru
        _
      %p484 = scmp.lt.s32.totalorder %s24, 4
      // Predicated region
      $region29: #{text_encoder_forward.1} parent=5 // pred_check
        %p485 = pneg %p484
      $region30: #{text_encoder_forward.1} parent=5 // pred_check_branch
        %487 = sbr.rel (%p485) target = $region32
      $region31: #{text_encoder_forward.1} parent=5 // pred_region
        // Predicated region
        $region33: #{text_encoder_forward.1} parent=31 // pred_check
          %p488 = pneg %p128
        $region34: #{text_encoder_forward.1} parent=31 // pred_check_branch
          %490 = sbr.rel (%p488) target = $region36
        $region35: #{text_encoder_forward.1} parent=31 // pred_region
          %s491 = sand.u32 %s24, 1
          %s492 = scalar_lea.sflag [#allocation3], %s491
          %s493 = sand.u32 %s118, 1
          %s494 = smul.addr %s493, 768
          %s495 = scalar_lea.vmem [#allocation6], %s494
          %s497 = ssub.s32 12288, 12288
          %498 = vsyncadd %s492, %s497
          %s499 = smul.addr %s24, 192
          %s500 = smul.addr %s499, 64
          %s501 = scalar_lea.hbm %s4, %s500
          %s502 = sshll.u32 %s495, 4
          %s503 = int_to_ptr.vmem [resolvable:$true] %s502
          %508 = dma.hbm_to_vmem [thread:$0]  %s501, 12288, %s503, %s492, 384, 384, 24
        $region36: #{text_encoder_forward.1} parent=31 // pred_fallthru
          _
        // Predicated region
        $region37: #{text_encoder_forward.1} parent=31 // pred_check
          %p509 = pneg %p154
        $region38: #{text_encoder_forward.1} parent=31 // pred_check_branch
          %511 = sbr.rel (%p509) target = $region40
        $region39: #{text_encoder_forward.1} parent=31 // pred_region
          %s512 = sand.u32 %s24, 1
          %s513 = scalar_lea.sflag [#allocation3], %s512
          %s514 = sand.u32 %s144, 1
          %s515 = smul.addr %s514, 6
          %s516 = scalar_lea.vmem [#allocation7], %s515
          %s518 = ssub.s32 96, 96
          %519 = vsyncadd %s513, %s518
          %s520 = smul.addr %s24, 6
          %s521 = smul.addr %s520, 16
          %s522 = scalar_lea.hbm %s5, %s521
          %s524 = sshll.u32 %s516, 4
          %s525 = int_to_ptr.vmem [resolvable:$true] %s524
          %527 = dma.hbm_to_vmem [thread:$0]  %s522, 96, %s525, %s513
        $region40: #{text_encoder_forward.1} parent=31 // pred_fallthru
          _
        // Predicated region
        $region41: #{text_encoder_forward.1} parent=31 // pred_check
          %p528 = pneg %p180
        $region42: #{text_encoder_forward.1} parent=31 // pred_check_branch
          %530 = sbr.rel (%p528) target = $region44
        $region43: #{text_encoder_forward.1} parent=31 // pred_region
          %s531 = sand.u32 %s24, 1
          %s532 = scalar_lea.sflag [#allocation3], %s531
          %s533 = sand.u32 %s170, 1
          %s534 = smul.addr %s533, 256
          %s535 = scalar_lea.vmem [#allocation8], %s534
          %s537 = ssub.s32 4096, 4096
          %538 = vsyncadd %s532, %s537
          %s539 = smul.addr %s24, 64
          %s540 = smul.addr %s539, 64
          %s541 = scalar_lea.hbm %s6, %s540
          %s542 = sshll.u32 %s535, 4
          %s543 = int_to_ptr.vmem [resolvable:$true] %s542
          %548 = dma.hbm_to_vmem [thread:$0]  %s541, 4096, %s543, %s532, 128, 128, 8
        $region44: #{text_encoder_forward.1} parent=31 // pred_fallthru
          _
        // Predicated region
        $region45: #{text_encoder_forward.1} parent=31 // pred_check
          %p549 = pneg %p206
        $region46: #{text_encoder_forward.1} parent=31 // pred_check_branch
          %551 = sbr.rel (%p549) target = $region48
        $region47: #{text_encoder_forward.1} parent=31 // pred_region
          %s552 = sand.u32 %s24, 1
          %s553 = scalar_lea.sflag [#allocation3], %s552
          %s554 = sand.u32 %s196, 1
          %s555 = smul.addr %s554, 2
          %s556 = scalar_lea.vmem [#allocation9], %s555
          %s558 = ssub.s32 32, 32
          %559 = vsyncadd %s553, %s558
          %s560 = smul.addr %s24, 2
          %s561 = smul.addr %s560, 16
          %s562 = scalar_lea.hbm %s7, %s561
          %s564 = sshll.u32 %s556, 4
          %s565 = int_to_ptr.vmem [resolvable:$true] %s564
          %567 = dma.hbm_to_vmem [thread:$0]  %s562, 32, %s565, %s553
        $region48: #{text_encoder_forward.1} parent=31 // pred_fallthru
          _
        // Predicated region
        $region49: #{text_encoder_forward.1} parent=31 // pred_check
          %p568 = pneg %p232
        $region50: #{text_encoder_forward.1} parent=31 // pred_check_branch
          %570 = sbr.rel (%p568) target = $region52
        $region51: #{text_encoder_forward.1} parent=31 // pred_region
          %s571 = sand.u32 %s24, 1
          %s572 = scalar_lea.sflag [#allocation3], %s571
          %s573 = sand.u32 %s222, 1
          %s574 = smul.addr %s573, 2
          %s575 = scalar_lea.vmem [#allocation10], %s574
          %s577 = ssub.s32 32, 32
          %578 = vsyncadd %s572, %s577
          %s579 = smul.addr %s24, 2
          %s580 = smul.addr %s579, 16
          %s581 = scalar_lea.hbm %s8, %s580
          %s583 = sshll.u32 %s575, 4
          %s584 = int_to_ptr.vmem [resolvable:$true] %s583
          %586 = dma.hbm_to_vmem [thread:$0]  %s581, 32, %s584, %s572
        $region52: #{text_encoder_forward.1} parent=31 // pred_fallthru
          _
        // Predicated region
        $region53: #{text_encoder_forward.1} parent=31 // pred_check
          %p587 = pneg %p258
        $region54: #{text_encoder_forward.1} parent=31 // pred_check_branch
          %589 = sbr.rel (%p587) target = $region56
        $region55: #{text_encoder_forward.1} parent=31 // pred_region
          %s590 = sand.u32 %s24, 1
          %s591 = scalar_lea.sflag [#allocation3], %s590
          %s592 = sand.u32 %s248, 1
          %s593 = smul.addr %s592, 2
          %s594 = scalar_lea.vmem [#allocation11], %s593
          %s596 = ssub.s32 32, 32
          %597 = vsyncadd %s591, %s596
          %s598 = smul.addr %s24, 2
          %s599 = smul.addr %s598, 16
          %s600 = scalar_lea.hbm %s9, %s599
          %s602 = sshll.u32 %s594, 4
          %s603 = int_to_ptr.vmem [resolvable:$true] %s602
          %605 = dma.hbm_to_vmem [thread:$0]  %s600, 32, %s603, %s591
        $region56: #{text_encoder_forward.1} parent=31 // pred_fallthru
          _
        // Predicated region
        $region57: #{text_encoder_forward.1} parent=31 // pred_check
          %p606 = pneg %p284
        $region58: #{text_encoder_forward.1} parent=31 // pred_check_branch
          %608 = sbr.rel (%p606) target = $region60
        $region59: #{text_encoder_forward.1} parent=31 // pred_region
          %s609 = sand.u32 %s24, 1
          %s610 = scalar_lea.sflag [#allocation3], %s609
          %s611 = sand.u32 %s274, 1
          %s612 = smul.addr %s611, 1024
          %s613 = scalar_lea.vmem [#allocation12], %s612
          %s615 = ssub.s32 16384, 16384
          %616 = vsyncadd %s610, %s615
          %s617 = smul.addr %s24, 256
          %s618 = smul.addr %s617, 64
          %s619 = scalar_lea.hbm %s10, %s618
          %s620 = sshll.u32 %s613, 4
          %s621 = int_to_ptr.vmem [resolvable:$true] %s620
          %626 = dma.hbm_to_vmem [thread:$0]  %s619, 16384, %s621, %s610, 512, 512, 32
        $region60: #{text_encoder_forward.1} parent=31 // pred_fallthru
          _
        // Predicated region
        $region61: #{text_encoder_forward.1} parent=31 // pred_check
          %p627 = pneg %p310
        $region62: #{text_encoder_forward.1} parent=31 // pred_check_branch
          %629 = sbr.rel (%p627) target = $region64
        $region63: #{text_encoder_forward.1} parent=31 // pred_region
          %s630 = sand.u32 %s24, 1
          %s631 = scalar_lea.sflag [#allocation3], %s630
          %s632 = sand.u32 %s300, 1
          %s633 = smul.addr %s632, 8
          %s634 = scalar_lea.vmem [#allocation13], %s633
          %s636 = ssub.s32 128, 128
          %637 = vsyncadd %s631, %s636
          %s638 = smul.addr %s24, 8
          %s639 = smul.addr %s638, 16
          %s640 = scalar_lea.hbm %s11, %s639
          %s642 = sshll.u32 %s634, 4
          %s643 = int_to_ptr.vmem [resolvable:$true] %s642
          %645 = dma.hbm_to_vmem [thread:$0]  %s640, 128, %s643, %s631
        $region64: #{text_encoder_forward.1} parent=31 // pred_fallthru
          _
        // Predicated region
        $region65: #{text_encoder_forward.1} parent=31 // pred_check
          %p646 = pneg %p336
        $region66: #{text_encoder_forward.1} parent=31 // pred_check_branch
          %648 = sbr.rel (%p646) target = $region68
        $region67: #{text_encoder_forward.1} parent=31 // pred_region
          %s649 = sand.u32 %s24, 1
          %s650 = scalar_lea.sflag [#allocation3], %s649
          %s651 = sand.u32 %s326, 1
          %s652 = smul.addr %s651, 1024
          %s653 = scalar_lea.vmem [#allocation14], %s652
          %s655 = ssub.s32 16384, 16384
          %656 = vsyncadd %s650, %s655
          %s657 = smul.addr %s24, 256
          %s658 = smul.addr %s657, 64
          %s659 = scalar_lea.hbm %s12, %s658
          %s660 = sshll.u32 %s653, 4
          %s661 = int_to_ptr.vmem [resolvable:$true] %s660
          %666 = dma.hbm_to_vmem [thread:$0]  %s659, 16384, %s661, %s650, 128, 128, 8
        $region68: #{text_encoder_forward.1} parent=31 // pred_fallthru
          _
        // Predicated region
        $region69: #{text_encoder_forward.1} parent=31 // pred_check
          %p667 = pneg %p362
        $region70: #{text_encoder_forward.1} parent=31 // pred_check_branch
          %669 = sbr.rel (%p667) target = $region72
        $region71: #{text_encoder_forward.1} parent=31 // pred_region
          %s670 = sand.u32 %s24, 1
          %s671 = scalar_lea.sflag [#allocation3], %s670
          %s672 = sand.u32 %s352, 1
          %s673 = smul.addr %s672, 2
          %s674 = scalar_lea.vmem [#allocation15], %s673
          %s676 = ssub.s32 32, 32
          %677 = vsyncadd %s671, %s676
          %s678 = smul.addr %s24, 2
          %s679 = smul.addr %s678, 16
          %s680 = scalar_lea.hbm %s13, %s679
          %s682 = sshll.u32 %s674, 4
          %s683 = int_to_ptr.vmem [resolvable:$true] %s682
          %685 = dma.hbm_to_vmem [thread:$0]  %s680, 32, %s683, %s671
        $region72: #{text_encoder_forward.1} parent=31 // pred_fallthru
          _
        // Predicated region
        $region73: #{text_encoder_forward.1} parent=31 // pred_check
          %p686 = pneg %p388
        $region74: #{text_encoder_forward.1} parent=31 // pred_check_branch
          %688 = sbr.rel (%p686) target = $region76
        $region75: #{text_encoder_forward.1} parent=31 // pred_region
          %s689 = sand.u32 %s24, 1
          %s690 = scalar_lea.sflag [#allocation3], %s689
          %s691 = sand.u32 %s378, 1
          %s692 = smul.addr %s691, 2
          %s693 = scalar_lea.vmem [#allocation16], %s692
          %s695 = ssub.s32 32, 32
          %696 = vsyncadd %s690, %s695
          %s697 = smul.addr %s24, 2
          %s698 = smul.addr %s697, 16
          %s699 = scalar_lea.hbm %s14, %s698
          %s701 = sshll.u32 %s693, 4
          %s702 = int_to_ptr.vmem [resolvable:$true] %s701
          %704 = dma.hbm_to_vmem [thread:$0]  %s699, 32, %s702, %s690
        $region76: #{text_encoder_forward.1} parent=31 // pred_fallthru
          _
        // Predicated region
        $region77: #{text_encoder_forward.1} parent=31 // pred_check
          %p705 = pneg %p414
        $region78: #{text_encoder_forward.1} parent=31 // pred_check_branch
          %707 = sbr.rel (%p705) target = $region80
        $region79: #{text_encoder_forward.1} parent=31 // pred_region
          %s708 = sand.u32 %s24, 1
          %s709 = scalar_lea.sflag [#allocation3], %s708
          %s710 = sand.u32 %s404, 1
          %s711 = smul.addr %s710, 2
          %s712 = scalar_lea.vmem [#allocation17], %s711
          %s714 = ssub.s32 32, 32
          %715 = vsyncadd %s709, %s714
          %s716 = smul.addr %s24, 2
          %s717 = smul.addr %s716, 16
          %s718 = scalar_lea.hbm %s15, %s717
          %s720 = sshll.u32 %s712, 4
          %s721 = int_to_ptr.vmem [resolvable:$true] %s720
          %723 = dma.hbm_to_vmem [thread:$0]  %s718, 32, %s721, %s709
        $region80: #{text_encoder_forward.1} parent=31 // pred_fallthru
          _
      $region32: #{text_encoder_forward.1} parent=5 // pred_fallthru
        _
      %p724 = scmp.le.s32.totalorder 1, %s24
      %p725 = scmp.lt.s32.totalorder %s24, 5
      %p726 = pnand %p724, %p725
      %p727 = pneg %p726
      // Predicated region
      $region81: #{text_encoder_forward.1} parent=5 // pred_check
        _
      $region82: #{text_encoder_forward.1} parent=5 // pred_check_branch
        %729 = sbr.rel (%p726) target = $region84
      $region83: #{text_encoder_forward.1} parent=5 // pred_region
        %s730 = ssub.s32 %s24, 1
        // Predicated region
        $region85: #{text_encoder_forward.1} parent=83 // pred_check
          %p731 = pneg %p87
        $region86: #{text_encoder_forward.1} parent=83 // pred_check_branch
          %733 = sbr.rel (%p731) target = $region88
        $region87: #{text_encoder_forward.1} parent=83 // pred_region
          %734 = dma.done [#allocation3], 32
        $region88: #{text_encoder_forward.1} parent=83 // pred_fallthru
          _
        // Predicated region
        $region89: #{text_encoder_forward.1} parent=83 // pred_check
          %p735 = pneg %p108
        $region90: #{text_encoder_forward.1} parent=83 // pred_check_branch
          %737 = sbr.rel (%p735) target = $region92
        $region91: #{text_encoder_forward.1} parent=83 // pred_region
          %738 = dma.done [#allocation5], 32
        $region92: #{text_encoder_forward.1} parent=83 // pred_fallthru
          _
        %s739 = sand.u32 %s29, 1
        %s740 = scalar_lea.sflag [#allocation3], %s739
        %s741 = sand.u32 %s121, 1
        %s742 = smul.addr %s741, 768
        %s743 = scalar_lea.vmem [#allocation6], %s742
        // Predicated region
        $region93: #{text_encoder_forward.1} parent=83 // pred_check
          %p744 = pneg %p134
        $region94: #{text_encoder_forward.1} parent=83 // pred_check_branch
          %746 = sbr.rel (%p744) target = $region96
        $region95: #{text_encoder_forward.1} parent=83 // pred_region
          %747 = dma.done %s740, 12288
        $region96: #{text_encoder_forward.1} parent=83 // pred_fallthru
          _
        %s748 = sand.u32 %s29, 1
        %s749 = scalar_lea.sflag [#allocation3], %s748
        %s750 = sand.u32 %s147, 1
        %s751 = smul.addr %s750, 6
        %s752 = scalar_lea.vmem [#allocation7], %s751
        // Predicated region
        $region97: #{text_encoder_forward.1} parent=83 // pred_check
          %p753 = pneg %p160
        $region98: #{text_encoder_forward.1} parent=83 // pred_check_branch
          %755 = sbr.rel (%p753) target = $region100
        $region99: #{text_encoder_forward.1} parent=83 // pred_region
          %756 = dma.done %s749, 96
        $region100: #{text_encoder_forward.1} parent=83 // pred_fallthru
          _
        %s757 = sand.u32 %s29, 1
        %s758 = scalar_lea.sflag [#allocation3], %s757
        %s759 = sand.u32 %s173, 1
        %s760 = smul.addr %s759, 256
        %s761 = scalar_lea.vmem [#allocation8], %s760
        // Predicated region
        $region101: #{text_encoder_forward.1} parent=83 // pred_check
          %p762 = pneg %p186
        $region102: #{text_encoder_forward.1} parent=83 // pred_check_branch
          %764 = sbr.rel (%p762) target = $region104
        $region103: #{text_encoder_forward.1} parent=83 // pred_region
          %765 = dma.done %s758, 4096
        $region104: #{text_encoder_forward.1} parent=83 // pred_fallthru
          _
        %s766 = sand.u32 %s29, 1
        %s767 = scalar_lea.sflag [#allocation3], %s766
        %s768 = sand.u32 %s199, 1
        %s769 = smul.addr %s768, 2
        %s770 = scalar_lea.vmem [#allocation9], %s769
        // Predicated region
        $region105: #{text_encoder_forward.1} parent=83 // pred_check
          %p771 = pneg %p212
        $region106: #{text_encoder_forward.1} parent=83 // pred_check_branch
          %773 = sbr.rel (%p771) target = $region108
        $region107: #{text_encoder_forward.1} parent=83 // pred_region
          %774 = dma.done %s767, 32
        $region108: #{text_encoder_forward.1} parent=83 // pred_fallthru
          _
        %s775 = sand.u32 %s29, 1
        %s776 = scalar_lea.sflag [#allocation3], %s775
        %s777 = sand.u32 %s225, 1
        %s778 = smul.addr %s777, 2
        %s779 = scalar_lea.vmem [#allocation10], %s778
        // Predicated region
        $region109: #{text_encoder_forward.1} parent=83 // pred_check
          %p780 = pneg %p238
        $region110: #{text_encoder_forward.1} parent=83 // pred_check_branch
          %782 = sbr.rel (%p780) target = $region112
        $region111: #{text_encoder_forward.1} parent=83 // pred_region
          %783 = dma.done %s776, 32
        $region112: #{text_encoder_forward.1} parent=83 // pred_fallthru
          _
        %s784 = sand.u32 %s29, 1
        %s785 = scalar_lea.sflag [#allocation3], %s784
        %s786 = sand.u32 %s251, 1
        %s787 = smul.addr %s786, 2
        %s788 = scalar_lea.vmem [#allocation11], %s787
        // Predicated region
        $region113: #{text_encoder_forward.1} parent=83 // pred_check
          %p789 = pneg %p264
        $region114: #{text_encoder_forward.1} parent=83 // pred_check_branch
          %791 = sbr.rel (%p789) target = $region116
        $region115: #{text_encoder_forward.1} parent=83 // pred_region
          %792 = dma.done %s785, 32
        $region116: #{text_encoder_forward.1} parent=83 // pred_fallthru
          _
        %s793 = sand.u32 %s29, 1
        %s794 = scalar_lea.sflag [#allocation3], %s793
        %s795 = sand.u32 %s277, 1
        %s796 = smul.addr %s795, 1024
        %s797 = scalar_lea.vmem [#allocation12], %s796
        // Predicated region
        $region117: #{text_encoder_forward.1} parent=83 // pred_check
          %p798 = pneg %p290
        $region118: #{text_encoder_forward.1} parent=83 // pred_check_branch
          %800 = sbr.rel (%p798) target = $region120
        $region119: #{text_encoder_forward.1} parent=83 // pred_region
          %801 = dma.done %s794, 16384
        $region120: #{text_encoder_forward.1} parent=83 // pred_fallthru
          _
        %s802 = sand.u32 %s29, 1
        %s803 = scalar_lea.sflag [#allocation3], %s802
        %s804 = sand.u32 %s303, 1
        %s805 = smul.addr %s804, 8
        %s806 = scalar_lea.vmem [#allocation13], %s805
        // Predicated region
        $region121: #{text_encoder_forward.1} parent=83 // pred_check
          %p807 = pneg %p316
        $region122: #{text_encoder_forward.1} parent=83 // pred_check_branch
          %809 = sbr.rel (%p807) target = $region124
        $region123: #{text_encoder_forward.1} parent=83 // pred_region
          %810 = dma.done %s803, 128
        $region124: #{text_encoder_forward.1} parent=83 // pred_fallthru
          _
        %s811 = sand.u32 %s29, 1
        %s812 = scalar_lea.sflag [#allocation3], %s811
        %s813 = sand.u32 %s329, 1
        %s814 = smul.addr %s813, 1024
        %s815 = scalar_lea.vmem [#allocation14], %s814
        // Predicated region
        $region125: #{text_encoder_forward.1} parent=83 // pred_check
          %p816 = pneg %p342
        $region126: #{text_encoder_forward.1} parent=83 // pred_check_branch
          %818 = sbr.rel (%p816) target = $region128
        $region127: #{text_encoder_forward.1} parent=83 // pred_region
          %819 = dma.done %s812, 16384
        $region128: #{text_encoder_forward.1} parent=83 // pred_fallthru
          _
        %s820 = sand.u32 %s29, 1
        %s821 = scalar_lea.sflag [#allocation3], %s820
        %s822 = sand.u32 %s355, 1
        %s823 = smul.addr %s822, 2
        %s824 = scalar_lea.vmem [#allocation15], %s823
        // Predicated region
        $region129: #{text_encoder_forward.1} parent=83 // pred_check
          %p825 = pneg %p368
        $region130: #{text_encoder_forward.1} parent=83 // pred_check_branch
          %827 = sbr.rel (%p825) target = $region132
        $region131: #{text_encoder_forward.1} parent=83 // pred_region
          %828 = dma.done %s821, 32
        $region132: #{text_encoder_forward.1} parent=83 // pred_fallthru
          _
        %s829 = sand.u32 %s29, 1
        %s830 = scalar_lea.sflag [#allocation3], %s829
        %s831 = sand.u32 %s381, 1
        %s832 = smul.addr %s831, 2
        %s833 = scalar_lea.vmem [#allocation16], %s832
        // Predicated region
        $region133: #{text_encoder_forward.1} parent=83 // pred_check
          %p834 = pneg %p394
        $region134: #{text_encoder_forward.1} parent=83 // pred_check_branch
          %836 = sbr.rel (%p834) target = $region136
        $region135: #{text_encoder_forward.1} parent=83 // pred_region
          %837 = dma.done %s830, 32
        $region136: #{text_encoder_forward.1} parent=83 // pred_fallthru
          _
        %s838 = sand.u32 %s29, 1
        %s839 = scalar_lea.sflag [#allocation3], %s838
        %s840 = sand.u32 %s407, 1
        %s841 = smul.addr %s840, 2
        %s842 = scalar_lea.vmem [#allocation17], %s841
        // Predicated region
        $region137: #{text_encoder_forward.1} parent=83 // pred_check
          %p843 = pneg %p420
        $region138: #{text_encoder_forward.1} parent=83 // pred_check_branch
          %845 = sbr.rel (%p843) target = $region140
        $region139: #{text_encoder_forward.1} parent=83 // pred_region
          %846 = dma.done %s839, 32
        $region140: #{text_encoder_forward.1} parent=83 // pred_fallthru
          _
        %p847 = pneg %p45
        %p848 = pneg %p42
        %p849 = pneg %p66
        %p850 = pneg %p63
        %p851 = pneg %p87
        %p852 = pneg %p84
        %p853 = pneg %p108
        %p854 = pneg %p105
        %s855 = sand.u32 %s29, 1
        %s856 = scalar_lea.sflag [#allocation3], %s855
        %s857 = sand.u32 %s121, 1
        %s858 = smul.addr %s857, 768
        %s859 = scalar_lea.vmem [#allocation6], %s858
        %p860 = pneg %p134
        %p861 = pneg %p131
        %s862 = sand.u32 %s29, 1
        %s863 = scalar_lea.sflag [#allocation3], %s862
        %s864 = sand.u32 %s147, 1
        %s865 = smul.addr %s864, 6
        %s866 = scalar_lea.vmem [#allocation7], %s865
        %p867 = pneg %p160
        %p868 = pneg %p157
        %s869 = sand.u32 %s29, 1
        %s870 = scalar_lea.sflag [#allocation3], %s869
        %s871 = sand.u32 %s173, 1
        %s872 = smul.addr %s871, 256
        %s873 = scalar_lea.vmem [#allocation8], %s872
        %p874 = pneg %p186
        %p875 = pneg %p183
        %s876 = sand.u32 %s29, 1
        %s877 = scalar_lea.sflag [#allocation3], %s876
        %s878 = sand.u32 %s199, 1
        %s879 = smul.addr %s878, 2
        %s880 = scalar_lea.vmem [#allocation9], %s879
        %p881 = pneg %p212
        %p882 = pneg %p209
        %s883 = sand.u32 %s29, 1
        %s884 = scalar_lea.sflag [#allocation3], %s883
        %s885 = sand.u32 %s225, 1
        %s886 = smul.addr %s885, 2
        %s887 = scalar_lea.vmem [#allocation10], %s886
        %p888 = pneg %p238
        %p889 = pneg %p235
        %s890 = sand.u32 %s29, 1
        %s891 = scalar_lea.sflag [#allocation3], %s890
        %s892 = sand.u32 %s251, 1
        %s893 = smul.addr %s892, 2
        %s894 = scalar_lea.vmem [#allocation11], %s893
        %p895 = pneg %p264
        %p896 = pneg %p261
        %s897 = sand.u32 %s29, 1
        %s898 = scalar_lea.sflag [#allocation3], %s897
        %s899 = sand.u32 %s277, 1
        %s900 = smul.addr %s899, 1024
        %s901 = scalar_lea.vmem [#allocation12], %s900
        %p902 = pneg %p290
        %p903 = pneg %p287
        %s904 = sand.u32 %s29, 1
        %s905 = scalar_lea.sflag [#allocation3], %s904
        %s906 = sand.u32 %s303, 1
        %s907 = smul.addr %s906, 8
        %s908 = scalar_lea.vmem [#allocation13], %s907
        %p909 = pneg %p316
        %p910 = pneg %p313
        %s911 = sand.u32 %s29, 1
        %s912 = scalar_lea.sflag [#allocation3], %s911
        %s913 = sand.u32 %s329, 1
        %s914 = smul.addr %s913, 1024
        %s915 = scalar_lea.vmem [#allocation14], %s914
        %p916 = pneg %p342
        %p917 = pneg %p339
        %s918 = sand.u32 %s29, 1
        %s919 = scalar_lea.sflag [#allocation3], %s918
        %s920 = sand.u32 %s355, 1
        %s921 = smul.addr %s920, 2
        %s922 = scalar_lea.vmem [#allocation15], %s921
        %p923 = pneg %p368
        %p924 = pneg %p365
        %s925 = sand.u32 %s29, 1
        %s926 = scalar_lea.sflag [#allocation3], %s925
        %s927 = sand.u32 %s381, 1
        %s928 = smul.addr %s927, 2
        %s929 = scalar_lea.vmem [#allocation16], %s928
        %p930 = pneg %p394
        %p931 = pneg %p391
        %s932 = sand.u32 %s29, 1
        %s933 = scalar_lea.sflag [#allocation3], %s932
        %s934 = sand.u32 %s407, 1
        %s935 = smul.addr %s934, 2
        %s936 = scalar_lea.vmem [#allocation17], %s935
        %p937 = pneg %p420
        %p938 = pneg %p417
        %p939 = pneg %p441
        %p940 = pneg %p438
        %p942 = scmp.eq.s32.totalorder %s29, 0
        // Predicated region
        $region141: #{text_encoder_forward.1} parent=83 // pred_check
          %p943 = pneg %p942
        $region142: #{text_encoder_forward.1} parent=83 // pred_check_branch
          %945 = sbr.rel (%p943) target = $region144
        $region143: #{text_encoder_forward.1} parent=83 // pred_region
          %v946 = vld [vmem:[%s0] sm:$0xff]
          %v947 = vld [vmem:[%s0 + $0x8] sm:$0xff]
          %v948 = vld [vmem:[%s0 + $0x10] sm:$0xff]
          %v949 = vld [vmem:[%s0 + $0x18] sm:$0xff]
          %v950 = vld [vmem:[%s0 + $0x20] sm:$0xff]
          %v951 = vld [vmem:[%s0 + $0x28] sm:$0xff]
          %v952 = vld [vmem:[%s0 + $0x30] sm:$0xff]
          %v953 = vld [vmem:[%s0 + $0x38] sm:$0xff]
          %v954 = vld [vmem:[#allocation2] sm:$0x3]
          %v955 = vld [vmem:[#allocation4] sm:$0x3]
          %v956 = vadd.f32 %v946, %v947
          %957 = vadd.xlane.f32.xlu0 %v956
          %v958 = vpop.xlane.xlu0 %957
          %v959 = vadd.f32 %v948, %v949
          %960 = vadd.xlane.f32.xlu0 %v959
          %v961 = vpop.xlane.xlu0 %960
          %v962 = vadd.f32 %v950, %v951
          %963 = vadd.xlane.f32.xlu0 %v962
          %v964 = vpop.xlane.xlu0 %963
          %v965 = vadd.f32 %v952, %v953
          %966 = vadd.xlane.f32.xlu0 %v965
          %v967 = vpop.xlane.xlu0 %966
          %v968 = vrcp.pop 256.0
          %v969 = vmul.f32 %v958, %v968
          %v970 = vmul.f32 %v961, %v968
          %v971 = vmul.f32 %v964, %v968
          %v972 = vmul.f32 %v967, %v968
          %v973 = vsub.f32 %v946, %v969
          %v974 = vsub.f32 %v947, %v969
          %v975 = vsub.f32 %v948, %v970
          %v976 = vsub.f32 %v949, %v970
          %v977 = vsub.f32 %v950, %v971
          %v978 = vsub.f32 %v951, %v971
          %v979 = vsub.f32 %v952, %v972
          %v980 = vsub.f32 %v953, %v972
          %v981 = vmul.f32 %v973, %v973
          %v982 = vmul.f32 %v974, %v974
          %v983 = vmul.f32 %v975, %v975
          %v984 = vmul.f32 %v976, %v976
          %v985 = vmul.f32 %v977, %v977
          %v986 = vmul.f32 %v978, %v978
          %v987 = vmul.f32 %v979, %v979
          %v988 = vmul.f32 %v980, %v980
          %v989 = vadd.f32 %v981, %v982
          %990 = vadd.xlane.f32.xlu0 %v989
          %v991 = vpop.xlane.xlu0 %990
          %v992 = vadd.f32 %v983, %v984
          %993 = vadd.xlane.f32.xlu0 %v992
          %v994 = vpop.xlane.xlu0 %993
          %v995 = vadd.f32 %v985, %v986
          %996 = vadd.xlane.f32.xlu0 %v995
          %v997 = vpop.xlane.xlu0 %996
          %v998 = vadd.f32 %v987, %v988
          %999 = vadd.xlane.f32.xlu0 %v998
          %v1000 = vpop.xlane.xlu0 %999
          %v1001 = vmul.f32 %v991, %v968
          %v1002 = vmul.f32 %v994, %v968
          %v1003 = vmul.f32 %v997, %v968
          %v1004 = vmul.f32 %v1000, %v968
          %v1005 = vadd.f32 %v1001, 1e-12
          %v1006 = vadd.f32 %v1002, 1e-12
          %v1007 = vadd.f32 %v1003, 1e-12
          %v1008 = vadd.f32 %v1004, 1e-12
          %v1009 = vrsqrt.pop %v1005
          %v1010 = vrsqrt.pop %v1006
          %v1011 = vrsqrt.pop %v1007
          %v1012 = vrsqrt.pop %v1008
          %v1013 = vmul.f32 %v973, %v1009
          %v1014 = vmul.f32 %v974, %v1009
          %v1015 = vmul.f32 %v975, %v1010
          %v1016 = vmul.f32 %v976, %v1010
          %v1017 = vmul.f32 %v977, %v1011
          %v1018 = vmul.f32 %v978, %v1011
          %v1019 = vmul.f32 %v979, %v1012
          %v1020 = vmul.f32 %v980, %v1012
          %v1022 = vlaneseq
          %v1023 = vshrl.u32 %v1022, 7
          %v1024 = vsub.s32 0, %v1023
          %v1025 = vrot.slane %v954, %v1024
          %v1026 = vlaneseq
          %v1027 = vshrl.u32 %v1026, 7
          %v1028 = vsub.s32 1, %v1027
          %v1029 = vrot.slane %v954, %v1028
          %v1032 = vmul.f32 %v1013, %v1025
          %v1033 = vmul.f32 %v1014, %v1029
          %v1034 = vmul.f32 %v1015, %v1025
          %v1035 = vmul.f32 %v1016, %v1029
          %v1036 = vmul.f32 %v1017, %v1025
          %v1037 = vmul.f32 %v1018, %v1029
          %v1038 = vmul.f32 %v1019, %v1025
          %v1039 = vmul.f32 %v1020, %v1029
          %v1041 = vlaneseq
          %v1042 = vshrl.u32 %v1041, 7
          %v1043 = vsub.s32 0, %v1042
          %v1044 = vrot.slane %v955, %v1043
          %v1045 = vlaneseq
          %v1046 = vshrl.u32 %v1045, 7
          %v1047 = vsub.s32 1, %v1046
          %v1048 = vrot.slane %v955, %v1047
          %v1051 = vadd.f32 %v1032, %v1044
          %v1052 = vadd.f32 %v1033, %v1048
          %v1053 = vadd.f32 %v1034, %v1044
          %v1054 = vadd.f32 %v1035, %v1048
          %v1055 = vadd.f32 %v1036, %v1044
          %v1056 = vadd.f32 %v1037, %v1048
          %v1057 = vadd.f32 %v1038, %v1044
          %v1058 = vadd.f32 %v1039, %v1048
          %1059 = vst [vmem:[%s16] sm:$0xff] %v1051
          %1060 = vst [vmem:[%s16 + $0x8] sm:$0xff] %v1052
          %1061 = vst [vmem:[%s16 + $0x10] sm:$0xff] %v1053
          %1062 = vst [vmem:[%s16 + $0x18] sm:$0xff] %v1054
          %1063 = vst [vmem:[%s16 + $0x20] sm:$0xff] %v1055
          %1064 = vst [vmem:[%s16 + $0x28] sm:$0xff] %v1056
          %1065 = vst [vmem:[%s16 + $0x30] sm:$0xff] %v1057
          %1066 = vst [vmem:[%s16 + $0x38] sm:$0xff] %v1058
        $region144: #{text_encoder_forward.1} parent=83 // pred_fallthru
          _
        %v1067 = vld [vmem:[%s16] sm:$0xff]
        %v1068 = vld [vmem:[%s16 + $0x8] sm:$0xff]
        %v1069 = vld [vmem:[%s16 + $0x10] sm:$0xff]
        %v1070 = vld [vmem:[%s16 + $0x18] sm:$0xff]
        %v1071 = vld [vmem:[%s16 + $0x20] sm:$0xff]
        %v1072 = vld [vmem:[%s16 + $0x28] sm:$0xff]
        %v1073 = vld [vmem:[%s16 + $0x30] sm:$0xff]
        %v1074 = vld [vmem:[%s16 + $0x38] sm:$0xff]
        %v1075 = vpack.c.bf16 %v1069, %v1067
        %v1076 = vpack.c.bf16 %v1070, %v1068
        %v1077 = vpack.c.bf16 %v1073, %v1071
        %v1078 = vpack.c.bf16 %v1074, %v1072
        %v1079 = vld [vmem:[%s743] sm:$0xff]
        %v1080 = vld [vmem:[%s743 + $0x8] sm:$0xff]
        %v1081 = vld [vmem:[%s743 + $0x10] sm:$0xff]
        %v1082 = vld [vmem:[%s743 + $0x18] sm:$0xff]
        %v1083 = vld [vmem:[%s743 + $0x20] sm:$0xff]
        %v1084 = vld [vmem:[%s743 + $0x28] sm:$0xff]
        %v1085 = vld [vmem:[%s743 + $0x30] sm:$0xff]
        %v1086 = vld [vmem:[%s743 + $0x38] sm:$0xff]
        %v1087 = vld [vmem:[%s743 + $0x40] sm:$0xff]
        %v1088 = vld [vmem:[%s743 + $0x48] sm:$0xff]
        %v1089 = vld [vmem:[%s743 + $0x50] sm:$0xff]
        %v1090 = vld [vmem:[%s743 + $0x58] sm:$0xff]
        %v1091 = vld [vmem:[%s743 + $0x60] sm:$0xff]
        %v1092 = vld [vmem:[%s743 + $0x68] sm:$0xff]
        %v1093 = vld [vmem:[%s743 + $0x70] sm:$0xff]
        %v1094 = vld [vmem:[%s743 + $0x78] sm:$0xff]
        %v1095 = vld [vmem:[%s743 + $0x80] sm:$0xff]
        %v1096 = vld [vmem:[%s743 + $0x88] sm:$0xff]
        %v1097 = vld [vmem:[%s743 + $0x90] sm:$0xff]
        %v1098 = vld [vmem:[%s743 + $0x98] sm:$0xff]
        %v1099 = vld [vmem:[%s743 + $0xa0] sm:$0xff]
        %v1100 = vld [vmem:[%s743 + $0xa8] sm:$0xff]
        %v1101 = vld [vmem:[%s743 + $0xb0] sm:$0xff]
        %v1102 = vld [vmem:[%s743 + $0xb8] sm:$0xff]
        %v1103 = vld [vmem:[%s743 + $0xc0] sm:$0xff]
        %v1104 = vld [vmem:[%s743 + $0xc8] sm:$0xff]
        %v1105 = vld [vmem:[%s743 + $0xd0] sm:$0xff]
        %v1106 = vld [vmem:[%s743 + $0xd8] sm:$0xff]
        %v1107 = vld [vmem:[%s743 + $0xe0] sm:$0xff]
        %v1108 = vld [vmem:[%s743 + $0xe8] sm:$0xff]
        %v1109 = vld [vmem:[%s743 + $0xf0] sm:$0xff]
        %v1110 = vld [vmem:[%s743 + $0xf8] sm:$0xff]
        %v1111 = vld [vmem:[%s743 + $0x100] sm:$0xff]
        %v1112 = vld [vmem:[%s743 + $0x108] sm:$0xff]
        %v1113 = vld [vmem:[%s743 + $0x110] sm:$0xff]
        %v1114 = vld [vmem:[%s743 + $0x118] sm:$0xff]
        %v1115 = vld [vmem:[%s743 + $0x120] sm:$0xff]
        %v1116 = vld [vmem:[%s743 + $0x128] sm:$0xff]
        %v1117 = vld [vmem:[%s743 + $0x130] sm:$0xff]
        %v1118 = vld [vmem:[%s743 + $0x138] sm:$0xff]
        %v1119 = vld [vmem:[%s743 + $0x140] sm:$0xff]
        %v1120 = vld [vmem:[%s743 + $0x148] sm:$0xff]
        %v1121 = vld [vmem:[%s743 + $0x150] sm:$0xff]
        %v1122 = vld [vmem:[%s743 + $0x158] sm:$0xff]
        %v1123 = vld [vmem:[%s743 + $0x160] sm:$0xff]
        %v1124 = vld [vmem:[%s743 + $0x168] sm:$0xff]
        %v1125 = vld [vmem:[%s743 + $0x170] sm:$0xff]
        %v1126 = vld [vmem:[%s743 + $0x178] sm:$0xff]
        %v1127 = vld [vmem:[%s743 + $0x180] sm:$0xff]
        %v1128 = vld [vmem:[%s743 + $0x188] sm:$0xff]
        %v1129 = vld [vmem:[%s743 + $0x190] sm:$0xff]
        %v1130 = vld [vmem:[%s743 + $0x198] sm:$0xff]
        %v1131 = vld [vmem:[%s743 + $0x1a0] sm:$0xff]
        %v1132 = vld [vmem:[%s743 + $0x1a8] sm:$0xff]
        %v1133 = vld [vmem:[%s743 + $0x1b0] sm:$0xff]
        %v1134 = vld [vmem:[%s743 + $0x1b8] sm:$0xff]
        %v1135 = vld [vmem:[%s743 + $0x1c0] sm:$0xff]
        %v1136 = vld [vmem:[%s743 + $0x1c8] sm:$0xff]
        %v1137 = vld [vmem:[%s743 + $0x1d0] sm:$0xff]
        %v1138 = vld [vmem:[%s743 + $0x1d8] sm:$0xff]
        %v1139 = vld [vmem:[%s743 + $0x1e0] sm:$0xff]
        %v1140 = vld [vmem:[%s743 + $0x1e8] sm:$0xff]
        %v1141 = vld [vmem:[%s743 + $0x1f0] sm:$0xff]
        %v1142 = vld [vmem:[%s743 + $0x1f8] sm:$0xff]
        %v1143 = vld [vmem:[%s743 + $0x200] sm:$0xff]
        %v1144 = vld [vmem:[%s743 + $0x208] sm:$0xff]
        %v1145 = vld [vmem:[%s743 + $0x210] sm:$0xff]
        %v1146 = vld [vmem:[%s743 + $0x218] sm:$0xff]
        %v1147 = vld [vmem:[%s743 + $0x220] sm:$0xff]
        %v1148 = vld [vmem:[%s743 + $0x228] sm:$0xff]
        %v1149 = vld [vmem:[%s743 + $0x230] sm:$0xff]
        %v1150 = vld [vmem:[%s743 + $0x238] sm:$0xff]
        %v1151 = vld [vmem:[%s743 + $0x240] sm:$0xff]
        %v1152 = vld [vmem:[%s743 + $0x248] sm:$0xff]
        %v1153 = vld [vmem:[%s743 + $0x250] sm:$0xff]
        %v1154 = vld [vmem:[%s743 + $0x258] sm:$0xff]
        %v1155 = vld [vmem:[%s743 + $0x260] sm:$0xff]
        %v1156 = vld [vmem:[%s743 + $0x268] sm:$0xff]
        %v1157 = vld [vmem:[%s743 + $0x270] sm:$0xff]
        %v1158 = vld [vmem:[%s743 + $0x278] sm:$0xff]
        %v1159 = vld [vmem:[%s743 + $0x280] sm:$0xff]
        %v1160 = vld [vmem:[%s743 + $0x288] sm:$0xff]
        %v1161 = vld [vmem:[%s743 + $0x290] sm:$0xff]
        %v1162 = vld [vmem:[%s743 + $0x298] sm:$0xff]
        %v1163 = vld [vmem:[%s743 + $0x2a0] sm:$0xff]
        %v1164 = vld [vmem:[%s743 + $0x2a8] sm:$0xff]
        %v1165 = vld [vmem:[%s743 + $0x2b0] sm:$0xff]
        %v1166 = vld [vmem:[%s743 + $0x2b8] sm:$0xff]
        %v1167 = vld [vmem:[%s743 + $0x2c0] sm:$0xff]
        %v1168 = vld [vmem:[%s743 + $0x2c8] sm:$0xff]
        %v1169 = vld [vmem:[%s743 + $0x2d0] sm:$0xff]
        %v1170 = vld [vmem:[%s743 + $0x2d8] sm:$0xff]
        %v1171 = vld [vmem:[%s743 + $0x2e0] sm:$0xff]
        %v1172 = vld [vmem:[%s743 + $0x2e8] sm:$0xff]
        %v1173 = vld [vmem:[%s743 + $0x2f0] sm:$0xff]
        %v1174 = vld [vmem:[%s743 + $0x2f8] sm:$0xff]
        %v1175 = vld [vmem:[%s752] sm:$0x3f]
        %v1177 = vlaneseq
        %v1178 = vshrl.u32 %v1177, 7
        %v1179 = vsub.s32 0, %v1178
        %v1180 = vrot.slane %v1175, %v1179
        %v1181 = vlaneseq
        %v1182 = vshrl.u32 %v1181, 7
        %v1183 = vsub.s32 1, %v1182
        %v1184 = vrot.slane %v1175, %v1183
        %v1185 = vlaneseq
        %v1186 = vshrl.u32 %v1185, 7
        %v1187 = vsub.s32 2, %v1186
        %v1188 = vrot.slane %v1175, %v1187
        %v1189 = vlaneseq
        %v1190 = vshrl.u32 %v1189, 7
        %v1191 = vsub.s32 3, %v1190
        %v1192 = vrot.slane %v1175, %v1191
        %v1193 = vlaneseq
        %v1194 = vshrl.u32 %v1193, 7
        %v1195 = vsub.s32 4, %v1194
        %v1196 = vrot.slane %v1175, %v1195
        %v1197 = vlaneseq
        %v1198 = vshrl.u32 %v1197, 7
        %v1199 = vsub.s32 5, %v1198
        %v1200 = vrot.slane %v1175, %v1199
        %v1303 = vunpack.c.l.b16 %v1079
        %v1304 = vunpack.c.h.b16 %v1079
        %v1305 = vunpack.c.l.b16 %v1080
        %v1306 = vunpack.c.h.b16 %v1080
        %v1307 = vunpack.c.l.b16 %v1081
        %v1308 = vunpack.c.h.b16 %v1081
        %v1309 = vunpack.c.l.b16 %v1082
        %v1310 = vunpack.c.h.b16 %v1082
        %v1311 = vunpack.c.l.b16 %v1083
        %v1312 = vunpack.c.h.b16 %v1083
        %v1313 = vunpack.c.l.b16 %v1084
        %v1314 = vunpack.c.h.b16 %v1084
        %v1315 = vunpack.c.l.b16 %v1085
        %v1316 = vunpack.c.h.b16 %v1085
        %v1317 = vunpack.c.l.b16 %v1086
        %v1318 = vunpack.c.h.b16 %v1086
        %v1319 = vunpack.c.l.b16 %v1087
        %v1320 = vunpack.c.h.b16 %v1087
        %v1321 = vunpack.c.l.b16 %v1088
        %v1322 = vunpack.c.h.b16 %v1088
        %v1323 = vunpack.c.l.b16 %v1089
        %v1324 = vunpack.c.h.b16 %v1089
        %v1325 = vunpack.c.l.b16 %v1090
        %v1326 = vunpack.c.h.b16 %v1090
        %v1327 = vunpack.c.l.b16 %v1091
        %v1328 = vunpack.c.h.b16 %v1091
        %v1329 = vunpack.c.l.b16 %v1092
        %v1330 = vunpack.c.h.b16 %v1092
        %v1331 = vunpack.c.l.b16 %v1093
        %v1332 = vunpack.c.h.b16 %v1093
        %v1333 = vunpack.c.l.b16 %v1094
        %v1334 = vunpack.c.h.b16 %v1094
        %v1335 = vunpack.c.l.b16 %v1095
        %v1336 = vunpack.c.h.b16 %v1095
        %v1337 = vunpack.c.l.b16 %v1096
        %v1338 = vunpack.c.h.b16 %v1096
        %v1339 = vunpack.c.l.b16 %v1097
        %v1340 = vunpack.c.h.b16 %v1097
        %v1341 = vunpack.c.l.b16 %v1098
        %v1342 = vunpack.c.h.b16 %v1098
        %v1343 = vunpack.c.l.b16 %v1099
        %v1344 = vunpack.c.h.b16 %v1099
        %v1345 = vunpack.c.l.b16 %v1100
        %v1346 = vunpack.c.h.b16 %v1100
        %v1347 = vunpack.c.l.b16 %v1101
        %v1348 = vunpack.c.h.b16 %v1101
        %v1349 = vunpack.c.l.b16 %v1102
        %v1350 = vunpack.c.h.b16 %v1102
        %v1351 = vunpack.c.l.b16 %v1103
        %v1352 = vunpack.c.h.b16 %v1103
        %v1353 = vunpack.c.l.b16 %v1104
        %v1354 = vunpack.c.h.b16 %v1104
        %v1355 = vunpack.c.l.b16 %v1105
        %v1356 = vunpack.c.h.b16 %v1105
        %v1357 = vunpack.c.l.b16 %v1106
        %v1358 = vunpack.c.h.b16 %v1106
        %v1359 = vunpack.c.l.b16 %v1107
        %v1360 = vunpack.c.h.b16 %v1107
        %v1361 = vunpack.c.l.b16 %v1108
        %v1362 = vunpack.c.h.b16 %v1108
        %v1363 = vunpack.c.l.b16 %v1109
        %v1364 = vunpack.c.h.b16 %v1109
        %v1365 = vunpack.c.l.b16 %v1110
        %v1366 = vunpack.c.h.b16 %v1110
        %v1367 = vunpack.c.l.b16 %v1111
        %v1368 = vunpack.c.h.b16 %v1111
        %v1369 = vunpack.c.l.b16 %v1112
        %v1370 = vunpack.c.h.b16 %v1112
        %v1371 = vunpack.c.l.b16 %v1113
        %v1372 = vunpack.c.h.b16 %v1113
        %v1373 = vunpack.c.l.b16 %v1114
        %v1374 = vunpack.c.h.b16 %v1114
        %v1375 = vunpack.c.l.b16 %v1115
        %v1376 = vunpack.c.h.b16 %v1115
        %v1377 = vunpack.c.l.b16 %v1116
        %v1378 = vunpack.c.h.b16 %v1116
        %v1379 = vunpack.c.l.b16 %v1117
        %v1380 = vunpack.c.h.b16 %v1117
        %v1381 = vunpack.c.l.b16 %v1118
        %v1382 = vunpack.c.h.b16 %v1118
        %v1383 = vunpack.c.l.b16 %v1119
        %v1384 = vunpack.c.h.b16 %v1119
        %v1385 = vunpack.c.l.b16 %v1120
        %v1386 = vunpack.c.h.b16 %v1120
        %v1387 = vunpack.c.l.b16 %v1121
        %v1388 = vunpack.c.h.b16 %v1121
        %v1389 = vunpack.c.l.b16 %v1122
        %v1390 = vunpack.c.h.b16 %v1122
        %v1391 = vunpack.c.l.b16 %v1123
        %v1392 = vunpack.c.h.b16 %v1123
        %v1393 = vunpack.c.l.b16 %v1124
        %v1394 = vunpack.c.h.b16 %v1124
        %v1395 = vunpack.c.l.b16 %v1125
        %v1396 = vunpack.c.h.b16 %v1125
        %v1397 = vunpack.c.l.b16 %v1126
        %v1398 = vunpack.c.h.b16 %v1126
        %v1399 = vunpack.c.l.b16 %v1127
        %v1400 = vunpack.c.h.b16 %v1127
        %v1401 = vunpack.c.l.b16 %v1128
        %v1402 = vunpack.c.h.b16 %v1128
        %v1403 = vunpack.c.l.b16 %v1129
        %v1404 = vunpack.c.h.b16 %v1129
        %v1405 = vunpack.c.l.b16 %v1130
        %v1406 = vunpack.c.h.b16 %v1130
        %v1407 = vunpack.c.l.b16 %v1131
        %v1408 = vunpack.c.h.b16 %v1131
        %v1409 = vunpack.c.l.b16 %v1132
        %v1410 = vunpack.c.h.b16 %v1132
        %v1411 = vunpack.c.l.b16 %v1133
        %v1412 = vunpack.c.h.b16 %v1133
        %v1413 = vunpack.c.l.b16 %v1134
        %v1414 = vunpack.c.h.b16 %v1134
        %v1415 = vunpack.c.l.b16 %v1135
        %v1416 = vunpack.c.h.b16 %v1135
        %v1417 = vunpack.c.l.b16 %v1136
        %v1418 = vunpack.c.h.b16 %v1136
        %v1419 = vunpack.c.l.b16 %v1137
        %v1420 = vunpack.c.h.b16 %v1137
        %v1421 = vunpack.c.l.b16 %v1138
        %v1422 = vunpack.c.h.b16 %v1138
        %v1423 = vunpack.c.l.b16 %v1139
        %v1424 = vunpack.c.h.b16 %v1139
        %v1425 = vunpack.c.l.b16 %v1140
        %v1426 = vunpack.c.h.b16 %v1140
        %v1427 = vunpack.c.l.b16 %v1141
        %v1428 = vunpack.c.h.b16 %v1141
        %v1429 = vunpack.c.l.b16 %v1142
        %v1430 = vunpack.c.h.b16 %v1142
        %v1431 = vunpack.c.l.b16 %v1143
        %v1432 = vunpack.c.h.b16 %v1143
        %v1433 = vunpack.c.l.b16 %v1144
        %v1434 = vunpack.c.h.b16 %v1144
        %v1435 = vunpack.c.l.b16 %v1145
        %v1436 = vunpack.c.h.b16 %v1145
        %v1437 = vunpack.c.l.b16 %v1146
        %v1438 = vunpack.c.h.b16 %v1146
        %v1439 = vunpack.c.l.b16 %v1147
        %v1440 = vunpack.c.h.b16 %v1147
        %v1441 = vunpack.c.l.b16 %v1148
        %v1442 = vunpack.c.h.b16 %v1148
        %v1443 = vunpack.c.l.b16 %v1149
        %v1444 = vunpack.c.h.b16 %v1149
        %v1445 = vunpack.c.l.b16 %v1150
        %v1446 = vunpack.c.h.b16 %v1150
        %v1447 = vunpack.c.l.b16 %v1151
        %v1448 = vunpack.c.h.b16 %v1151
        %v1449 = vunpack.c.l.b16 %v1152
        %v1450 = vunpack.c.h.b16 %v1152
        %v1451 = vunpack.c.l.b16 %v1153
        %v1452 = vunpack.c.h.b16 %v1153
        %v1453 = vunpack.c.l.b16 %v1154
        %v1454 = vunpack.c.h.b16 %v1154
        %v1455 = vunpack.c.l.b16 %v1155
        %v1456 = vunpack.c.h.b16 %v1155
        %v1457 = vunpack.c.l.b16 %v1156
        %v1458 = vunpack.c.h.b16 %v1156
        %v1459 = vunpack.c.l.b16 %v1157
        %v1460 = vunpack.c.h.b16 %v1157
        %v1461 = vunpack.c.l.b16 %v1158
        %v1462 = vunpack.c.h.b16 %v1158
        %v1463 = vunpack.c.l.b16 %v1159
        %v1464 = vunpack.c.h.b16 %v1159
        %v1465 = vunpack.c.l.b16 %v1160
        %v1466 = vunpack.c.h.b16 %v1160
        %v1467 = vunpack.c.l.b16 %v1161
        %v1468 = vunpack.c.h.b16 %v1161
        %v1469 = vunpack.c.l.b16 %v1162
        %v1470 = vunpack.c.h.b16 %v1162
        %v1471 = vunpack.c.l.b16 %v1163
        %v1472 = vunpack.c.h.b16 %v1163
        %v1473 = vunpack.c.l.b16 %v1164
        %v1474 = vunpack.c.h.b16 %v1164
        %v1475 = vunpack.c.l.b16 %v1165
        %v1476 = vunpack.c.h.b16 %v1165
        %v1477 = vunpack.c.l.b16 %v1166
        %v1478 = vunpack.c.h.b16 %v1166
        %v1479 = vunpack.c.l.b16 %v1167
        %v1480 = vunpack.c.h.b16 %v1167
        %v1481 = vunpack.c.l.b16 %v1168
        %v1482 = vunpack.c.h.b16 %v1168
        %v1483 = vunpack.c.l.b16 %v1169
        %v1484 = vunpack.c.h.b16 %v1169
        %v1485 = vunpack.c.l.b16 %v1170
        %v1486 = vunpack.c.h.b16 %v1170
        %v1487 = vunpack.c.l.b16 %v1171
        %v1488 = vunpack.c.h.b16 %v1171
        %v1489 = vunpack.c.l.b16 %v1172
        %v1490 = vunpack.c.h.b16 %v1172
        %v1491 = vunpack.c.l.b16 %v1173
        %v1492 = vunpack.c.h.b16 %v1173
        %v1493 = vunpack.c.l.b16 %v1174
        %v1494 = vunpack.c.h.b16 %v1174
        %v1495 = vpack.c.b16 %v1309, %v1303
        %v1496 = vpack.c.b16 %v1310, %v1304
        %v1497 = vpack.c.b16 %v1311, %v1305
        %v1498 = vpack.c.b16 %v1312, %v1306
        %v1499 = vpack.c.b16 %v1313, %v1307
        %v1500 = vpack.c.b16 %v1314, %v1308
        %v1501 = vpack.c.b16 %v1321, %v1315
        %v1502 = vpack.c.b16 %v1322, %v1316
        %v1503 = vpack.c.b16 %v1323, %v1317
        %v1504 = vpack.c.b16 %v1324, %v1318
        %v1505 = vpack.c.b16 %v1325, %v1319
        %v1506 = vpack.c.b16 %v1326, %v1320
        %v1507 = vpack.c.b16 %v1333, %v1327
        %v1508 = vpack.c.b16 %v1334, %v1328
        %v1509 = vpack.c.b16 %v1335, %v1329
        %v1510 = vpack.c.b16 %v1336, %v1330
        %v1511 = vpack.c.b16 %v1337, %v1331
        %v1512 = vpack.c.b16 %v1338, %v1332
        %v1513 = vpack.c.b16 %v1345, %v1339
        %v1514 = vpack.c.b16 %v1346, %v1340
        %v1515 = vpack.c.b16 %v1347, %v1341
        %v1516 = vpack.c.b16 %v1348, %v1342
        %v1517 = vpack.c.b16 %v1349, %v1343
        %v1518 = vpack.c.b16 %v1350, %v1344
        %v1519 = vpack.c.b16 %v1357, %v1351
        %v1520 = vpack.c.b16 %v1358, %v1352
        %v1521 = vpack.c.b16 %v1359, %v1353
        %v1522 = vpack.c.b16 %v1360, %v1354
        %v1523 = vpack.c.b16 %v1361, %v1355
        %v1524 = vpack.c.b16 %v1362, %v1356
        %v1525 = vpack.c.b16 %v1369, %v1363
        %v1526 = vpack.c.b16 %v1370, %v1364
        %v1527 = vpack.c.b16 %v1371, %v1365
        %v1528 = vpack.c.b16 %v1372, %v1366
        %v1529 = vpack.c.b16 %v1373, %v1367
        %v1530 = vpack.c.b16 %v1374, %v1368
        %v1531 = vpack.c.b16 %v1381, %v1375
        %v1532 = vpack.c.b16 %v1382, %v1376
        %v1533 = vpack.c.b16 %v1383, %v1377
        %v1534 = vpack.c.b16 %v1384, %v1378
        %v1535 = vpack.c.b16 %v1385, %v1379
        %v1536 = vpack.c.b16 %v1386, %v1380
        %v1537 = vpack.c.b16 %v1393, %v1387
        %v1538 = vpack.c.b16 %v1394, %v1388
        %v1539 = vpack.c.b16 %v1395, %v1389
        %v1540 = vpack.c.b16 %v1396, %v1390
        %v1541 = vpack.c.b16 %v1397, %v1391
        %v1542 = vpack.c.b16 %v1398, %v1392
        %v1543 = vpack.c.b16 %v1405, %v1399
        %v1544 = vpack.c.b16 %v1406, %v1400
        %v1545 = vpack.c.b16 %v1407, %v1401
        %v1546 = vpack.c.b16 %v1408, %v1402
        %v1547 = vpack.c.b16 %v1409, %v1403
        %v1548 = vpack.c.b16 %v1410, %v1404
        %v1549 = vpack.c.b16 %v1417, %v1411
        %v1550 = vpack.c.b16 %v1418, %v1412
        %v1551 = vpack.c.b16 %v1419, %v1413
        %v1552 = vpack.c.b16 %v1420, %v1414
        %v1553 = vpack.c.b16 %v1421, %v1415
        %v1554 = vpack.c.b16 %v1422, %v1416
        %v1555 = vpack.c.b16 %v1429, %v1423
        %v1556 = vpack.c.b16 %v1430, %v1424
        %v1557 = vpack.c.b16 %v1431, %v1425
        %v1558 = vpack.c.b16 %v1432, %v1426
        %v1559 = vpack.c.b16 %v1433, %v1427
        %v1560 = vpack.c.b16 %v1434, %v1428
        %v1561 = vpack.c.b16 %v1441, %v1435
        %v1562 = vpack.c.b16 %v1442, %v1436
        %v1563 = vpack.c.b16 %v1443, %v1437
        %v1564 = vpack.c.b16 %v1444, %v1438
        %v1565 = vpack.c.b16 %v1445, %v1439
        %v1566 = vpack.c.b16 %v1446, %v1440
        %v1567 = vpack.c.b16 %v1453, %v1447
        %v1568 = vpack.c.b16 %v1454, %v1448
        %v1569 = vpack.c.b16 %v1455, %v1449
        %v1570 = vpack.c.b16 %v1456, %v1450
        %v1571 = vpack.c.b16 %v1457, %v1451
        %v1572 = vpack.c.b16 %v1458, %v1452
        %v1573 = vpack.c.b16 %v1465, %v1459
        %v1574 = vpack.c.b16 %v1466, %v1460
        %v1575 = vpack.c.b16 %v1467, %v1461
        %v1576 = vpack.c.b16 %v1468, %v1462
        %v1577 = vpack.c.b16 %v1469, %v1463
        %v1578 = vpack.c.b16 %v1470, %v1464
        %v1579 = vpack.c.b16 %v1477, %v1471
        %v1580 = vpack.c.b16 %v1478, %v1472
        %v1581 = vpack.c.b16 %v1479, %v1473
        %v1582 = vpack.c.b16 %v1480, %v1474
        %v1583 = vpack.c.b16 %v1481, %v1475
        %v1584 = vpack.c.b16 %v1482, %v1476
        %v1585 = vpack.c.b16 %v1489, %v1483
        %v1586 = vpack.c.b16 %v1490, %v1484
        %v1587 = vpack.c.b16 %v1491, %v1485
        %v1588 = vpack.c.b16 %v1492, %v1486
        %v1589 = vpack.c.b16 %v1493, %v1487
        %v1590 = vpack.c.b16 %v1494, %v1488
        %1687 = vmatprep.subr.bf16.mxu0 %v1496
        %1688 = vmatpush1.bf16.msra.mxu0 %v1495
        %1689 = vmatprep.subr.bf16.mxu0 %v1502
        %1690 = vmatpush1.bf16.msra.mxu0 %v1501
        %1691 = vmatprep.subr.bf16.mxu0 %v1508
        %1692 = vmatpush1.bf16.msra.mxu0 %v1507
        %1693 = vmatprep.subr.bf16.mxu0 %v1514
        %1694 = vmatpush1.bf16.msra.mxu0 %v1513
        %1695 = vmatprep.subr.bf16.mxu0 %v1520
        %1696 = vmatpush1.bf16.msra.mxu0 %v1519
        %1697 = vmatprep.subr.bf16.mxu0 %v1526
        %1698 = vmatpush1.bf16.msra.mxu0 %v1525
        %1699 = vmatprep.subr.bf16.mxu0 %v1532
        %1700 = vmatpush1.bf16.msra.mxu0 %v1531
        %1701 = vmatprep.subr.bf16.mxu0 %v1538
        %1702 = vmatpush1.bf16.msra.mxu0 %v1537
        %1703 = vmatprep.subr.bf16.mxu0 %v1544
        %1704 = vmatpush1.bf16.msra.mxu0 %v1543
        %1705 = vmatprep.subr.bf16.mxu0 %v1550
        %1706 = vmatpush1.bf16.msra.mxu0 %v1549
        %1707 = vmatprep.subr.bf16.mxu0 %v1556
        %1708 = vmatpush1.bf16.msra.mxu0 %v1555
        %1709 = vmatprep.subr.bf16.mxu0 %v1562
        %1710 = vmatpush1.bf16.msra.mxu0 %v1561
        %1711 = vmatprep.subr.bf16.mxu0 %v1568
        %1712 = vmatpush1.bf16.msra.mxu0 %v1567
        %1713 = vmatprep.subr.bf16.mxu0 %v1574
        %1714 = vmatpush1.bf16.msra.mxu0 %v1573
        %1715 = vmatprep.subr.bf16.mxu0 %v1580
        %1716 = vmatpush1.bf16.msra.mxu0 %v1579
        %1717 = vmatprep.subr.bf16.mxu0 %v1586
        %1718 = vmatpush1.bf16.msra.mxu0 %v1585
        %1719 = vmatprep.mubr.bf16.mxu0 %v1076
        %1720 = vmatmul.mubr.bf16.gmra.mrb[0].mxu0 %v1075
        %v1721 = vpop.f32.mrb[0].mxu0
        %v1722 = vadd.f32 %v1180, %v1721
        %v1723 = vpop.f32.mrb[0].mxu0
        %v1724 = vadd.f32 %v1184, %v1723
        %v1725 = vpop.f32.mrb[0].mxu0
        %v1726 = vadd.f32 %v1180, %v1725
        %v1727 = vpop.f32.mrb[0].mxu0
        %v1728 = vadd.f32 %v1184, %v1727
        %1729 = vmatprep.mubr.bf16.mxu0 %v1078
        %1730 = vmatmul.mubr.bf16.gmra.mrb[0].mxu0 %v1077
        %v1731 = vpop.f32.mrb[0].mxu0
        %v1732 = vadd.f32 %v1180, %v1731
        %v1733 = vpop.f32.mrb[0].mxu0
        %v1734 = vadd.f32 %v1184, %v1733
        %v1735 = vpop.f32.mrb[0].mxu0
        %v1736 = vadd.f32 %v1180, %v1735
        %v1737 = vpop.f32.mrb[0].mxu0
        %v1738 = vadd.f32 %v1184, %v1737
        %1739 = vdwg.mxu0
        %1740 = vmatprep.subr.bf16.mxu0 %v1498
        %1741 = vmatpush1.bf16.msra.mxu0 %v1497
        %1742 = vmatprep.subr.bf16.mxu0 %v1504
        %1743 = vmatpush1.bf16.msra.mxu0 %v1503
        %1744 = vmatprep.subr.bf16.mxu0 %v1510
        %1745 = vmatpush1.bf16.msra.mxu0 %v1509
        %1746 = vmatprep.subr.bf16.mxu0 %v1516
        %1747 = vmatpush1.bf16.msra.mxu0 %v1515
        %1748 = vmatprep.subr.bf16.mxu0 %v1522
        %1749 = vmatpush1.bf16.msra.mxu0 %v1521
        %1750 = vmatprep.subr.bf16.mxu0 %v1528
        %1751 = vmatpush1.bf16.msra.mxu0 %v1527
        %1752 = vmatprep.subr.bf16.mxu0 %v1534
        %1753 = vmatpush1.bf16.msra.mxu0 %v1533
        %1754 = vmatprep.subr.bf16.mxu0 %v1540
        %1755 = vmatpush1.bf16.msra.mxu0 %v1539
        %1756 = vmatprep.subr.bf16.mxu0 %v1546
        %1757 = vmatpush1.bf16.msra.mxu0 %v1545
        %1758 = vmatprep.subr.bf16.mxu0 %v1552
        %1759 = vmatpush1.bf16.msra.mxu0 %v1551
        %1760 = vmatprep.subr.bf16.mxu0 %v1558
        %1761 = vmatpush1.bf16.msra.mxu0 %v1557
        %1762 = vmatprep.subr.bf16.mxu0 %v1564
        %1763 = vmatpush1.bf16.msra.mxu0 %v1563
        %1764 = vmatprep.subr.bf16.mxu0 %v1570
        %1765 = vmatpush1.bf16.msra.mxu0 %v1569
        %1766 = vmatprep.subr.bf16.mxu0 %v1576
        %1767 = vmatpush1.bf16.msra.mxu0 %v1575
        %1768 = vmatprep.subr.bf16.mxu0 %v1582
        %1769 = vmatpush1.bf16.msra.mxu0 %v1581
        %1770 = vmatprep.subr.bf16.mxu0 %v1588
        %1771 = vmatpush1.bf16.msra.mxu0 %v1587
        %1772 = vmatprep.mubr.bf16.mxu0 %v1076
        %1773 = vmatmul.mubr.bf16.gmra.mrb[0].mxu0 %v1075
        %v1774 = vpop.f32.mrb[0].mxu0
        %v1775 = vadd.f32 %v1188, %v1774
        %v1776 = vpop.f32.mrb[0].mxu0
        %v1777 = vadd.f32 %v1192, %v1776
        %v1778 = vpop.f32.mrb[0].mxu0
        %v1779 = vadd.f32 %v1188, %v1778
        %v1780 = vpop.f32.mrb[0].mxu0
        %v1781 = vadd.f32 %v1192, %v1780
        %1782 = vmatprep.mubr.bf16.mxu0 %v1078
        %1783 = vmatmul.mubr.bf16.gmra.mrb[0].mxu0 %v1077
        %v1784 = vpop.f32.mrb[0].mxu0
        %v1785 = vadd.f32 %v1188, %v1784
        %v1786 = vpop.f32.mrb[0].mxu0
        %v1787 = vadd.f32 %v1192, %v1786
        %v1788 = vpop.f32.mrb[0].mxu0
        %v1789 = vadd.f32 %v1188, %v1788
        %v1790 = vpop.f32.mrb[0].mxu0
        %v1791 = vadd.f32 %v1192, %v1790
        %1792 = vdwg.mxu0
        %1793 = vmatprep.subr.bf16.mxu0 %v1500
        %1794 = vmatpush1.bf16.msra.mxu0 %v1499
        %1795 = vmatprep.subr.bf16.mxu0 %v1506
        %1796 = vmatpush1.bf16.msra.mxu0 %v1505
        %1797 = vmatprep.subr.bf16.mxu0 %v1512
        %1798 = vmatpush1.bf16.msra.mxu0 %v1511
        %1799 = vmatprep.subr.bf16.mxu0 %v1518
        %1800 = vmatpush1.bf16.msra.mxu0 %v1517
        %1801 = vmatprep.subr.bf16.mxu0 %v1524
        %1802 = vmatpush1.bf16.msra.mxu0 %v1523
        %1803 = vmatprep.subr.bf16.mxu0 %v1530
        %1804 = vmatpush1.bf16.msra.mxu0 %v1529
        %1805 = vmatprep.subr.bf16.mxu0 %v1536
        %1806 = vmatpush1.bf16.msra.mxu0 %v1535
        %1807 = vmatprep.subr.bf16.mxu0 %v1542
        %1808 = vmatpush1.bf16.msra.mxu0 %v1541
        %1809 = vmatprep.subr.bf16.mxu0 %v1548
        %1810 = vmatpush1.bf16.msra.mxu0 %v1547
        %1811 = vmatprep.subr.bf16.mxu0 %v1554
        %1812 = vmatpush1.bf16.msra.mxu0 %v1553
        %1813 = vmatprep.subr.bf16.mxu0 %v1560
        %1814 = vmatpush1.bf16.msra.mxu0 %v1559
        %1815 = vmatprep.subr.bf16.mxu0 %v1566
        %1816 = vmatpush1.bf16.msra.mxu0 %v1565
        %1817 = vmatprep.subr.bf16.mxu0 %v1572
        %1818 = vmatpush1.bf16.msra.mxu0 %v1571
        %1819 = vmatprep.subr.bf16.mxu0 %v1578
        %1820 = vmatpush1.bf16.msra.mxu0 %v1577
        %1821 = vmatprep.subr.bf16.mxu0 %v1584
        %1822 = vmatpush1.bf16.msra.mxu0 %v1583
        %1823 = vmatprep.subr.bf16.mxu0 %v1590
        %1824 = vmatpush1.bf16.msra.mxu0 %v1589
        %1825 = vmatprep.mubr.bf16.mxu0 %v1076
        %1826 = vmatmul.mubr.bf16.gmra.mrb[0].mxu0 %v1075
        %v1827 = vpop.f32.mrb[0].mxu0
        %v1828 = vadd.f32 %v1196, %v1827
        %v1829 = vpop.f32.mrb[0].mxu0
        %v1830 = vadd.f32 %v1200, %v1829
        %v1831 = vpop.f32.mrb[0].mxu0
        %v1832 = vadd.f32 %v1196, %v1831
        %v1833 = vpop.f32.mrb[0].mxu0
        %v1834 = vadd.f32 %v1200, %v1833
        %1835 = vmatprep.mubr.bf16.mxu0 %v1078
        %1836 = vmatmul.mubr.bf16.gmra.mrb[0].mxu0 %v1077
        %v1837 = vpop.f32.mrb[0].mxu0
        %v1838 = vadd.f32 %v1196, %v1837
        %v1839 = vpop.f32.mrb[0].mxu0
        %v1840 = vadd.f32 %v1200, %v1839
        %v1841 = vpop.f32.mrb[0].mxu0
        %v1842 = vadd.f32 %v1196, %v1841
        %v1843 = vpop.f32.mrb[0].mxu0
        %v1844 = vadd.f32 %v1200, %v1843
        %1845 = vdwg.mxu0
        %v1846 = vld [vmem:[%s1] sm:$0x3]
        %v1847 = vpack.c.bf16 %v1726, %v1722
        %v1848 = vpack.c.bf16 %v1779, %v1775
        %v1849 = vpack.c.bf16 %v1832, %v1828
        %vm1850 = vcmask 523264
        %v1852 = vsel %vm1850, %v1847, 0
        %v1855 = vsel %vm1850, %v1848, 0
        %1857 = vmatprep.subr.bf16.mxu0 0
        %1858 = vmatpush1.bf16.xpose.msra.mxu0 %v1855
        %1859 = vmatprep.subr.bf16.mxu0 0
        %1860 = vmatpush1.bf16.xpose.msra.mxu0 0
        %1861 = vmatprep.subr.bf16.mxu0 0
        %1862 = vmatpush1.bf16.xpose.msra.mxu0 0
        %1863 = vmatprep.subr.bf16.mxu0 0
        %1864 = vmatpush1.bf16.xpose.msra.mxu0 0
        %1865 = vmatprep.subr.bf16.mxu0 0
        %1866 = vmatpush1.bf16.xpose.msra.mxu0 0
        %1867 = vmatprep.subr.bf16.mxu0 0
        %1868 = vmatpush1.bf16.xpose.msra.mxu0 0
        %1869 = vmatprep.subr.bf16.mxu0 0
        %1870 = vmatpush1.bf16.xpose.msra.mxu0 0
        %1871 = vmatprep.subr.bf16.mxu0 0
        %1872 = vmatpush1.bf16.xpose.msra.mxu0 0
        %1873 = vmatprep.subr.bf16.mxu0 0
        %1874 = vmatpush1.bf16.xpose.msra.mxu0 0
        %1875 = vmatprep.subr.bf16.mxu0 0
        %1876 = vmatpush1.bf16.xpose.msra.mxu0 0
        %1877 = vmatprep.subr.bf16.mxu0 0
        %1878 = vmatpush1.bf16.xpose.msra.mxu0 0
        %1879 = vmatprep.subr.bf16.mxu0 0
        %1880 = vmatpush1.bf16.xpose.msra.mxu0 0
        %1881 = vmatprep.subr.bf16.mxu0 0
        %1882 = vmatpush1.bf16.xpose.msra.mxu0 0
        %1883 = vmatprep.subr.bf16.mxu0 0
        %1884 = vmatpush1.bf16.xpose.msra.mxu0 0
        %1885 = vmatprep.subr.bf16.mxu0 0
        %1886 = vmatpush1.bf16.xpose.msra.mxu0 0
        %1887 = vmatprep.subr.bf16.mxu0 0
        %1888 = vmatpush1.bf16.xpose.msra.mxu0 0
        %1889 = vmatprep.mubr.bf16.mxu0 0
        %1890 = vmatmul.mubr.bf16.gmra.mrb[0].mxu0 %v1852
        %v1891 = vpop.f32.mrb[0].mxu0
        %v1892 = vadd.f32 0.0, %v1891
        %v1893 = vpop.f32.mrb[0].mxu0
        %v1894 = vpop.f32.mrb[0].mxu0
        %v1895 = vadd.f32 0.0, %v1894
        %v1896 = vpop.f32.mrb[0].mxu0
        %1897 = vdwg.mxu0
        %v1898 = vmul.f32 %v1892, 0.125
        %v1899 = vmul.f32 %v1895, 0.125
        %v1900 = vlaneseq
        %v1901 = vshrl.u32 %v1900, 7
        %v1902 = vsub.s32 0, %v1901
        %v1903 = vrot.slane %v1846, %v1902
        %v1904 = vadd.f32 %v1898, %v1903
        %v1905 = vadd.f32 %v1899, %v1903
        %vm1906 = vcmask 130048
        %v1907 = vsel %vm1906, %v1904, -inf
        %1908 = vmax.xlane.f32.xlu0 %v1907
        %v1909 = vpop.xlane.xlu0 %1908
        %v1910 = vsel %vm1906, %v1905, -inf
        %1911 = vmax.xlane.f32.xlu0 %v1910
        %v1912 = vpop.xlane.xlu0 %1911
        %v1913 = vsub.f32 %v1904, %v1909
        %v1914 = vsub.f32 %v1905, %v1912
        %v1915 = vmul.f32 %v1913, 1.442695
        %v1916 = vpow.pop %v1915
        %v1917 = vmul.f32 %v1914, 1.442695
        %v1918 = vpow.pop %v1917
        %v1919 = vsel %vm1906, %v1916, 0.0
        %1920 = vadd.xlane.f32.xlu0 %v1919
        %v1921 = vpop.xlane.xlu0 %1920
        %v1922 = vsel %vm1906, %v1918, 0.0
        %1923 = vadd.xlane.f32.xlu0 %v1922
        %v1924 = vpop.xlane.xlu0 %1923
        %v1925 = vrcp.pop %v1921
        %v1926 = vmul.f32 %v1916, %v1925
        %v1927 = vrcp.pop %v1924
        %v1928 = vmul.f32 %v1918, %v1927
        %v1929 = vpack.c.bf16 %v1928, %v1926
        %v1931 = vsel %vm1906, %v1929, 0
        %1933 = vmatprep.subr.bf16.mxu0 0
        %1934 = vmatpush1.bf16.msra.mxu0 %v1849
        %1935 = vmatprep.subr.bf16.mxu0 0
        %1936 = vmatpush1.bf16.msra.mxu0 0
        %1937 = vmatprep.subr.bf16.mxu0 0
        %1938 = vmatpush1.bf16.msra.mxu0 0
        %1939 = vmatprep.subr.bf16.mxu0 0
        %1940 = vmatpush1.bf16.msra.mxu0 0
        %1941 = vmatprep.subr.bf16.mxu0 0
        %1942 = vmatpush1.bf16.msra.mxu0 0
        %1943 = vmatprep.subr.bf16.mxu0 0
        %1944 = vmatpush1.bf16.msra.mxu0 0
        %1945 = vmatprep.subr.bf16.mxu0 0
        %1946 = vmatpush1.bf16.msra.mxu0 0
        %1947 = vmatprep.subr.bf16.mxu0 0
        %1948 = vmatpush1.bf16.msra.mxu0 0
        %1949 = vmatprep.subr.bf16.mxu0 0
        %1950 = vmatpush1.bf16.msra.mxu0 0
        %1951 = vmatprep.subr.bf16.mxu0 0
        %1952 = vmatpush1.bf16.msra.mxu0 0
        %1953 = vmatprep.subr.bf16.mxu0 0
        %1954 = vmatpush1.bf16.msra.mxu0 0
        %1955 = vmatprep.subr.bf16.mxu0 0
        %1956 = vmatpush1.bf16.msra.mxu0 0
        %1957 = vmatprep.subr.bf16.mxu0 0
        %1958 = vmatpush1.bf16.msra.mxu0 0
        %1959 = vmatprep.subr.bf16.mxu0 0
        %1960 = vmatpush1.bf16.msra.mxu0 0
        %1961 = vmatprep.subr.bf16.mxu0 0
        %1962 = vmatpush1.bf16.msra.mxu0 0
        %1963 = vmatprep.subr.bf16.mxu0 0
        %1964 = vmatpush1.bf16.msra.mxu0 0
        %1965 = vmatprep.mubr.bf16.mxu0 0
        %1966 = vmatmul.mubr.bf16.gmra.mrb[0].mxu0 %v1931
        %v1967 = vpop.f32.mrb[0].mxu0
        %v1968 = vadd.f32 0.0, %v1967
        %v1969 = vpop.f32.mrb[0].mxu0
        %v1970 = vpop.f32.mrb[0].mxu0
        %v1971 = vadd.f32 0.0, %v1970
        %v1972 = vpop.f32.mrb[0].mxu0
        %1973 = vdwg.mxu0
        %1975 = vrot.lane.b32.xlu0 %v1847, 64
        %v1976 = vpop.permute.xlu0 %1975
        %1978 = vrot.lane.b32.xlu0 %v1848, 64
        %v1979 = vpop.permute.xlu0 %1978
        %v1981 = vsel %vm1850, %v1976, 0
        %v1984 = vsel %vm1850, %v1979, 0
        %1986 = vmatprep.subr.bf16.mxu0 0
        %1987 = vmatpush1.bf16.xpose.msra.mxu0 %v1984
        %1988 = vmatprep.subr.bf16.mxu0 0
        %1989 = vmatpush1.bf16.xpose.msra.mxu0 0
        %1990 = vmatprep.subr.bf16.mxu0 0
        %1991 = vmatpush1.bf16.xpose.msra.mxu0 0
        %1992 = vmatprep.subr.bf16.mxu0 0
        %1993 = vmatpush1.bf16.xpose.msra.mxu0 0
        %1994 = vmatprep.subr.bf16.mxu0 0
        %1995 = vmatpush1.bf16.xpose.msra.mxu0 0
        %1996 = vmatprep.subr.bf16.mxu0 0
        %1997 = vmatpush1.bf16.xpose.msra.mxu0 0
        %1998 = vmatprep.subr.bf16.mxu0 0
        %1999 = vmatpush1.bf16.xpose.msra.mxu0 0
        %2000 = vmatprep.subr.bf16.mxu0 0
        %2001 = vmatpush1.bf16.xpose.msra.mxu0 0
        %2002 = vmatprep.subr.bf16.mxu0 0
        %2003 = vmatpush1.bf16.xpose.msra.mxu0 0
        %2004 = vmatprep.subr.bf16.mxu0 0
        %2005 = vmatpush1.bf16.xpose.msra.mxu0 0
        %2006 = vmatprep.subr.bf16.mxu0 0
        %2007 = vmatpush1.bf16.xpose.msra.mxu0 0
        %2008 = vmatprep.subr.bf16.mxu0 0
        %2009 = vmatpush1.bf16.xpose.msra.mxu0 0
        %2010 = vmatprep.subr.bf16.mxu0 0
        %2011 = vmatpush1.bf16.xpose.msra.mxu0 0
        %2012 = vmatprep.subr.bf16.mxu0 0
        %2013 = vmatpush1.bf16.xpose.msra.mxu0 0
        %2014 = vmatprep.subr.bf16.mxu0 0
        %2015 = vmatpush1.bf16.xpose.msra.mxu0 0
        %2016 = vmatprep.subr.bf16.mxu0 0
        %2017 = vmatpush1.bf16.xpose.msra.mxu0 0
        %2018 = vmatprep.mubr.bf16.mxu0 0
        %2019 = vmatmul.mubr.bf16.gmra.mrb[0].mxu0 %v1981
        %v2020 = vpop.f32.mrb[0].mxu0
        %v2021 = vadd.f32 0.0, %v2020
        %v2022 = vpop.f32.mrb[0].mxu0
        %v2023 = vpop.f32.mrb[0].mxu0
        %v2024 = vadd.f32 0.0, %v2023
        %v2025 = vpop.f32.mrb[0].mxu0
        %2026 = vdwg.mxu0
        %v2027 = vmul.f32 %v2021, 0.125
        %v2028 = vmul.f32 %v2024, 0.125
        %v2029 = vadd.f32 %v2027, %v1903
        %v2030 = vadd.f32 %v2028, %v1903
        %v2031 = vsel %vm1906, %v2029, -inf
        %2032 = vmax.xlane.f32.xlu0 %v2031
        %v2033 = vpop.xlane.xlu0 %2032
        %v2034 = vsel %vm1906, %v2030, -inf
        %2035 = vmax.xlane.f32.xlu0 %v2034
        %v2036 = vpop.xlane.xlu0 %2035
        %v2037 = vsub.f32 %v2029, %v2033
        %v2038 = vsub.f32 %v2030, %v2036
        %v2039 = vmul.f32 %v2037, 1.442695
        %v2040 = vpow.pop %v2039
        %v2041 = vmul.f32 %v2038, 1.442695
        %v2042 = vpow.pop %v2041
        %v2043 = vsel %vm1906, %v2040, 0.0
        %2044 = vadd.xlane.f32.xlu0 %v2043
        %v2045 = vpop.xlane.xlu0 %2044
        %v2046 = vsel %vm1906, %v2042, 0.0
        %2047 = vadd.xlane.f32.xlu0 %v2046
        %v2048 = vpop.xlane.xlu0 %2047
        %v2049 = vrcp.pop %v2045
        %v2050 = vmul.f32 %v2040, %v2049
        %v2051 = vrcp.pop %v2048
        %v2052 = vmul.f32 %v2042, %v2051
        %v2053 = vpack.c.bf16 %v2052, %v2050
        %2055 = vrot.lane.b32.xlu0 %v1849, 64
        %v2056 = vpop.permute.xlu0 %2055
        %v2059 = vsel %vm1906, %v2053, 0
        %2061 = vmatprep.subr.bf16.mxu0 0
        %2062 = vmatpush1.bf16.msra.mxu0 %v2056
        %2063 = vmatprep.subr.bf16.mxu0 0
        %2064 = vmatpush1.bf16.msra.mxu0 0
        %2065 = vmatprep.subr.bf16.mxu0 0
        %2066 = vmatpush1.bf16.msra.mxu0 0
        %2067 = vmatprep.subr.bf16.mxu0 0
        %2068 = vmatpush1.bf16.msra.mxu0 0
        %2069 = vmatprep.subr.bf16.mxu0 0
        %2070 = vmatpush1.bf16.msra.mxu0 0
        %2071 = vmatprep.subr.bf16.mxu0 0
        %2072 = vmatpush1.bf16.msra.mxu0 0
        %2073 = vmatprep.subr.bf16.mxu0 0
        %2074 = vmatpush1.bf16.msra.mxu0 0
        %2075 = vmatprep.subr.bf16.mxu0 0
        %2076 = vmatpush1.bf16.msra.mxu0 0
        %2077 = vmatprep.subr.bf16.mxu0 0
        %2078 = vmatpush1.bf16.msra.mxu0 0
        %2079 = vmatprep.subr.bf16.mxu0 0
        %2080 = vmatpush1.bf16.msra.mxu0 0
        %2081 = vmatprep.subr.bf16.mxu0 0
        %2082 = vmatpush1.bf16.msra.mxu0 0
        %2083 = vmatprep.subr.bf16.mxu0 0
        %2084 = vmatpush1.bf16.msra.mxu0 0
        %2085 = vmatprep.subr.bf16.mxu0 0
        %2086 = vmatpush1.bf16.msra.mxu0 0
        %2087 = vmatprep.subr.bf16.mxu0 0
        %2088 = vmatpush1.bf16.msra.mxu0 0
        %2089 = vmatprep.subr.bf16.mxu0 0
        %2090 = vmatpush1.bf16.msra.mxu0 0
        %2091 = vmatprep.subr.bf16.mxu0 0
        %2092 = vmatpush1.bf16.msra.mxu0 0
        %2093 = vmatprep.mubr.bf16.mxu0 0
        %2094 = vmatmul.mubr.bf16.gmra.mrb[0].mxu0 %v2059
        %v2095 = vpop.f32.mrb[0].mxu0
        %v2096 = vadd.f32 0.0, %v2095
        %v2097 = vpop.f32.mrb[0].mxu0
        %v2098 = vpop.f32.mrb[0].mxu0
        %v2099 = vadd.f32 0.0, %v2098
        %v2100 = vpop.f32.mrb[0].mxu0
        %2101 = vdwg.mxu0
        %v2102 = vpack.c.bf16 %v1728, %v1724
        %v2103 = vpack.c.bf16 %v1781, %v1777
        %v2104 = vpack.c.bf16 %v1834, %v1830
        %v2106 = vsel %vm1850, %v2102, 0
        %v2109 = vsel %vm1850, %v2103, 0
        %2111 = vmatprep.subr.bf16.mxu0 0
        %2112 = vmatpush1.bf16.xpose.msra.mxu0 %v2109
        %2113 = vmatprep.subr.bf16.mxu0 0
        %2114 = vmatpush1.bf16.xpose.msra.mxu0 0
        %2115 = vmatprep.subr.bf16.mxu0 0
        %2116 = vmatpush1.bf16.xpose.msra.mxu0 0
        %2117 = vmatprep.subr.bf16.mxu0 0
        %2118 = vmatpush1.bf16.xpose.msra.mxu0 0
        %2119 = vmatprep.subr.bf16.mxu0 0
        %2120 = vmatpush1.bf16.xpose.msra.mxu0 0
        %2121 = vmatprep.subr.bf16.mxu0 0
        %2122 = vmatpush1.bf16.xpose.msra.mxu0 0
        %2123 = vmatprep.subr.bf16.mxu0 0
        %2124 = vmatpush1.bf16.xpose.msra.mxu0 0
        %2125 = vmatprep.subr.bf16.mxu0 0
        %2126 = vmatpush1.bf16.xpose.msra.mxu0 0
        %2127 = vmatprep.subr.bf16.mxu0 0
        %2128 = vmatpush1.bf16.xpose.msra.mxu0 0
        %2129 = vmatprep.subr.bf16.mxu0 0
        %2130 = vmatpush1.bf16.xpose.msra.mxu0 0
        %2131 = vmatprep.subr.bf16.mxu0 0
        %2132 = vmatpush1.bf16.xpose.msra.mxu0 0
        %2133 = vmatprep.subr.bf16.mxu0 0
        %2134 = vmatpush1.bf16.xpose.msra.mxu0 0
        %2135 = vmatprep.subr.bf16.mxu0 0
        %2136 = vmatpush1.bf16.xpose.msra.mxu0 0
        %2137 = vmatprep.subr.bf16.mxu0 0
        %2138 = vmatpush1.bf16.xpose.msra.mxu0 0
        %2139 = vmatprep.subr.bf16.mxu0 0
        %2140 = vmatpush1.bf16.xpose.msra.mxu0 0
        %2141 = vmatprep.subr.bf16.mxu0 0
        %2142 = vmatpush1.bf16.xpose.msra.mxu0 0
        %2143 = vmatprep.mubr.bf16.mxu0 0
        %2144 = vmatmul.mubr.bf16.gmra.mrb[0].mxu0 %v2106
        %v2145 = vpop.f32.mrb[0].mxu0
        %v2146 = vadd.f32 0.0, %v2145
        %v2147 = vpop.f32.mrb[0].mxu0
        %v2148 = vpop.f32.mrb[0].mxu0
        %v2149 = vadd.f32 0.0, %v2148
        %v2150 = vpop.f32.mrb[0].mxu0
        %2151 = vdwg.mxu0
        %v2152 = vmul.f32 %v2146, 0.125
        %v2153 = vmul.f32 %v2149, 0.125
        %v2154 = vadd.f32 %v2152, %v1903
        %v2155 = vadd.f32 %v2153, %v1903
        %v2156 = vsel %vm1906, %v2154, -inf
        %2157 = vmax.xlane.f32.xlu0 %v2156
        %v2158 = vpop.xlane.xlu0 %2157
        %v2159 = vsel %vm1906, %v2155, -inf
        %2160 = vmax.xlane.f32.xlu0 %v2159
        %v2161 = vpop.xlane.xlu0 %2160
        %v2162 = vsub.f32 %v2154, %v2158
        %v2163 = vsub.f32 %v2155, %v2161
        %v2164 = vmul.f32 %v2162, 1.442695
        %v2165 = vpow.pop %v2164
        %v2166 = vmul.f32 %v2163, 1.442695
        %v2167 = vpow.pop %v2166
        %v2168 = vsel %vm1906, %v2165, 0.0
        %2169 = vadd.xlane.f32.xlu0 %v2168
        %v2170 = vpop.xlane.xlu0 %2169
        %v2171 = vsel %vm1906, %v2167, 0.0
        %2172 = vadd.xlane.f32.xlu0 %v2171
        %v2173 = vpop.xlane.xlu0 %2172
        %v2174 = vrcp.pop %v2170
        %v2175 = vmul.f32 %v2165, %v2174
        %v2176 = vrcp.pop %v2173
        %v2177 = vmul.f32 %v2167, %v2176
        %v2178 = vpack.c.bf16 %v2177, %v2175
        %v2180 = vsel %vm1906, %v2178, 0
        %2182 = vmatprep.subr.bf16.mxu0 0
        %2183 = vmatpush1.bf16.msra.mxu0 %v2104
        %2184 = vmatprep.subr.bf16.mxu0 0
        %2185 = vmatpush1.bf16.msra.mxu0 0
        %2186 = vmatprep.subr.bf16.mxu0 0
        %2187 = vmatpush1.bf16.msra.mxu0 0
        %2188 = vmatprep.subr.bf16.mxu0 0
        %2189 = vmatpush1.bf16.msra.mxu0 0
        %2190 = vmatprep.subr.bf16.mxu0 0
        %2191 = vmatpush1.bf16.msra.mxu0 0
        %2192 = vmatprep.subr.bf16.mxu0 0
        %2193 = vmatpush1.bf16.msra.mxu0 0
        %2194 = vmatprep.subr.bf16.mxu0 0
        %2195 = vmatpush1.bf16.msra.mxu0 0
        %2196 = vmatprep.subr.bf16.mxu0 0
        %2197 = vmatpush1.bf16.msra.mxu0 0
        %2198 = vmatprep.subr.bf16.mxu0 0
        %2199 = vmatpush1.bf16.msra.mxu0 0
        %2200 = vmatprep.subr.bf16.mxu0 0
        %2201 = vmatpush1.bf16.msra.mxu0 0
        %2202 = vmatprep.subr.bf16.mxu0 0
        %2203 = vmatpush1.bf16.msra.mxu0 0
        %2204 = vmatprep.subr.bf16.mxu0 0
        %2205 = vmatpush1.bf16.msra.mxu0 0
        %2206 = vmatprep.subr.bf16.mxu0 0
        %2207 = vmatpush1.bf16.msra.mxu0 0
        %2208 = vmatprep.subr.bf16.mxu0 0
        %2209 = vmatpush1.bf16.msra.mxu0 0
        %2210 = vmatprep.subr.bf16.mxu0 0
        %2211 = vmatpush1.bf16.msra.mxu0 0
        %2212 = vmatprep.subr.bf16.mxu0 0
        %2213 = vmatpush1.bf16.msra.mxu0 0
        %2214 = vmatprep.mubr.bf16.mxu0 0
        %2215 = vmatmul.mubr.bf16.gmra.mrb[0].mxu0 %v2180
        %v2216 = vpop.f32.mrb[0].mxu0
        %v2217 = vadd.f32 0.0, %v2216
        %v2218 = vpop.f32.mrb[0].mxu0
        %v2219 = vpop.f32.mrb[0].mxu0
        %v2220 = vadd.f32 0.0, %v2219
        %v2221 = vpop.f32.mrb[0].mxu0
        %2222 = vdwg.mxu0
        %2224 = vrot.lane.b32.xlu0 %v2102, 64
        %v2225 = vpop.permute.xlu0 %2224
        %2227 = vrot.lane.b32.xlu0 %v2103, 64
        %v2228 = vpop.permute.xlu0 %2227
        %v2230 = vsel %vm1850, %v2225, 0
        %v2233 = vsel %vm1850, %v2228, 0
        %2235 = vmatprep.subr.bf16.mxu0 0
        %2236 = vmatpush1.bf16.xpose.msra.mxu0 %v2233
        %2237 = vmatprep.subr.bf16.mxu0 0
        %2238 = vmatpush1.bf16.xpose.msra.mxu0 0
        %2239 = vmatprep.subr.bf16.mxu0 0
        %2240 = vmatpush1.bf16.xpose.msra.mxu0 0
        %2241 = vmatprep.subr.bf16.mxu0 0
        %2242 = vmatpush1.bf16.xpose.msra.mxu0 0
        %2243 = vmatprep.subr.bf16.mxu0 0
        %2244 = vmatpush1.bf16.xpose.msra.mxu0 0
        %2245 = vmatprep.subr.bf16.mxu0 0
        %2246 = vmatpush1.bf16.xpose.msra.mxu0 0
        %2247 = vmatprep.subr.bf16.mxu0 0
        %2248 = vmatpush1.bf16.xpose.msra.mxu0 0
        %2249 = vmatprep.subr.bf16.mxu0 0
        %2250 = vmatpush1.bf16.xpose.msra.mxu0 0
        %2251 = vmatprep.subr.bf16.mxu0 0
        %2252 = vmatpush1.bf16.xpose.msra.mxu0 0
        %2253 = vmatprep.subr.bf16.mxu0 0
        %2254 = vmatpush1.bf16.xpose.msra.mxu0 0
        %2255 = vmatprep.subr.bf16.mxu0 0
        %2256 = vmatpush1.bf16.xpose.msra.mxu0 0
        %2257 = vmatprep.subr.bf16.mxu0 0
        %2258 = vmatpush1.bf16.xpose.msra.mxu0 0
        %2259 = vmatprep.subr.bf16.mxu0 0
        %2260 = vmatpush1.bf16.xpose.msra.mxu0 0
        %2261 = vmatprep.subr.bf16.mxu0 0
        %2262 = vmatpush1.bf16.xpose.msra.mxu0 0
        %2263 = vmatprep.subr.bf16.mxu0 0
        %2264 = vmatpush1.bf16.xpose.msra.mxu0 0
        %2265 = vmatprep.subr.bf16.mxu0 0
        %2266 = vmatpush1.bf16.xpose.msra.mxu0 0
        %2267 = vmatprep.mubr.bf16.mxu0 0
        %2268 = vmatmul.mubr.bf16.gmra.mrb[0].mxu0 %v2230
        %v2269 = vpop.f32.mrb[0].mxu0
        %v2270 = vadd.f32 0.0, %v2269
        %v2271 = vpop.f32.mrb[0].mxu0
        %v2272 = vpop.f32.mrb[0].mxu0
        %v2273 = vadd.f32 0.0, %v2272
        %v2274 = vpop.f32.mrb[0].mxu0
        %2275 = vdwg.mxu0
        %v2276 = vmul.f32 %v2270, 0.125
        %v2277 = vmul.f32 %v2273, 0.125
        %v2278 = vadd.f32 %v2276, %v1903
        %v2279 = vadd.f32 %v2277, %v1903
        %v2280 = vsel %vm1906, %v2278, -inf
        %2281 = vmax.xlane.f32.xlu0 %v2280
        %v2282 = vpop.xlane.xlu0 %2281
        %v2283 = vsel %vm1906, %v2279, -inf
        %2284 = vmax.xlane.f32.xlu0 %v2283
        %v2285 = vpop.xlane.xlu0 %2284
        %v2286 = vsub.f32 %v2278, %v2282
        %v2287 = vsub.f32 %v2279, %v2285
        %v2288 = vmul.f32 %v2286, 1.442695
        %v2289 = vpow.pop %v2288
        %v2290 = vmul.f32 %v2287, 1.442695
        %v2291 = vpow.pop %v2290
        %v2292 = vsel %vm1906, %v2289, 0.0
        %2293 = vadd.xlane.f32.xlu0 %v2292
        %v2294 = vpop.xlane.xlu0 %2293
        %v2295 = vsel %vm1906, %v2291, 0.0
        %2296 = vadd.xlane.f32.xlu0 %v2295
        %v2297 = vpop.xlane.xlu0 %2296
        %v2298 = vrcp.pop %v2294
        %v2299 = vmul.f32 %v2289, %v2298
        %v2300 = vrcp.pop %v2297
        %v2301 = vmul.f32 %v2291, %v2300
        %v2302 = vpack.c.bf16 %v2301, %v2299
        %2304 = vrot.lane.b32.xlu0 %v2104, 64
        %v2305 = vpop.permute.xlu0 %2304
        %v2308 = vsel %vm1906, %v2302, 0
        %2310 = vmatprep.subr.bf16.mxu0 0
        %2311 = vmatpush1.bf16.msra.mxu0 %v2305
        %2312 = vmatprep.subr.bf16.mxu0 0
        %2313 = vmatpush1.bf16.msra.mxu0 0
        %2314 = vmatprep.subr.bf16.mxu0 0
        %2315 = vmatpush1.bf16.msra.mxu0 0
        %2316 = vmatprep.subr.bf16.mxu0 0
        %2317 = vmatpush1.bf16.msra.mxu0 0
        %2318 = vmatprep.subr.bf16.mxu0 0
        %2319 = vmatpush1.bf16.msra.mxu0 0
        %2320 = vmatprep.subr.bf16.mxu0 0
        %2321 = vmatpush1.bf16.msra.mxu0 0
        %2322 = vmatprep.subr.bf16.mxu0 0
        %2323 = vmatpush1.bf16.msra.mxu0 0
        %2324 = vmatprep.subr.bf16.mxu0 0
        %2325 = vmatpush1.bf16.msra.mxu0 0
        %2326 = vmatprep.subr.bf16.mxu0 0
        %2327 = vmatpush1.bf16.msra.mxu0 0
        %2328 = vmatprep.subr.bf16.mxu0 0
        %2329 = vmatpush1.bf16.msra.mxu0 0
        %2330 = vmatprep.subr.bf16.mxu0 0
        %2331 = vmatpush1.bf16.msra.mxu0 0
        %2332 = vmatprep.subr.bf16.mxu0 0
        %2333 = vmatpush1.bf16.msra.mxu0 0
        %2334 = vmatprep.subr.bf16.mxu0 0
        %2335 = vmatpush1.bf16.msra.mxu0 0
        %2336 = vmatprep.subr.bf16.mxu0 0
        %2337 = vmatpush1.bf16.msra.mxu0 0
        %2338 = vmatprep.subr.bf16.mxu0 0
        %2339 = vmatpush1.bf16.msra.mxu0 0
        %2340 = vmatprep.subr.bf16.mxu0 0
        %2341 = vmatpush1.bf16.msra.mxu0 0
        %2342 = vmatprep.mubr.bf16.mxu0 0
        %2343 = vmatmul.mubr.bf16.gmra.mrb[0].mxu0 %v2308
        %v2344 = vpop.f32.mrb[0].mxu0
        %v2345 = vadd.f32 0.0, %v2344
        %v2346 = vpop.f32.mrb[0].mxu0
        %v2347 = vpop.f32.mrb[0].mxu0
        %v2348 = vadd.f32 0.0, %v2347
        %v2349 = vpop.f32.mrb[0].mxu0
        %2350 = vdwg.mxu0
        %2353 = vrot.lane.b32.xlu0 %v2096, 64
        %v2354 = vpop.permute.xlu0 %2353
        %2355 = vrot.lane.b32.xlu0 %v2099, 64
        %v2356 = vpop.permute.xlu0 %2355
        %2361 = vrot.lane.b32.xlu0 %v2345, 64
        %v2362 = vpop.permute.xlu0 %2361
        %2363 = vrot.lane.b32.xlu0 %v2348, 64
        %v2364 = vpop.permute.xlu0 %2363
        %v2367 = vsel %vm1850, %v1968, %v2354
        %v2368 = vsel %vm1850, %v1971, %v2356
        %v2369 = vsel %vm1850, %v2217, %v2362
        %v2370 = vsel %vm1850, %v2220, %v2364
        %v2371 = vpack.c.bf16 %v1736, %v1732
        %v2372 = vpack.c.bf16 %v1789, %v1785
        %v2373 = vpack.c.bf16 %v1842, %v1838
        %v2375 = vsel %vm1850, %v2371, 0
        %v2378 = vsel %vm1850, %v2372, 0
        %2380 = vmatprep.subr.bf16.mxu0 0
        %2381 = vmatpush1.bf16.xpose.msra.mxu0 %v2378
        %2382 = vmatprep.subr.bf16.mxu0 0
        %2383 = vmatpush1.bf16.xpose.msra.mxu0 0
        %2384 = vmatprep.subr.bf16.mxu0 0
        %2385 = vmatpush1.bf16.xpose.msra.mxu0 0
        %2386 = vmatprep.subr.bf16.mxu0 0
        %2387 = vmatpush1.bf16.xpose.msra.mxu0 0
        %2388 = vmatprep.subr.bf16.mxu0 0
        %2389 = vmatpush1.bf16.xpose.msra.mxu0 0
        %2390 = vmatprep.subr.bf16.mxu0 0
        %2391 = vmatpush1.bf16.xpose.msra.mxu0 0
        %2392 = vmatprep.subr.bf16.mxu0 0
        %2393 = vmatpush1.bf16.xpose.msra.mxu0 0
        %2394 = vmatprep.subr.bf16.mxu0 0
        %2395 = vmatpush1.bf16.xpose.msra.mxu0 0
        %2396 = vmatprep.subr.bf16.mxu0 0
        %2397 = vmatpush1.bf16.xpose.msra.mxu0 0
        %2398 = vmatprep.subr.bf16.mxu0 0
        %2399 = vmatpush1.bf16.xpose.msra.mxu0 0
        %2400 = vmatprep.subr.bf16.mxu0 0
        %2401 = vmatpush1.bf16.xpose.msra.mxu0 0
        %2402 = vmatprep.subr.bf16.mxu0 0
        %2403 = vmatpush1.bf16.xpose.msra.mxu0 0
        %2404 = vmatprep.subr.bf16.mxu0 0
        %2405 = vmatpush1.bf16.xpose.msra.mxu0 0
        %2406 = vmatprep.subr.bf16.mxu0 0
        %2407 = vmatpush1.bf16.xpose.msra.mxu0 0
        %2408 = vmatprep.subr.bf16.mxu0 0
        %2409 = vmatpush1.bf16.xpose.msra.mxu0 0
        %2410 = vmatprep.subr.bf16.mxu0 0
        %2411 = vmatpush1.bf16.xpose.msra.mxu0 0
        %2412 = vmatprep.mubr.bf16.mxu0 0
        %2413 = vmatmul.mubr.bf16.gmra.mrb[0].mxu0 %v2375
        %v2414 = vpop.f32.mrb[0].mxu0
        %v2415 = vadd.f32 0.0, %v2414
        %v2416 = vpop.f32.mrb[0].mxu0
        %v2417 = vpop.f32.mrb[0].mxu0
        %v2418 = vadd.f32 0.0, %v2417
        %v2419 = vpop.f32.mrb[0].mxu0
        %2420 = vdwg.mxu0
        %v2421 = vmul.f32 %v2415, 0.125
        %v2422 = vmul.f32 %v2418, 0.125
        %v2423 = vlaneseq
        %v2424 = vshrl.u32 %v2423, 7
        %v2425 = vsub.s32 1, %v2424
        %v2426 = vrot.slane %v1846, %v2425
        %v2427 = vadd.f32 %v2421, %v2426
        %v2428 = vadd.f32 %v2422, %v2426
        %v2429 = vsel %vm1906, %v2427, -inf
        %2430 = vmax.xlane.f32.xlu0 %v2429
        %v2431 = vpop.xlane.xlu0 %2430
        %v2432 = vsel %vm1906, %v2428, -inf
        %2433 = vmax.xlane.f32.xlu0 %v2432
        %v2434 = vpop.xlane.xlu0 %2433
        %v2435 = vsub.f32 %v2427, %v2431
        %v2436 = vsub.f32 %v2428, %v2434
        %v2437 = vmul.f32 %v2435, 1.442695
        %v2438 = vpow.pop %v2437
        %v2439 = vmul.f32 %v2436, 1.442695
        %v2440 = vpow.pop %v2439
        %v2441 = vsel %vm1906, %v2438, 0.0
        %2442 = vadd.xlane.f32.xlu0 %v2441
        %v2443 = vpop.xlane.xlu0 %2442
        %v2444 = vsel %vm1906, %v2440, 0.0
        %2445 = vadd.xlane.f32.xlu0 %v2444
        %v2446 = vpop.xlane.xlu0 %2445
        %v2447 = vrcp.pop %v2443
        %v2448 = vmul.f32 %v2438, %v2447
        %v2449 = vrcp.pop %v2446
        %v2450 = vmul.f32 %v2440, %v2449
        %v2451 = vpack.c.bf16 %v2450, %v2448
        %v2453 = vsel %vm1906, %v2451, 0
        %2455 = vmatprep.subr.bf16.mxu0 0
        %2456 = vmatpush1.bf16.msra.mxu0 %v2373
        %2457 = vmatprep.subr.bf16.mxu0 0
        %2458 = vmatpush1.bf16.msra.mxu0 0
        %2459 = vmatprep.subr.bf16.mxu0 0
        %2460 = vmatpush1.bf16.msra.mxu0 0
        %2461 = vmatprep.subr.bf16.mxu0 0
        %2462 = vmatpush1.bf16.msra.mxu0 0
        %2463 = vmatprep.subr.bf16.mxu0 0
        %2464 = vmatpush1.bf16.msra.mxu0 0
        %2465 = vmatprep.subr.bf16.mxu0 0
        %2466 = vmatpush1.bf16.msra.mxu0 0
        %2467 = vmatprep.subr.bf16.mxu0 0
        %2468 = vmatpush1.bf16.msra.mxu0 0
        %2469 = vmatprep.subr.bf16.mxu0 0
        %2470 = vmatpush1.bf16.msra.mxu0 0
        %2471 = vmatprep.subr.bf16.mxu0 0
        %2472 = vmatpush1.bf16.msra.mxu0 0
        %2473 = vmatprep.subr.bf16.mxu0 0
        %2474 = vmatpush1.bf16.msra.mxu0 0
        %2475 = vmatprep.subr.bf16.mxu0 0
        %2476 = vmatpush1.bf16.msra.mxu0 0
        %2477 = vmatprep.subr.bf16.mxu0 0
        %2478 = vmatpush1.bf16.msra.mxu0 0
        %2479 = vmatprep.subr.bf16.mxu0 0
        %2480 = vmatpush1.bf16.msra.mxu0 0
        %2481 = vmatprep.subr.bf16.mxu0 0
        %2482 = vmatpush1.bf16.msra.mxu0 0
        %2483 = vmatprep.subr.bf16.mxu0 0
        %2484 = vmatpush1.bf16.msra.mxu0 0
        %2485 = vmatprep.subr.bf16.mxu0 0
        %2486 = vmatpush1.bf16.msra.mxu0 0
        %2487 = vmatprep.mubr.bf16.mxu0 0
        %2488 = vmatmul.mubr.bf16.gmra.mrb[0].mxu0 %v2453
        %v2489 = vpop.f32.mrb[0].mxu0
        %v2490 = vadd.f32 0.0, %v2489
        %v2491 = vpop.f32.mrb[0].mxu0
        %v2492 = vpop.f32.mrb[0].mxu0
        %v2493 = vadd.f32 0.0, %v2492
        %v2494 = vpop.f32.mrb[0].mxu0
        %2495 = vdwg.mxu0
        %2497 = vrot.lane.b32.xlu0 %v2371, 64
        %v2498 = vpop.permute.xlu0 %2497
        %2500 = vrot.lane.b32.xlu0 %v2372, 64
        %v2501 = vpop.permute.xlu0 %2500
        %v2503 = vsel %vm1850, %v2498, 0
        %v2506 = vsel %vm1850, %v2501, 0
        %2508 = vmatprep.subr.bf16.mxu0 0
        %2509 = vmatpush1.bf16.xpose.msra.mxu0 %v2506
        %2510 = vmatprep.subr.bf16.mxu0 0
        %2511 = vmatpush1.bf16.xpose.msra.mxu0 0
        %2512 = vmatprep.subr.bf16.mxu0 0
        %2513 = vmatpush1.bf16.xpose.msra.mxu0 0
        %2514 = vmatprep.subr.bf16.mxu0 0
        %2515 = vmatpush1.bf16.xpose.msra.mxu0 0
        %2516 = vmatprep.subr.bf16.mxu0 0
        %2517 = vmatpush1.bf16.xpose.msra.mxu0 0
        %2518 = vmatprep.subr.bf16.mxu0 0
        %2519 = vmatpush1.bf16.xpose.msra.mxu0 0
        %2520 = vmatprep.subr.bf16.mxu0 0
        %2521 = vmatpush1.bf16.xpose.msra.mxu0 0
        %2522 = vmatprep.subr.bf16.mxu0 0
        %2523 = vmatpush1.bf16.xpose.msra.mxu0 0
        %2524 = vmatprep.subr.bf16.mxu0 0
        %2525 = vmatpush1.bf16.xpose.msra.mxu0 0
        %2526 = vmatprep.subr.bf16.mxu0 0
        %2527 = vmatpush1.bf16.xpose.msra.mxu0 0
        %2528 = vmatprep.subr.bf16.mxu0 0
        %2529 = vmatpush1.bf16.xpose.msra.mxu0 0
        %2530 = vmatprep.subr.bf16.mxu0 0
        %2531 = vmatpush1.bf16.xpose.msra.mxu0 0
        %2532 = vmatprep.subr.bf16.mxu0 0
        %2533 = vmatpush1.bf16.xpose.msra.mxu0 0
        %2534 = vmatprep.subr.bf16.mxu0 0
        %2535 = vmatpush1.bf16.xpose.msra.mxu0 0
        %2536 = vmatprep.subr.bf16.mxu0 0
        %2537 = vmatpush1.bf16.xpose.msra.mxu0 0
        %2538 = vmatprep.subr.bf16.mxu0 0
        %2539 = vmatpush1.bf16.xpose.msra.mxu0 0
        %2540 = vmatprep.mubr.bf16.mxu0 0
        %2541 = vmatmul.mubr.bf16.gmra.mrb[0].mxu0 %v2503
        %v2542 = vpop.f32.mrb[0].mxu0
        %v2543 = vadd.f32 0.0, %v2542
        %v2544 = vpop.f32.mrb[0].mxu0
        %v2545 = vpop.f32.mrb[0].mxu0
        %v2546 = vadd.f32 0.0, %v2545
        %v2547 = vpop.f32.mrb[0].mxu0
        %2548 = vdwg.mxu0
        %v2549 = vmul.f32 %v2543, 0.125
        %v2550 = vmul.f32 %v2546, 0.125
        %v2551 = vadd.f32 %v2549, %v2426
        %v2552 = vadd.f32 %v2550, %v2426
        %v2553 = vsel %vm1906, %v2551, -inf
        %2554 = vmax.xlane.f32.xlu0 %v2553
        %v2555 = vpop.xlane.xlu0 %2554
        %v2556 = vsel %vm1906, %v2552, -inf
        %2557 = vmax.xlane.f32.xlu0 %v2556
        %v2558 = vpop.xlane.xlu0 %2557
        %v2559 = vsub.f32 %v2551, %v2555
        %v2560 = vsub.f32 %v2552, %v2558
        %v2561 = vmul.f32 %v2559, 1.442695
        %v2562 = vpow.pop %v2561
        %v2563 = vmul.f32 %v2560, 1.442695
        %v2564 = vpow.pop %v2563
        %v2565 = vsel %vm1906, %v2562, 0.0
        %2566 = vadd.xlane.f32.xlu0 %v2565
        %v2567 = vpop.xlane.xlu0 %2566
        %v2568 = vsel %vm1906, %v2564, 0.0
        %2569 = vadd.xlane.f32.xlu0 %v2568
        %v2570 = vpop.xlane.xlu0 %2569
        %v2571 = vrcp.pop %v2567
        %v2572 = vmul.f32 %v2562, %v2571
        %v2573 = vrcp.pop %v2570
        %v2574 = vmul.f32 %v2564, %v2573
        %v2575 = vpack.c.bf16 %v2574, %v2572
        %2577 = vrot.lane.b32.xlu0 %v2373, 64
        %v2578 = vpop.permute.xlu0 %2577
        %v2581 = vsel %vm1906, %v2575, 0
        %2583 = vmatprep.subr.bf16.mxu0 0
        %2584 = vmatpush1.bf16.msra.mxu0 %v2578
        %2585 = vmatprep.subr.bf16.mxu0 0
        %2586 = vmatpush1.bf16.msra.mxu0 0
        %2587 = vmatprep.subr.bf16.mxu0 0
        %2588 = vmatpush1.bf16.msra.mxu0 0
        %2589 = vmatprep.subr.bf16.mxu0 0
        %2590 = vmatpush1.bf16.msra.mxu0 0
        %2591 = vmatprep.subr.bf16.mxu0 0
        %2592 = vmatpush1.bf16.msra.mxu0 0
        %2593 = vmatprep.subr.bf16.mxu0 0
        %2594 = vmatpush1.bf16.msra.mxu0 0
        %2595 = vmatprep.subr.bf16.mxu0 0
        %2596 = vmatpush1.bf16.msra.mxu0 0
        %2597 = vmatprep.subr.bf16.mxu0 0
        %2598 = vmatpush1.bf16.msra.mxu0 0
        %2599 = vmatprep.subr.bf16.mxu0 0
        %2600 = vmatpush1.bf16.msra.mxu0 0
        %2601 = vmatprep.subr.bf16.mxu0 0
        %2602 = vmatpush1.bf16.msra.mxu0 0
        %2603 = vmatprep.subr.bf16.mxu0 0
        %2604 = vmatpush1.bf16.msra.mxu0 0
        %2605 = vmatprep.subr.bf16.mxu0 0
        %2606 = vmatpush1.bf16.msra.mxu0 0
        %2607 = vmatprep.subr.bf16.mxu0 0
        %2608 = vmatpush1.bf16.msra.mxu0 0
        %2609 = vmatprep.subr.bf16.mxu0 0
        %2610 = vmatpush1.bf16.msra.mxu0 0
        %2611 = vmatprep.subr.bf16.mxu0 0
        %2612 = vmatpush1.bf16.msra.mxu0 0
        %2613 = vmatprep.subr.bf16.mxu0 0
        %2614 = vmatpush1.bf16.msra.mxu0 0
        %2615 = vmatprep.mubr.bf16.mxu0 0
        %2616 = vmatmul.mubr.bf16.gmra.mrb[0].mxu0 %v2581
        %v2617 = vpop.f32.mrb[0].mxu0
        %v2618 = vadd.f32 0.0, %v2617
        %v2619 = vpop.f32.mrb[0].mxu0
        %v2620 = vpop.f32.mrb[0].mxu0
        %v2621 = vadd.f32 0.0, %v2620
        %v2622 = vpop.f32.mrb[0].mxu0
        %2623 = vdwg.mxu0
        %v2624 = vpack.c.bf16 %v1738, %v1734
        %v2625 = vpack.c.bf16 %v1791, %v1787
        %v2626 = vpack.c.bf16 %v1844, %v1840
        %v2628 = vsel %vm1850, %v2624, 0
        %v2631 = vsel %vm1850, %v2625, 0
        %2633 = vmatprep.subr.bf16.mxu0 0
        %2634 = vmatpush1.bf16.xpose.msra.mxu0 %v2631
        %2635 = vmatprep.subr.bf16.mxu0 0
        %2636 = vmatpush1.bf16.xpose.msra.mxu0 0
        %2637 = vmatprep.subr.bf16.mxu0 0
        %2638 = vmatpush1.bf16.xpose.msra.mxu0 0
        %2639 = vmatprep.subr.bf16.mxu0 0
        %2640 = vmatpush1.bf16.xpose.msra.mxu0 0
        %2641 = vmatprep.subr.bf16.mxu0 0
        %2642 = vmatpush1.bf16.xpose.msra.mxu0 0
        %2643 = vmatprep.subr.bf16.mxu0 0
        %2644 = vmatpush1.bf16.xpose.msra.mxu0 0
        %2645 = vmatprep.subr.bf16.mxu0 0
        %2646 = vmatpush1.bf16.xpose.msra.mxu0 0
        %2647 = vmatprep.subr.bf16.mxu0 0
        %2648 = vmatpush1.bf16.xpose.msra.mxu0 0
        %2649 = vmatprep.subr.bf16.mxu0 0
        %2650 = vmatpush1.bf16.xpose.msra.mxu0 0
        %2651 = vmatprep.subr.bf16.mxu0 0
        %2652 = vmatpush1.bf16.xpose.msra.mxu0 0
        %2653 = vmatprep.subr.bf16.mxu0 0
        %2654 = vmatpush1.bf16.xpose.msra.mxu0 0
        %2655 = vmatprep.subr.bf16.mxu0 0
        %2656 = vmatpush1.bf16.xpose.msra.mxu0 0
        %2657 = vmatprep.subr.bf16.mxu0 0
        %2658 = vmatpush1.bf16.xpose.msra.mxu0 0
        %2659 = vmatprep.subr.bf16.mxu0 0
        %2660 = vmatpush1.bf16.xpose.msra.mxu0 0
        %2661 = vmatprep.subr.bf16.mxu0 0
        %2662 = vmatpush1.bf16.xpose.msra.mxu0 0
        %2663 = vmatprep.subr.bf16.mxu0 0
        %2664 = vmatpush1.bf16.xpose.msra.mxu0 0
        %2665 = vmatprep.mubr.bf16.mxu0 0
        %2666 = vmatmul.mubr.bf16.gmra.mrb[0].mxu0 %v2628
        %v2667 = vpop.f32.mrb[0].mxu0
        %v2668 = vadd.f32 0.0, %v2667
        %v2669 = vpop.f32.mrb[0].mxu0
        %v2670 = vpop.f32.mrb[0].mxu0
        %v2671 = vadd.f32 0.0, %v2670
        %v2672 = vpop.f32.mrb[0].mxu0
        %2673 = vdwg.mxu0
        %v2674 = vmul.f32 %v2668, 0.125
        %v2675 = vmul.f32 %v2671, 0.125
        %v2676 = vadd.f32 %v2674, %v2426
        %v2677 = vadd.f32 %v2675, %v2426
        %v2678 = vsel %vm1906, %v2676, -inf
        %2679 = vmax.xlane.f32.xlu0 %v2678
        %v2680 = vpop.xlane.xlu0 %2679
        %v2681 = vsel %vm1906, %v2677, -inf
        %2682 = vmax.xlane.f32.xlu0 %v2681
        %v2683 = vpop.xlane.xlu0 %2682
        %v2684 = vsub.f32 %v2676, %v2680
        %v2685 = vsub.f32 %v2677, %v2683
        %v2686 = vmul.f32 %v2684, 1.442695
        %v2687 = vpow.pop %v2686
        %v2688 = vmul.f32 %v2685, 1.442695
        %v2689 = vpow.pop %v2688
        %v2690 = vsel %vm1906, %v2687, 0.0
        %2691 = vadd.xlane.f32.xlu0 %v2690
        %v2692 = vpop.xlane.xlu0 %2691
        %v2693 = vsel %vm1906, %v2689, 0.0
        %2694 = vadd.xlane.f32.xlu0 %v2693
        %v2695 = vpop.xlane.xlu0 %2694
        %v2696 = vrcp.pop %v2692
        %v2697 = vmul.f32 %v2687, %v2696
        %v2698 = vrcp.pop %v2695
        %v2699 = vmul.f32 %v2689, %v2698
        %v2700 = vpack.c.bf16 %v2699, %v2697
        %v2702 = vsel %vm1906, %v2700, 0
        %2704 = vmatprep.subr.bf16.mxu0 0
        %2705 = vmatpush1.bf16.msra.mxu0 %v2626
        %2706 = vmatprep.subr.bf16.mxu0 0
        %2707 = vmatpush1.bf16.msra.mxu0 0
        %2708 = vmatprep.subr.bf16.mxu0 0
        %2709 = vmatpush1.bf16.msra.mxu0 0
        %2710 = vmatprep.subr.bf16.mxu0 0
        %2711 = vmatpush1.bf16.msra.mxu0 0
        %2712 = vmatprep.subr.bf16.mxu0 0
        %2713 = vmatpush1.bf16.msra.mxu0 0
        %2714 = vmatprep.subr.bf16.mxu0 0
        %2715 = vmatpush1.bf16.msra.mxu0 0
        %2716 = vmatprep.subr.bf16.mxu0 0
        %2717 = vmatpush1.bf16.msra.mxu0 0
        %2718 = vmatprep.subr.bf16.mxu0 0
        %2719 = vmatpush1.bf16.msra.mxu0 0
        %2720 = vmatprep.subr.bf16.mxu0 0
        %2721 = vmatpush1.bf16.msra.mxu0 0
        %2722 = vmatprep.subr.bf16.mxu0 0
        %2723 = vmatpush1.bf16.msra.mxu0 0
        %2724 = vmatprep.subr.bf16.mxu0 0
        %2725 = vmatpush1.bf16.msra.mxu0 0
        %2726 = vmatprep.subr.bf16.mxu0 0
        %2727 = vmatpush1.bf16.msra.mxu0 0
        %2728 = vmatprep.subr.bf16.mxu0 0
        %2729 = vmatpush1.bf16.msra.mxu0 0
        %2730 = vmatprep.subr.bf16.mxu0 0
        %2731 = vmatpush1.bf16.msra.mxu0 0
        %2732 = vmatprep.subr.bf16.mxu0 0
        %2733 = vmatpush1.bf16.msra.mxu0 0
        %2734 = vmatprep.subr.bf16.mxu0 0
        %2735 = vmatpush1.bf16.msra.mxu0 0
        %2736 = vmatprep.mubr.bf16.mxu0 0
        %2737 = vmatmul.mubr.bf16.gmra.mrb[0].mxu0 %v2702
        %v2738 = vpop.f32.mrb[0].mxu0
        %v2739 = vadd.f32 0.0, %v2738
        %v2740 = vpop.f32.mrb[0].mxu0
        %v2741 = vpop.f32.mrb[0].mxu0
        %v2742 = vadd.f32 0.0, %v2741
        %v2743 = vpop.f32.mrb[0].mxu0
        %2744 = vdwg.mxu0
        %2746 = vrot.lane.b32.xlu0 %v2624, 64
        %v2747 = vpop.permute.xlu0 %2746
        %2749 = vrot.lane.b32.xlu0 %v2625, 64
        %v2750 = vpop.permute.xlu0 %2749
        %v2752 = vsel %vm1850, %v2747, 0
        %v2755 = vsel %vm1850, %v2750, 0
        %2757 = vmatprep.subr.bf16.mxu0 0
        %2758 = vmatpush1.bf16.xpose.msra.mxu0 %v2755
        %2759 = vmatprep.subr.bf16.mxu0 0
        %2760 = vmatpush1.bf16.xpose.msra.mxu0 0
        %2761 = vmatprep.subr.bf16.mxu0 0
        %2762 = vmatpush1.bf16.xpose.msra.mxu0 0
        %2763 = vmatprep.subr.bf16.mxu0 0
        %2764 = vmatpush1.bf16.xpose.msra.mxu0 0
        %2765 = vmatprep.subr.bf16.mxu0 0
        %2766 = vmatpush1.bf16.xpose.msra.mxu0 0
        %2767 = vmatprep.subr.bf16.mxu0 0
        %2768 = vmatpush1.bf16.xpose.msra.mxu0 0
        %2769 = vmatprep.subr.bf16.mxu0 0
        %2770 = vmatpush1.bf16.xpose.msra.mxu0 0
        %2771 = vmatprep.subr.bf16.mxu0 0
        %2772 = vmatpush1.bf16.xpose.msra.mxu0 0
        %2773 = vmatprep.subr.bf16.mxu0 0
        %2774 = vmatpush1.bf16.xpose.msra.mxu0 0
        %2775 = vmatprep.subr.bf16.mxu0 0
        %2776 = vmatpush1.bf16.xpose.msra.mxu0 0
        %2777 = vmatprep.subr.bf16.mxu0 0
        %2778 = vmatpush1.bf16.xpose.msra.mxu0 0
        %2779 = vmatprep.subr.bf16.mxu0 0
        %2780 = vmatpush1.bf16.xpose.msra.mxu0 0
        %2781 = vmatprep.subr.bf16.mxu0 0
        %2782 = vmatpush1.bf16.xpose.msra.mxu0 0
        %2783 = vmatprep.subr.bf16.mxu0 0
        %2784 = vmatpush1.bf16.xpose.msra.mxu0 0
        %2785 = vmatprep.subr.bf16.mxu0 0
        %2786 = vmatpush1.bf16.xpose.msra.mxu0 0
        %2787 = vmatprep.subr.bf16.mxu0 0
        %2788 = vmatpush1.bf16.xpose.msra.mxu0 0
        %2789 = vmatprep.mubr.bf16.mxu0 0
        %2790 = vmatmul.mubr.bf16.gmra.mrb[0].mxu0 %v2752
        %v2791 = vpop.f32.mrb[0].mxu0
        %v2792 = vadd.f32 0.0, %v2791
        %v2793 = vpop.f32.mrb[0].mxu0
        %v2794 = vpop.f32.mrb[0].mxu0
        %v2795 = vadd.f32 0.0, %v2794
        %v2796 = vpop.f32.mrb[0].mxu0
        %2797 = vdwg.mxu0
        %v2798 = vmul.f32 %v2792, 0.125
        %v2799 = vmul.f32 %v2795, 0.125
        %v2800 = vadd.f32 %v2798, %v2426
        %v2801 = vadd.f32 %v2799, %v2426
        %v2802 = vsel %vm1906, %v2800, -inf
        %2803 = vmax.xlane.f32.xlu0 %v2802
        %v2804 = vpop.xlane.xlu0 %2803
        %v2805 = vsel %vm1906, %v2801, -inf
        %2806 = vmax.xlane.f32.xlu0 %v2805
        %v2807 = vpop.xlane.xlu0 %2806
        %v2808 = vsub.f32 %v2800, %v2804
        %v2809 = vsub.f32 %v2801, %v2807
        %v2810 = vmul.f32 %v2808, 1.442695
        %v2811 = vpow.pop %v2810
        %v2812 = vmul.f32 %v2809, 1.442695
        %v2813 = vpow.pop %v2812
        %v2814 = vsel %vm1906, %v2811, 0.0
        %2815 = vadd.xlane.f32.xlu0 %v2814
        %v2816 = vpop.xlane.xlu0 %2815
        %v2817 = vsel %vm1906, %v2813, 0.0
        %2818 = vadd.xlane.f32.xlu0 %v2817
        %v2819 = vpop.xlane.xlu0 %2818
        %v2820 = vrcp.pop %v2816
        %v2821 = vmul.f32 %v2811, %v2820
        %v2822 = vrcp.pop %v2819
        %v2823 = vmul.f32 %v2813, %v2822
        %v2824 = vpack.c.bf16 %v2823, %v2821
        %2826 = vrot.lane.b32.xlu0 %v2626, 64
        %v2827 = vpop.permute.xlu0 %2826
        %v2830 = vsel %vm1906, %v2824, 0
        %2832 = vmatprep.subr.bf16.mxu0 0
        %2833 = vmatpush1.bf16.msra.mxu0 %v2827
        %2834 = vmatprep.subr.bf16.mxu0 0
        %2835 = vmatpush1.bf16.msra.mxu0 0
        %2836 = vmatprep.subr.bf16.mxu0 0
        %2837 = vmatpush1.bf16.msra.mxu0 0
        %2838 = vmatprep.subr.bf16.mxu0 0
        %2839 = vmatpush1.bf16.msra.mxu0 0
        %2840 = vmatprep.subr.bf16.mxu0 0
        %2841 = vmatpush1.bf16.msra.mxu0 0
        %2842 = vmatprep.subr.bf16.mxu0 0
        %2843 = vmatpush1.bf16.msra.mxu0 0
        %2844 = vmatprep.subr.bf16.mxu0 0
        %2845 = vmatpush1.bf16.msra.mxu0 0
        %2846 = vmatprep.subr.bf16.mxu0 0
        %2847 = vmatpush1.bf16.msra.mxu0 0
        %2848 = vmatprep.subr.bf16.mxu0 0
        %2849 = vmatpush1.bf16.msra.mxu0 0
        %2850 = vmatprep.subr.bf16.mxu0 0
        %2851 = vmatpush1.bf16.msra.mxu0 0
        %2852 = vmatprep.subr.bf16.mxu0 0
        %2853 = vmatpush1.bf16.msra.mxu0 0
        %2854 = vmatprep.subr.bf16.mxu0 0
        %2855 = vmatpush1.bf16.msra.mxu0 0
        %2856 = vmatprep.subr.bf16.mxu0 0
        %2857 = vmatpush1.bf16.msra.mxu0 0
        %2858 = vmatprep.subr.bf16.mxu0 0
        %2859 = vmatpush1.bf16.msra.mxu0 0
        %2860 = vmatprep.subr.bf16.mxu0 0
        %2861 = vmatpush1.bf16.msra.mxu0 0
        %2862 = vmatprep.subr.bf16.mxu0 0
        %2863 = vmatpush1.bf16.msra.mxu0 0
        %2864 = vmatprep.mubr.bf16.mxu0 0
        %2865 = vmatmul.mubr.bf16.gmra.mrb[0].mxu0 %v2830
        %v2866 = vpop.f32.mrb[0].mxu0
        %v2867 = vadd.f32 0.0, %v2866
        %v2868 = vpop.f32.mrb[0].mxu0
        %v2869 = vpop.f32.mrb[0].mxu0
        %v2870 = vadd.f32 0.0, %v2869
        %v2871 = vpop.f32.mrb[0].mxu0
        %2872 = vdwg.mxu0
        %2875 = vrot.lane.b32.xlu0 %v2618, 64
        %v2876 = vpop.permute.xlu0 %2875
        %2877 = vrot.lane.b32.xlu0 %v2621, 64
        %v2878 = vpop.permute.xlu0 %2877
        %2883 = vrot.lane.b32.xlu0 %v2867, 64
        %v2884 = vpop.permute.xlu0 %2883
        %2885 = vrot.lane.b32.xlu0 %v2870, 64
        %v2886 = vpop.permute.xlu0 %2885
        %v2889 = vsel %vm1850, %v2490, %v2876
        %v2890 = vsel %vm1850, %v2493, %v2878
        %v2891 = vsel %vm1850, %v2739, %v2884
        %v2892 = vsel %vm1850, %v2742, %v2886
        %v2893 = vpack.c.bf16 %v2368, %v2367
        %v2894 = vpack.c.bf16 %v2370, %v2369
        %v2895 = vpack.c.bf16 %v2890, %v2889
        %v2896 = vpack.c.bf16 %v2892, %v2891
        %v2897 = vld [vmem:[%s761] sm:$0xff]
        %v2898 = vld [vmem:[%s761 + $0x8] sm:$0xff]
        %v2899 = vld [vmem:[%s761 + $0x10] sm:$0xff]
        %v2900 = vld [vmem:[%s761 + $0x18] sm:$0xff]
        %v2901 = vld [vmem:[%s761 + $0x20] sm:$0xff]
        %v2902 = vld [vmem:[%s761 + $0x28] sm:$0xff]
        %v2903 = vld [vmem:[%s761 + $0x30] sm:$0xff]
        %v2904 = vld [vmem:[%s761 + $0x38] sm:$0xff]
        %v2905 = vld [vmem:[%s761 + $0x40] sm:$0xff]
        %v2906 = vld [vmem:[%s761 + $0x48] sm:$0xff]
        %v2907 = vld [vmem:[%s761 + $0x50] sm:$0xff]
        %v2908 = vld [vmem:[%s761 + $0x58] sm:$0xff]
        %v2909 = vld [vmem:[%s761 + $0x60] sm:$0xff]
        %v2910 = vld [vmem:[%s761 + $0x68] sm:$0xff]
        %v2911 = vld [vmem:[%s761 + $0x70] sm:$0xff]
        %v2912 = vld [vmem:[%s761 + $0x78] sm:$0xff]
        %v2913 = vld [vmem:[%s761 + $0x80] sm:$0xff]
        %v2914 = vld [vmem:[%s761 + $0x88] sm:$0xff]
        %v2915 = vld [vmem:[%s761 + $0x90] sm:$0xff]
        %v2916 = vld [vmem:[%s761 + $0x98] sm:$0xff]
        %v2917 = vld [vmem:[%s761 + $0xa0] sm:$0xff]
        %v2918 = vld [vmem:[%s761 + $0xa8] sm:$0xff]
        %v2919 = vld [vmem:[%s761 + $0xb0] sm:$0xff]
        %v2920 = vld [vmem:[%s761 + $0xb8] sm:$0xff]
        %v2921 = vld [vmem:[%s761 + $0xc0] sm:$0xff]
        %v2922 = vld [vmem:[%s761 + $0xc8] sm:$0xff]
        %v2923 = vld [vmem:[%s761 + $0xd0] sm:$0xff]
        %v2924 = vld [vmem:[%s761 + $0xd8] sm:$0xff]
        %v2925 = vld [vmem:[%s761 + $0xe0] sm:$0xff]
        %v2926 = vld [vmem:[%s761 + $0xe8] sm:$0xff]
        %v2927 = vld [vmem:[%s761 + $0xf0] sm:$0xff]
        %v2928 = vld [vmem:[%s761 + $0xf8] sm:$0xff]
        %v2929 = vld [vmem:[%s770] sm:$0x3]
        %v2931 = vlaneseq
        %v2932 = vshrl.u32 %v2931, 7
        %v2933 = vsub.s32 0, %v2932
        %v2934 = vrot.slane %v2929, %v2933
        %v2935 = vlaneseq
        %v2936 = vshrl.u32 %v2935, 7
        %v2937 = vsub.s32 1, %v2936
        %v2938 = vrot.slane %v2929, %v2937
        %v2973 = vunpack.c.l.b16 %v2897
        %v2974 = vunpack.c.h.b16 %v2897
        %v2975 = vunpack.c.l.b16 %v2898
        %v2976 = vunpack.c.h.b16 %v2898
        %v2977 = vunpack.c.l.b16 %v2899
        %v2978 = vunpack.c.h.b16 %v2899
        %v2979 = vunpack.c.l.b16 %v2900
        %v2980 = vunpack.c.h.b16 %v2900
        %v2981 = vunpack.c.l.b16 %v2901
        %v2982 = vunpack.c.h.b16 %v2901
        %v2983 = vunpack.c.l.b16 %v2902
        %v2984 = vunpack.c.h.b16 %v2902
        %v2985 = vunpack.c.l.b16 %v2903
        %v2986 = vunpack.c.h.b16 %v2903
        %v2987 = vunpack.c.l.b16 %v2904
        %v2988 = vunpack.c.h.b16 %v2904
        %v2989 = vunpack.c.l.b16 %v2905
        %v2990 = vunpack.c.h.b16 %v2905
        %v2991 = vunpack.c.l.b16 %v2906
        %v2992 = vunpack.c.h.b16 %v2906
        %v2993 = vunpack.c.l.b16 %v2907
        %v2994 = vunpack.c.h.b16 %v2907
        %v2995 = vunpack.c.l.b16 %v2908
        %v2996 = vunpack.c.h.b16 %v2908
        %v2997 = vunpack.c.l.b16 %v2909
        %v2998 = vunpack.c.h.b16 %v2909
        %v2999 = vunpack.c.l.b16 %v2910
        %v3000 = vunpack.c.h.b16 %v2910
        %v3001 = vunpack.c.l.b16 %v2911
        %v3002 = vunpack.c.h.b16 %v2911
        %v3003 = vunpack.c.l.b16 %v2912
        %v3004 = vunpack.c.h.b16 %v2912
        %v3005 = vunpack.c.l.b16 %v2913
        %v3006 = vunpack.c.h.b16 %v2913
        %v3007 = vunpack.c.l.b16 %v2914
        %v3008 = vunpack.c.h.b16 %v2914
        %v3009 = vunpack.c.l.b16 %v2915
        %v3010 = vunpack.c.h.b16 %v2915
        %v3011 = vunpack.c.l.b16 %v2916
        %v3012 = vunpack.c.h.b16 %v2916
        %v3013 = vunpack.c.l.b16 %v2917
        %v3014 = vunpack.c.h.b16 %v2917
        %v3015 = vunpack.c.l.b16 %v2918
        %v3016 = vunpack.c.h.b16 %v2918
        %v3017 = vunpack.c.l.b16 %v2919
        %v3018 = vunpack.c.h.b16 %v2919
        %v3019 = vunpack.c.l.b16 %v2920
        %v3020 = vunpack.c.h.b16 %v2920
        %v3021 = vunpack.c.l.b16 %v2921
        %v3022 = vunpack.c.h.b16 %v2921
        %v3023 = vunpack.c.l.b16 %v2922
        %v3024 = vunpack.c.h.b16 %v2922
        %v3025 = vunpack.c.l.b16 %v2923
        %v3026 = vunpack.c.h.b16 %v2923
        %v3027 = vunpack.c.l.b16 %v2924
        %v3028 = vunpack.c.h.b16 %v2924
        %v3029 = vunpack.c.l.b16 %v2925
        %v3030 = vunpack.c.h.b16 %v2925
        %v3031 = vunpack.c.l.b16 %v2926
        %v3032 = vunpack.c.h.b16 %v2926
        %v3033 = vunpack.c.l.b16 %v2927
        %v3034 = vunpack.c.h.b16 %v2927
        %v3035 = vunpack.c.l.b16 %v2928
        %v3036 = vunpack.c.h.b16 %v2928
        %v3037 = vpack.c.b16 %v2975, %v2973
        %v3038 = vpack.c.b16 %v2976, %v2974
        %v3039 = vpack.c.b16 %v2979, %v2977
        %v3040 = vpack.c.b16 %v2980, %v2978
        %v3041 = vpack.c.b16 %v2983, %v2981
        %v3042 = vpack.c.b16 %v2984, %v2982
        %v3043 = vpack.c.b16 %v2987, %v2985
        %v3044 = vpack.c.b16 %v2988, %v2986
        %v3045 = vpack.c.b16 %v2991, %v2989
        %v3046 = vpack.c.b16 %v2992, %v2990
        %v3047 = vpack.c.b16 %v2995, %v2993
        %v3048 = vpack.c.b16 %v2996, %v2994
        %v3049 = vpack.c.b16 %v2999, %v2997
        %v3050 = vpack.c.b16 %v3000, %v2998
        %v3051 = vpack.c.b16 %v3003, %v3001
        %v3052 = vpack.c.b16 %v3004, %v3002
        %v3053 = vpack.c.b16 %v3007, %v3005
        %v3054 = vpack.c.b16 %v3008, %v3006
        %v3055 = vpack.c.b16 %v3011, %v3009
        %v3056 = vpack.c.b16 %v3012, %v3010
        %v3057 = vpack.c.b16 %v3015, %v3013
        %v3058 = vpack.c.b16 %v3016, %v3014
        %v3059 = vpack.c.b16 %v3019, %v3017
        %v3060 = vpack.c.b16 %v3020, %v3018
        %v3061 = vpack.c.b16 %v3023, %v3021
        %v3062 = vpack.c.b16 %v3024, %v3022
        %v3063 = vpack.c.b16 %v3027, %v3025
        %v3064 = vpack.c.b16 %v3028, %v3026
        %v3065 = vpack.c.b16 %v3031, %v3029
        %v3066 = vpack.c.b16 %v3032, %v3030
        %v3067 = vpack.c.b16 %v3035, %v3033
        %v3068 = vpack.c.b16 %v3036, %v3034
        %3101 = vmatprep.subr.bf16.mxu0 %v3038
        %3102 = vmatpush1.bf16.msra.mxu0 %v3037
        %3103 = vmatprep.subr.bf16.mxu0 %v3040
        %3104 = vmatpush1.bf16.msra.mxu0 %v3039
        %3105 = vmatprep.subr.bf16.mxu0 %v3042
        %3106 = vmatpush1.bf16.msra.mxu0 %v3041
        %3107 = vmatprep.subr.bf16.mxu0 %v3044
        %3108 = vmatpush1.bf16.msra.mxu0 %v3043
        %3109 = vmatprep.subr.bf16.mxu0 %v3046
        %3110 = vmatpush1.bf16.msra.mxu0 %v3045
        %3111 = vmatprep.subr.bf16.mxu0 %v3048
        %3112 = vmatpush1.bf16.msra.mxu0 %v3047
        %3113 = vmatprep.subr.bf16.mxu0 %v3050
        %3114 = vmatpush1.bf16.msra.mxu0 %v3049
        %3115 = vmatprep.subr.bf16.mxu0 %v3052
        %3116 = vmatpush1.bf16.msra.mxu0 %v3051
        %3117 = vmatprep.subr.bf16.mxu0 %v3054
        %3118 = vmatpush1.bf16.msra.mxu0 %v3053
        %3119 = vmatprep.subr.bf16.mxu0 %v3056
        %3120 = vmatpush1.bf16.msra.mxu0 %v3055
        %3121 = vmatprep.subr.bf16.mxu0 %v3058
        %3122 = vmatpush1.bf16.msra.mxu0 %v3057
        %3123 = vmatprep.subr.bf16.mxu0 %v3060
        %3124 = vmatpush1.bf16.msra.mxu0 %v3059
        %3125 = vmatprep.subr.bf16.mxu0 %v3062
        %3126 = vmatpush1.bf16.msra.mxu0 %v3061
        %3127 = vmatprep.subr.bf16.mxu0 %v3064
        %3128 = vmatpush1.bf16.msra.mxu0 %v3063
        %3129 = vmatprep.subr.bf16.mxu0 %v3066
        %3130 = vmatpush1.bf16.msra.mxu0 %v3065
        %3131 = vmatprep.subr.bf16.mxu0 %v3068
        %3132 = vmatpush1.bf16.msra.mxu0 %v3067
        %3133 = vmatprep.mubr.bf16.mxu0 %v2894
        %3134 = vmatmul.mubr.bf16.gmra.mrb[0].mxu0 %v2893
        %v3135 = vpop.f32.mrb[0].mxu0
        %v3136 = vadd.f32 %v2934, %v3135
        %v3137 = vpop.f32.mrb[0].mxu0
        %v3138 = vadd.f32 %v2938, %v3137
        %v3139 = vpop.f32.mrb[0].mxu0
        %v3140 = vadd.f32 %v2934, %v3139
        %v3141 = vpop.f32.mrb[0].mxu0
        %v3142 = vadd.f32 %v2938, %v3141
        %3143 = vmatprep.mubr.bf16.mxu0 %v2896
        %3144 = vmatmul.mubr.bf16.gmra.mrb[0].mxu0 %v2895
        %v3145 = vpop.f32.mrb[0].mxu0
        %v3146 = vadd.f32 %v2934, %v3145
        %v3147 = vpop.f32.mrb[0].mxu0
        %v3148 = vadd.f32 %v2938, %v3147
        %v3149 = vpop.f32.mrb[0].mxu0
        %v3150 = vadd.f32 %v2934, %v3149
        %v3151 = vpop.f32.mrb[0].mxu0
        %v3152 = vadd.f32 %v2938, %v3151
        %3153 = vdwg.mxu0
        %v3154 = vadd.f32 %v1067, %v3136
        %v3155 = vadd.f32 %v1068, %v3138
        %v3156 = vadd.f32 %v1069, %v3140
        %v3157 = vadd.f32 %v1070, %v3142
        %v3158 = vadd.f32 %v1071, %v3146
        %v3159 = vadd.f32 %v1072, %v3148
        %v3160 = vadd.f32 %v1073, %v3150
        %v3161 = vadd.f32 %v1074, %v3152
        %v3162 = vld [vmem:[%s779] sm:$0x3]
        %v3163 = vld [vmem:[%s788] sm:$0x3]
        %v3164 = vadd.f32 %v3154, %v3155
        %3165 = vadd.xlane.f32.xlu0 %v3164
        %v3166 = vpop.xlane.xlu0 %3165
        %v3167 = vadd.f32 %v3156, %v3157
        %3168 = vadd.xlane.f32.xlu0 %v3167
        %v3169 = vpop.xlane.xlu0 %3168
        %v3170 = vadd.f32 %v3158, %v3159
        %3171 = vadd.xlane.f32.xlu0 %v3170
        %v3172 = vpop.xlane.xlu0 %3171
        %v3173 = vadd.f32 %v3160, %v3161
        %3174 = vadd.xlane.f32.xlu0 %v3173
        %v3175 = vpop.xlane.xlu0 %3174
        %v3176 = vrcp.pop 256.0
        %v3177 = vmul.f32 %v3166, %v3176
        %v3178 = vmul.f32 %v3169, %v3176
        %v3179 = vmul.f32 %v3172, %v3176
        %v3180 = vmul.f32 %v3175, %v3176
        %v3181 = vsub.f32 %v3154, %v3177
        %v3182 = vsub.f32 %v3155, %v3177
        %v3183 = vsub.f32 %v3156, %v3178
        %v3184 = vsub.f32 %v3157, %v3178
        %v3185 = vsub.f32 %v3158, %v3179
        %v3186 = vsub.f32 %v3159, %v3179
        %v3187 = vsub.f32 %v3160, %v3180
        %v3188 = vsub.f32 %v3161, %v3180
        %v3189 = vmul.f32 %v3181, %v3181
        %v3190 = vmul.f32 %v3182, %v3182
        %v3191 = vmul.f32 %v3183, %v3183
        %v3192 = vmul.f32 %v3184, %v3184
        %v3193 = vmul.f32 %v3185, %v3185
        %v3194 = vmul.f32 %v3186, %v3186
        %v3195 = vmul.f32 %v3187, %v3187
        %v3196 = vmul.f32 %v3188, %v3188
        %v3197 = vadd.f32 %v3189, %v3190
        %3198 = vadd.xlane.f32.xlu0 %v3197
        %v3199 = vpop.xlane.xlu0 %3198
        %v3200 = vadd.f32 %v3191, %v3192
        %3201 = vadd.xlane.f32.xlu0 %v3200
        %v3202 = vpop.xlane.xlu0 %3201
        %v3203 = vadd.f32 %v3193, %v3194
        %3204 = vadd.xlane.f32.xlu0 %v3203
        %v3205 = vpop.xlane.xlu0 %3204
        %v3206 = vadd.f32 %v3195, %v3196
        %3207 = vadd.xlane.f32.xlu0 %v3206
        %v3208 = vpop.xlane.xlu0 %3207
        %v3209 = vmul.f32 %v3199, %v3176
        %v3210 = vmul.f32 %v3202, %v3176
        %v3211 = vmul.f32 %v3205, %v3176
        %v3212 = vmul.f32 %v3208, %v3176
        %v3213 = vadd.f32 %v3209, 1e-12
        %v3214 = vadd.f32 %v3210, 1e-12
        %v3215 = vadd.f32 %v3211, 1e-12
        %v3216 = vadd.f32 %v3212, 1e-12
        %v3217 = vrsqrt.pop %v3213
        %v3218 = vrsqrt.pop %v3214
        %v3219 = vrsqrt.pop %v3215
        %v3220 = vrsqrt.pop %v3216
        %v3221 = vmul.f32 %v3181, %v3217
        %v3222 = vmul.f32 %v3182, %v3217
        %v3223 = vmul.f32 %v3183, %v3218
        %v3224 = vmul.f32 %v3184, %v3218
        %v3225 = vmul.f32 %v3185, %v3219
        %v3226 = vmul.f32 %v3186, %v3219
        %v3227 = vmul.f32 %v3187, %v3220
        %v3228 = vmul.f32 %v3188, %v3220
        %v3230 = vlaneseq
        %v3231 = vshrl.u32 %v3230, 7
        %v3232 = vsub.s32 0, %v3231
        %v3233 = vrot.slane %v3162, %v3232
        %v3234 = vlaneseq
        %v3235 = vshrl.u32 %v3234, 7
        %v3236 = vsub.s32 1, %v3235
        %v3237 = vrot.slane %v3162, %v3236
        %v3240 = vmul.f32 %v3221, %v3233
        %v3241 = vmul.f32 %v3222, %v3237
        %v3242 = vmul.f32 %v3223, %v3233
        %v3243 = vmul.f32 %v3224, %v3237
        %v3244 = vmul.f32 %v3225, %v3233
        %v3245 = vmul.f32 %v3226, %v3237
        %v3246 = vmul.f32 %v3227, %v3233
        %v3247 = vmul.f32 %v3228, %v3237
        %v3249 = vlaneseq
        %v3250 = vshrl.u32 %v3249, 7
        %v3251 = vsub.s32 0, %v3250
        %v3252 = vrot.slane %v3163, %v3251
        %v3253 = vlaneseq
        %v3254 = vshrl.u32 %v3253, 7
        %v3255 = vsub.s32 1, %v3254
        %v3256 = vrot.slane %v3163, %v3255
        %v3259 = vadd.f32 %v3240, %v3252
        %v3260 = vadd.f32 %v3241, %v3256
        %v3261 = vadd.f32 %v3242, %v3252
        %v3262 = vadd.f32 %v3243, %v3256
        %v3263 = vadd.f32 %v3244, %v3252
        %v3264 = vadd.f32 %v3245, %v3256
        %v3265 = vadd.f32 %v3246, %v3252
        %v3266 = vadd.f32 %v3247, %v3256
        %v3267 = vpack.c.bf16 %v3261, %v3259
        %v3268 = vpack.c.bf16 %v3262, %v3260
        %v3269 = vpack.c.bf16 %v3265, %v3263
        %v3270 = vpack.c.bf16 %v3266, %v3264
        %v3271 = vld [vmem:[%s797] sm:$0xff]
        %v3272 = vld [vmem:[%s797 + $0x8] sm:$0xff]
        %v3273 = vld [vmem:[%s797 + $0x10] sm:$0xff]
        %v3274 = vld [vmem:[%s797 + $0x18] sm:$0xff]
        %v3275 = vld [vmem:[%s797 + $0x20] sm:$0xff]
        %v3276 = vld [vmem:[%s797 + $0x28] sm:$0xff]
        %v3277 = vld [vmem:[%s797 + $0x30] sm:$0xff]
        %v3278 = vld [vmem:[%s797 + $0x38] sm:$0xff]
        %v3279 = vld [vmem:[%s797 + $0x40] sm:$0xff]
        %v3280 = vld [vmem:[%s797 + $0x48] sm:$0xff]
        %v3281 = vld [vmem:[%s797 + $0x50] sm:$0xff]
        %v3282 = vld [vmem:[%s797 + $0x58] sm:$0xff]
        %v3283 = vld [vmem:[%s797 + $0x60] sm:$0xff]
        %v3284 = vld [vmem:[%s797 + $0x68] sm:$0xff]
        %v3285 = vld [vmem:[%s797 + $0x70] sm:$0xff]
        %v3286 = vld [vmem:[%s797 + $0x78] sm:$0xff]
        %v3287 = vld [vmem:[%s797 + $0x80] sm:$0xff]
        %v3288 = vld [vmem:[%s797 + $0x88] sm:$0xff]
        %v3289 = vld [vmem:[%s797 + $0x90] sm:$0xff]
        %v3290 = vld [vmem:[%s797 + $0x98] sm:$0xff]
        %v3291 = vld [vmem:[%s797 + $0xa0] sm:$0xff]
        %v3292 = vld [vmem:[%s797 + $0xa8] sm:$0xff]
        %v3293 = vld [vmem:[%s797 + $0xb0] sm:$0xff]
        %v3294 = vld [vmem:[%s797 + $0xb8] sm:$0xff]
        %v3295 = vld [vmem:[%s797 + $0xc0] sm:$0xff]
        %v3296 = vld [vmem:[%s797 + $0xc8] sm:$0xff]
        %v3297 = vld [vmem:[%s797 + $0xd0] sm:$0xff]
        %v3298 = vld [vmem:[%s797 + $0xd8] sm:$0xff]
        %v3299 = vld [vmem:[%s797 + $0xe0] sm:$0xff]
        %v3300 = vld [vmem:[%s797 + $0xe8] sm:$0xff]
        %v3301 = vld [vmem:[%s797 + $0xf0] sm:$0xff]
        %v3302 = vld [vmem:[%s797 + $0xf8] sm:$0xff]
        %v3303 = vld [vmem:[%s797 + $0x100] sm:$0xff]
        %v3304 = vld [vmem:[%s797 + $0x108] sm:$0xff]
        %v3305 = vld [vmem:[%s797 + $0x110] sm:$0xff]
        %v3306 = vld [vmem:[%s797 + $0x118] sm:$0xff]
        %v3307 = vld [vmem:[%s797 + $0x120] sm:$0xff]
        %v3308 = vld [vmem:[%s797 + $0x128] sm:$0xff]
        %v3309 = vld [vmem:[%s797 + $0x130] sm:$0xff]
        %v3310 = vld [vmem:[%s797 + $0x138] sm:$0xff]
        %v3311 = vld [vmem:[%s797 + $0x140] sm:$0xff]
        %v3312 = vld [vmem:[%s797 + $0x148] sm:$0xff]
        %v3313 = vld [vmem:[%s797 + $0x150] sm:$0xff]
        %v3314 = vld [vmem:[%s797 + $0x158] sm:$0xff]
        %v3315 = vld [vmem:[%s797 + $0x160] sm:$0xff]
        %v3316 = vld [vmem:[%s797 + $0x168] sm:$0xff]
        %v3317 = vld [vmem:[%s797 + $0x170] sm:$0xff]
        %v3318 = vld [vmem:[%s797 + $0x178] sm:$0xff]
        %v3319 = vld [vmem:[%s797 + $0x180] sm:$0xff]
        %v3320 = vld [vmem:[%s797 + $0x188] sm:$0xff]
        %v3321 = vld [vmem:[%s797 + $0x190] sm:$0xff]
        %v3322 = vld [vmem:[%s797 + $0x198] sm:$0xff]
        %v3323 = vld [vmem:[%s797 + $0x1a0] sm:$0xff]
        %v3324 = vld [vmem:[%s797 + $0x1a8] sm:$0xff]
        %v3325 = vld [vmem:[%s797 + $0x1b0] sm:$0xff]
        %v3326 = vld [vmem:[%s797 + $0x1b8] sm:$0xff]
        %v3327 = vld [vmem:[%s797 + $0x1c0] sm:$0xff]
        %v3328 = vld [vmem:[%s797 + $0x1c8] sm:$0xff]
        %v3329 = vld [vmem:[%s797 + $0x1d0] sm:$0xff]
        %v3330 = vld [vmem:[%s797 + $0x1d8] sm:$0xff]
        %v3331 = vld [vmem:[%s797 + $0x1e0] sm:$0xff]
        %v3332 = vld [vmem:[%s797 + $0x1e8] sm:$0xff]
        %v3333 = vld [vmem:[%s797 + $0x1f0] sm:$0xff]
        %v3334 = vld [vmem:[%s797 + $0x1f8] sm:$0xff]
        %v3335 = vld [vmem:[%s797 + $0x200] sm:$0xff]
        %v3336 = vld [vmem:[%s797 + $0x208] sm:$0xff]
        %v3337 = vld [vmem:[%s797 + $0x210] sm:$0xff]
        %v3338 = vld [vmem:[%s797 + $0x218] sm:$0xff]
        %v3339 = vld [vmem:[%s797 + $0x220] sm:$0xff]
        %v3340 = vld [vmem:[%s797 + $0x228] sm:$0xff]
        %v3341 = vld [vmem:[%s797 + $0x230] sm:$0xff]
        %v3342 = vld [vmem:[%s797 + $0x238] sm:$0xff]
        %v3343 = vld [vmem:[%s797 + $0x240] sm:$0xff]
        %v3344 = vld [vmem:[%s797 + $0x248] sm:$0xff]
        %v3345 = vld [vmem:[%s797 + $0x250] sm:$0xff]
        %v3346 = vld [vmem:[%s797 + $0x258] sm:$0xff]
        %v3347 = vld [vmem:[%s797 + $0x260] sm:$0xff]
        %v3348 = vld [vmem:[%s797 + $0x268] sm:$0xff]
        %v3349 = vld [vmem:[%s797 + $0x270] sm:$0xff]
        %v3350 = vld [vmem:[%s797 + $0x278] sm:$0xff]
        %v3351 = vld [vmem:[%s797 + $0x280] sm:$0xff]
        %v3352 = vld [vmem:[%s797 + $0x288] sm:$0xff]
        %v3353 = vld [vmem:[%s797 + $0x290] sm:$0xff]
        %v3354 = vld [vmem:[%s797 + $0x298] sm:$0xff]
        %v3355 = vld [vmem:[%s797 + $0x2a0] sm:$0xff]
        %v3356 = vld [vmem:[%s797 + $0x2a8] sm:$0xff]
        %v3357 = vld [vmem:[%s797 + $0x2b0] sm:$0xff]
        %v3358 = vld [vmem:[%s797 + $0x2b8] sm:$0xff]
        %v3359 = vld [vmem:[%s797 + $0x2c0] sm:$0xff]
        %v3360 = vld [vmem:[%s797 + $0x2c8] sm:$0xff]
        %v3361 = vld [vmem:[%s797 + $0x2d0] sm:$0xff]
        %v3362 = vld [vmem:[%s797 + $0x2d8] sm:$0xff]
        %v3363 = vld [vmem:[%s797 + $0x2e0] sm:$0xff]
        %v3364 = vld [vmem:[%s797 + $0x2e8] sm:$0xff]
        %v3365 = vld [vmem:[%s797 + $0x2f0] sm:$0xff]
        %v3366 = vld [vmem:[%s797 + $0x2f8] sm:$0xff]
        %v3367 = vld [vmem:[%s797 + $0x300] sm:$0xff]
        %v3368 = vld [vmem:[%s797 + $0x308] sm:$0xff]
        %v3369 = vld [vmem:[%s797 + $0x310] sm:$0xff]
        %v3370 = vld [vmem:[%s797 + $0x318] sm:$0xff]
        %v3371 = vld [vmem:[%s797 + $0x320] sm:$0xff]
        %v3372 = vld [vmem:[%s797 + $0x328] sm:$0xff]
        %v3373 = vld [vmem:[%s797 + $0x330] sm:$0xff]
        %v3374 = vld [vmem:[%s797 + $0x338] sm:$0xff]
        %v3375 = vld [vmem:[%s797 + $0x340] sm:$0xff]
        %v3376 = vld [vmem:[%s797 + $0x348] sm:$0xff]
        %v3377 = vld [vmem:[%s797 + $0x350] sm:$0xff]
        %v3378 = vld [vmem:[%s797 + $0x358] sm:$0xff]
        %v3379 = vld [vmem:[%s797 + $0x360] sm:$0xff]
        %v3380 = vld [vmem:[%s797 + $0x368] sm:$0xff]
        %v3381 = vld [vmem:[%s797 + $0x370] sm:$0xff]
        %v3382 = vld [vmem:[%s797 + $0x378] sm:$0xff]
        %v3383 = vld [vmem:[%s797 + $0x380] sm:$0xff]
        %v3384 = vld [vmem:[%s797 + $0x388] sm:$0xff]
        %v3385 = vld [vmem:[%s797 + $0x390] sm:$0xff]
        %v3386 = vld [vmem:[%s797 + $0x398] sm:$0xff]
        %v3387 = vld [vmem:[%s797 + $0x3a0] sm:$0xff]
        %v3388 = vld [vmem:[%s797 + $0x3a8] sm:$0xff]
        %v3389 = vld [vmem:[%s797 + $0x3b0] sm:$0xff]
        %v3390 = vld [vmem:[%s797 + $0x3b8] sm:$0xff]
        %v3391 = vld [vmem:[%s797 + $0x3c0] sm:$0xff]
        %v3392 = vld [vmem:[%s797 + $0x3c8] sm:$0xff]
        %v3393 = vld [vmem:[%s797 + $0x3d0] sm:$0xff]
        %v3394 = vld [vmem:[%s797 + $0x3d8] sm:$0xff]
        %v3395 = vld [vmem:[%s797 + $0x3e0] sm:$0xff]
        %v3396 = vld [vmem:[%s797 + $0x3e8] sm:$0xff]
        %v3397 = vld [vmem:[%s797 + $0x3f0] sm:$0xff]
        %v3398 = vld [vmem:[%s797 + $0x3f8] sm:$0xff]
        %v3399 = vld [vmem:[%s806] sm:$0xff]
        %v3401 = vlaneseq
        %v3402 = vshrl.u32 %v3401, 7
        %v3403 = vsub.s32 0, %v3402
        %v3404 = vrot.slane %v3399, %v3403
        %v3405 = vlaneseq
        %v3406 = vshrl.u32 %v3405, 7
        %v3407 = vsub.s32 1, %v3406
        %v3408 = vrot.slane %v3399, %v3407
        %v3409 = vlaneseq
        %v3410 = vshrl.u32 %v3409, 7
        %v3411 = vsub.s32 2, %v3410
        %v3412 = vrot.slane %v3399, %v3411
        %v3413 = vlaneseq
        %v3414 = vshrl.u32 %v3413, 7
        %v3415 = vsub.s32 3, %v3414
        %v3416 = vrot.slane %v3399, %v3415
        %v3417 = vlaneseq
        %v3418 = vshrl.u32 %v3417, 7
        %v3419 = vsub.s32 4, %v3418
        %v3420 = vrot.slane %v3399, %v3419
        %v3421 = vlaneseq
        %v3422 = vshrl.u32 %v3421, 7
        %v3423 = vsub.s32 5, %v3422
        %v3424 = vrot.slane %v3399, %v3423
        %v3425 = vlaneseq
        %v3426 = vshrl.u32 %v3425, 7
        %v3427 = vsub.s32 6, %v3426
        %v3428 = vrot.slane %v3399, %v3427
        %v3429 = vlaneseq
        %v3430 = vshrl.u32 %v3429, 7
        %v3431 = vsub.s32 7, %v3430
        %v3432 = vrot.slane %v3399, %v3431
        %v3569 = vunpack.c.l.b16 %v3271
        %v3570 = vunpack.c.h.b16 %v3271
        %v3571 = vunpack.c.l.b16 %v3272
        %v3572 = vunpack.c.h.b16 %v3272
        %v3573 = vunpack.c.l.b16 %v3273
        %v3574 = vunpack.c.h.b16 %v3273
        %v3575 = vunpack.c.l.b16 %v3274
        %v3576 = vunpack.c.h.b16 %v3274
        %v3577 = vunpack.c.l.b16 %v3275
        %v3578 = vunpack.c.h.b16 %v3275
        %v3579 = vunpack.c.l.b16 %v3276
        %v3580 = vunpack.c.h.b16 %v3276
        %v3581 = vunpack.c.l.b16 %v3277
        %v3582 = vunpack.c.h.b16 %v3277
        %v3583 = vunpack.c.l.b16 %v3278
        %v3584 = vunpack.c.h.b16 %v3278
        %v3585 = vunpack.c.l.b16 %v3279
        %v3586 = vunpack.c.h.b16 %v3279
        %v3587 = vunpack.c.l.b16 %v3280
        %v3588 = vunpack.c.h.b16 %v3280
        %v3589 = vunpack.c.l.b16 %v3281
        %v3590 = vunpack.c.h.b16 %v3281
        %v3591 = vunpack.c.l.b16 %v3282
        %v3592 = vunpack.c.h.b16 %v3282
        %v3593 = vunpack.c.l.b16 %v3283
        %v3594 = vunpack.c.h.b16 %v3283
        %v3595 = vunpack.c.l.b16 %v3284
        %v3596 = vunpack.c.h.b16 %v3284
        %v3597 = vunpack.c.l.b16 %v3285
        %v3598 = vunpack.c.h.b16 %v3285
        %v3599 = vunpack.c.l.b16 %v3286
        %v3600 = vunpack.c.h.b16 %v3286
        %v3601 = vunpack.c.l.b16 %v3287
        %v3602 = vunpack.c.h.b16 %v3287
        %v3603 = vunpack.c.l.b16 %v3288
        %v3604 = vunpack.c.h.b16 %v3288
        %v3605 = vunpack.c.l.b16 %v3289
        %v3606 = vunpack.c.h.b16 %v3289
        %v3607 = vunpack.c.l.b16 %v3290
        %v3608 = vunpack.c.h.b16 %v3290
        %v3609 = vunpack.c.l.b16 %v3291
        %v3610 = vunpack.c.h.b16 %v3291
        %v3611 = vunpack.c.l.b16 %v3292
        %v3612 = vunpack.c.h.b16 %v3292
        %v3613 = vunpack.c.l.b16 %v3293
        %v3614 = vunpack.c.h.b16 %v3293
        %v3615 = vunpack.c.l.b16 %v3294
        %v3616 = vunpack.c.h.b16 %v3294
        %v3617 = vunpack.c.l.b16 %v3295
        %v3618 = vunpack.c.h.b16 %v3295
        %v3619 = vunpack.c.l.b16 %v3296
        %v3620 = vunpack.c.h.b16 %v3296
        %v3621 = vunpack.c.l.b16 %v3297
        %v3622 = vunpack.c.h.b16 %v3297
        %v3623 = vunpack.c.l.b16 %v3298
        %v3624 = vunpack.c.h.b16 %v3298
        %v3625 = vunpack.c.l.b16 %v3299
        %v3626 = vunpack.c.h.b16 %v3299
        %v3627 = vunpack.c.l.b16 %v3300
        %v3628 = vunpack.c.h.b16 %v3300
        %v3629 = vunpack.c.l.b16 %v3301
        %v3630 = vunpack.c.h.b16 %v3301
        %v3631 = vunpack.c.l.b16 %v3302
        %v3632 = vunpack.c.h.b16 %v3302
        %v3633 = vunpack.c.l.b16 %v3303
        %v3634 = vunpack.c.h.b16 %v3303
        %v3635 = vunpack.c.l.b16 %v3304
        %v3636 = vunpack.c.h.b16 %v3304
        %v3637 = vunpack.c.l.b16 %v3305
        %v3638 = vunpack.c.h.b16 %v3305
        %v3639 = vunpack.c.l.b16 %v3306
        %v3640 = vunpack.c.h.b16 %v3306
        %v3641 = vunpack.c.l.b16 %v3307
        %v3642 = vunpack.c.h.b16 %v3307
        %v3643 = vunpack.c.l.b16 %v3308
        %v3644 = vunpack.c.h.b16 %v3308
        %v3645 = vunpack.c.l.b16 %v3309
        %v3646 = vunpack.c.h.b16 %v3309
        %v3647 = vunpack.c.l.b16 %v3310
        %v3648 = vunpack.c.h.b16 %v3310
        %v3649 = vunpack.c.l.b16 %v3311
        %v3650 = vunpack.c.h.b16 %v3311
        %v3651 = vunpack.c.l.b16 %v3312
        %v3652 = vunpack.c.h.b16 %v3312
        %v3653 = vunpack.c.l.b16 %v3313
        %v3654 = vunpack.c.h.b16 %v3313
        %v3655 = vunpack.c.l.b16 %v3314
        %v3656 = vunpack.c.h.b16 %v3314
        %v3657 = vunpack.c.l.b16 %v3315
        %v3658 = vunpack.c.h.b16 %v3315
        %v3659 = vunpack.c.l.b16 %v3316
        %v3660 = vunpack.c.h.b16 %v3316
        %v3661 = vunpack.c.l.b16 %v3317
        %v3662 = vunpack.c.h.b16 %v3317
        %v3663 = vunpack.c.l.b16 %v3318
        %v3664 = vunpack.c.h.b16 %v3318
        %v3665 = vunpack.c.l.b16 %v3319
        %v3666 = vunpack.c.h.b16 %v3319
        %v3667 = vunpack.c.l.b16 %v3320
        %v3668 = vunpack.c.h.b16 %v3320
        %v3669 = vunpack.c.l.b16 %v3321
        %v3670 = vunpack.c.h.b16 %v3321
        %v3671 = vunpack.c.l.b16 %v3322
        %v3672 = vunpack.c.h.b16 %v3322
        %v3673 = vunpack.c.l.b16 %v3323
        %v3674 = vunpack.c.h.b16 %v3323
        %v3675 = vunpack.c.l.b16 %v3324
        %v3676 = vunpack.c.h.b16 %v3324
        %v3677 = vunpack.c.l.b16 %v3325
        %v3678 = vunpack.c.h.b16 %v3325
        %v3679 = vunpack.c.l.b16 %v3326
        %v3680 = vunpack.c.h.b16 %v3326
        %v3681 = vunpack.c.l.b16 %v3327
        %v3682 = vunpack.c.h.b16 %v3327
        %v3683 = vunpack.c.l.b16 %v3328
        %v3684 = vunpack.c.h.b16 %v3328
        %v3685 = vunpack.c.l.b16 %v3329
        %v3686 = vunpack.c.h.b16 %v3329
        %v3687 = vunpack.c.l.b16 %v3330
        %v3688 = vunpack.c.h.b16 %v3330
        %v3689 = vunpack.c.l.b16 %v3331
        %v3690 = vunpack.c.h.b16 %v3331
        %v3691 = vunpack.c.l.b16 %v3332
        %v3692 = vunpack.c.h.b16 %v3332
        %v3693 = vunpack.c.l.b16 %v3333
        %v3694 = vunpack.c.h.b16 %v3333
        %v3695 = vunpack.c.l.b16 %v3334
        %v3696 = vunpack.c.h.b16 %v3334
        %v3697 = vunpack.c.l.b16 %v3335
        %v3698 = vunpack.c.h.b16 %v3335
        %v3699 = vunpack.c.l.b16 %v3336
        %v3700 = vunpack.c.h.b16 %v3336
        %v3701 = vunpack.c.l.b16 %v3337
        %v3702 = vunpack.c.h.b16 %v3337
        %v3703 = vunpack.c.l.b16 %v3338
        %v3704 = vunpack.c.h.b16 %v3338
        %v3705 = vunpack.c.l.b16 %v3339
        %v3706 = vunpack.c.h.b16 %v3339
        %v3707 = vunpack.c.l.b16 %v3340
        %v3708 = vunpack.c.h.b16 %v3340
        %v3709 = vunpack.c.l.b16 %v3341
        %v3710 = vunpack.c.h.b16 %v3341
        %v3711 = vunpack.c.l.b16 %v3342
        %v3712 = vunpack.c.h.b16 %v3342
        %v3713 = vunpack.c.l.b16 %v3343
        %v3714 = vunpack.c.h.b16 %v3343
        %v3715 = vunpack.c.l.b16 %v3344
        %v3716 = vunpack.c.h.b16 %v3344
        %v3717 = vunpack.c.l.b16 %v3345
        %v3718 = vunpack.c.h.b16 %v3345
        %v3719 = vunpack.c.l.b16 %v3346
        %v3720 = vunpack.c.h.b16 %v3346
        %v3721 = vunpack.c.l.b16 %v3347
        %v3722 = vunpack.c.h.b16 %v3347
        %v3723 = vunpack.c.l.b16 %v3348
        %v3724 = vunpack.c.h.b16 %v3348
        %v3725 = vunpack.c.l.b16 %v3349
        %v3726 = vunpack.c.h.b16 %v3349
        %v3727 = vunpack.c.l.b16 %v3350
        %v3728 = vunpack.c.h.b16 %v3350
        %v3729 = vunpack.c.l.b16 %v3351
        %v3730 = vunpack.c.h.b16 %v3351
        %v3731 = vunpack.c.l.b16 %v3352
        %v3732 = vunpack.c.h.b16 %v3352
        %v3733 = vunpack.c.l.b16 %v3353
        %v3734 = vunpack.c.h.b16 %v3353
        %v3735 = vunpack.c.l.b16 %v3354
        %v3736 = vunpack.c.h.b16 %v3354
        %v3737 = vunpack.c.l.b16 %v3355
        %v3738 = vunpack.c.h.b16 %v3355
        %v3739 = vunpack.c.l.b16 %v3356
        %v3740 = vunpack.c.h.b16 %v3356
        %v3741 = vunpack.c.l.b16 %v3357
        %v3742 = vunpack.c.h.b16 %v3357
        %v3743 = vunpack.c.l.b16 %v3358
        %v3744 = vunpack.c.h.b16 %v3358
        %v3745 = vunpack.c.l.b16 %v3359
        %v3746 = vunpack.c.h.b16 %v3359
        %v3747 = vunpack.c.l.b16 %v3360
        %v3748 = vunpack.c.h.b16 %v3360
        %v3749 = vunpack.c.l.b16 %v3361
        %v3750 = vunpack.c.h.b16 %v3361
        %v3751 = vunpack.c.l.b16 %v3362
        %v3752 = vunpack.c.h.b16 %v3362
        %v3753 = vunpack.c.l.b16 %v3363
        %v3754 = vunpack.c.h.b16 %v3363
        %v3755 = vunpack.c.l.b16 %v3364
        %v3756 = vunpack.c.h.b16 %v3364
        %v3757 = vunpack.c.l.b16 %v3365
        %v3758 = vunpack.c.h.b16 %v3365
        %v3759 = vunpack.c.l.b16 %v3366
        %v3760 = vunpack.c.h.b16 %v3366
        %v3761 = vunpack.c.l.b16 %v3367
        %v3762 = vunpack.c.h.b16 %v3367
        %v3763 = vunpack.c.l.b16 %v3368
        %v3764 = vunpack.c.h.b16 %v3368
        %v3765 = vunpack.c.l.b16 %v3369
        %v3766 = vunpack.c.h.b16 %v3369
        %v3767 = vunpack.c.l.b16 %v3370
        %v3768 = vunpack.c.h.b16 %v3370
        %v3769 = vunpack.c.l.b16 %v3371
        %v3770 = vunpack.c.h.b16 %v3371
        %v3771 = vunpack.c.l.b16 %v3372
        %v3772 = vunpack.c.h.b16 %v3372
        %v3773 = vunpack.c.l.b16 %v3373
        %v3774 = vunpack.c.h.b16 %v3373
        %v3775 = vunpack.c.l.b16 %v3374
        %v3776 = vunpack.c.h.b16 %v3374
        %v3777 = vunpack.c.l.b16 %v3375
        %v3778 = vunpack.c.h.b16 %v3375
        %v3779 = vunpack.c.l.b16 %v3376
        %v3780 = vunpack.c.h.b16 %v3376
        %v3781 = vunpack.c.l.b16 %v3377
        %v3782 = vunpack.c.h.b16 %v3377
        %v3783 = vunpack.c.l.b16 %v3378
        %v3784 = vunpack.c.h.b16 %v3378
        %v3785 = vunpack.c.l.b16 %v3379
        %v3786 = vunpack.c.h.b16 %v3379
        %v3787 = vunpack.c.l.b16 %v3380
        %v3788 = vunpack.c.h.b16 %v3380
        %v3789 = vunpack.c.l.b16 %v3381
        %v3790 = vunpack.c.h.b16 %v3381
        %v3791 = vunpack.c.l.b16 %v3382
        %v3792 = vunpack.c.h.b16 %v3382
        %v3793 = vunpack.c.l.b16 %v3383
        %v3794 = vunpack.c.h.b16 %v3383
        %v3795 = vunpack.c.l.b16 %v3384
        %v3796 = vunpack.c.h.b16 %v3384
        %v3797 = vunpack.c.l.b16 %v3385
        %v3798 = vunpack.c.h.b16 %v3385
        %v3799 = vunpack.c.l.b16 %v3386
        %v3800 = vunpack.c.h.b16 %v3386
        %v3801 = vunpack.c.l.b16 %v3387
        %v3802 = vunpack.c.h.b16 %v3387
        %v3803 = vunpack.c.l.b16 %v3388
        %v3804 = vunpack.c.h.b16 %v3388
        %v3805 = vunpack.c.l.b16 %v3389
        %v3806 = vunpack.c.h.b16 %v3389
        %v3807 = vunpack.c.l.b16 %v3390
        %v3808 = vunpack.c.h.b16 %v3390
        %v3809 = vunpack.c.l.b16 %v3391
        %v3810 = vunpack.c.h.b16 %v3391
        %v3811 = vunpack.c.l.b16 %v3392
        %v3812 = vunpack.c.h.b16 %v3392
        %v3813 = vunpack.c.l.b16 %v3393
        %v3814 = vunpack.c.h.b16 %v3393
        %v3815 = vunpack.c.l.b16 %v3394
        %v3816 = vunpack.c.h.b16 %v3394
        %v3817 = vunpack.c.l.b16 %v3395
        %v3818 = vunpack.c.h.b16 %v3395
        %v3819 = vunpack.c.l.b16 %v3396
        %v3820 = vunpack.c.h.b16 %v3396
        %v3821 = vunpack.c.l.b16 %v3397
        %v3822 = vunpack.c.h.b16 %v3397
        %v3823 = vunpack.c.l.b16 %v3398
        %v3824 = vunpack.c.h.b16 %v3398
        %v3825 = vpack.c.b16 %v3577, %v3569
        %v3826 = vpack.c.b16 %v3578, %v3570
        %v3827 = vpack.c.b16 %v3579, %v3571
        %v3828 = vpack.c.b16 %v3580, %v3572
        %v3829 = vpack.c.b16 %v3581, %v3573
        %v3830 = vpack.c.b16 %v3582, %v3574
        %v3831 = vpack.c.b16 %v3583, %v3575
        %v3832 = vpack.c.b16 %v3584, %v3576
        %v3833 = vpack.c.b16 %v3593, %v3585
        %v3834 = vpack.c.b16 %v3594, %v3586
        %v3835 = vpack.c.b16 %v3595, %v3587
        %v3836 = vpack.c.b16 %v3596, %v3588
        %v3837 = vpack.c.b16 %v3597, %v3589
        %v3838 = vpack.c.b16 %v3598, %v3590
        %v3839 = vpack.c.b16 %v3599, %v3591
        %v3840 = vpack.c.b16 %v3600, %v3592
        %v3841 = vpack.c.b16 %v3609, %v3601
        %v3842 = vpack.c.b16 %v3610, %v3602
        %v3843 = vpack.c.b16 %v3611, %v3603
        %v3844 = vpack.c.b16 %v3612, %v3604
        %v3845 = vpack.c.b16 %v3613, %v3605
        %v3846 = vpack.c.b16 %v3614, %v3606
        %v3847 = vpack.c.b16 %v3615, %v3607
        %v3848 = vpack.c.b16 %v3616, %v3608
        %v3849 = vpack.c.b16 %v3625, %v3617
        %v3850 = vpack.c.b16 %v3626, %v3618
        %v3851 = vpack.c.b16 %v3627, %v3619
        %v3852 = vpack.c.b16 %v3628, %v3620
        %v3853 = vpack.c.b16 %v3629, %v3621
        %v3854 = vpack.c.b16 %v3630, %v3622
        %v3855 = vpack.c.b16 %v3631, %v3623
        %v3856 = vpack.c.b16 %v3632, %v3624
        %v3857 = vpack.c.b16 %v3641, %v3633
        %v3858 = vpack.c.b16 %v3642, %v3634
        %v3859 = vpack.c.b16 %v3643, %v3635
        %v3860 = vpack.c.b16 %v3644, %v3636
        %v3861 = vpack.c.b16 %v3645, %v3637
        %v3862 = vpack.c.b16 %v3646, %v3638
        %v3863 = vpack.c.b16 %v3647, %v3639
        %v3864 = vpack.c.b16 %v3648, %v3640
        %v3865 = vpack.c.b16 %v3657, %v3649
        %v3866 = vpack.c.b16 %v3658, %v3650
        %v3867 = vpack.c.b16 %v3659, %v3651
        %v3868 = vpack.c.b16 %v3660, %v3652
        %v3869 = vpack.c.b16 %v3661, %v3653
        %v3870 = vpack.c.b16 %v3662, %v3654
        %v3871 = vpack.c.b16 %v3663, %v3655
        %v3872 = vpack.c.b16 %v3664, %v3656
        %v3873 = vpack.c.b16 %v3673, %v3665
        %v3874 = vpack.c.b16 %v3674, %v3666
        %v3875 = vpack.c.b16 %v3675, %v3667
        %v3876 = vpack.c.b16 %v3676, %v3668
        %v3877 = vpack.c.b16 %v3677, %v3669
        %v3878 = vpack.c.b16 %v3678, %v3670
        %v3879 = vpack.c.b16 %v3679, %v3671
        %v3880 = vpack.c.b16 %v3680, %v3672
        %v3881 = vpack.c.b16 %v3689, %v3681
        %v3882 = vpack.c.b16 %v3690, %v3682
        %v3883 = vpack.c.b16 %v3691, %v3683
        %v3884 = vpack.c.b16 %v3692, %v3684
        %v3885 = vpack.c.b16 %v3693, %v3685
        %v3886 = vpack.c.b16 %v3694, %v3686
        %v3887 = vpack.c.b16 %v3695, %v3687
        %v3888 = vpack.c.b16 %v3696, %v3688
        %v3889 = vpack.c.b16 %v3705, %v3697
        %v3890 = vpack.c.b16 %v3706, %v3698
        %v3891 = vpack.c.b16 %v3707, %v3699
        %v3892 = vpack.c.b16 %v3708, %v3700
        %v3893 = vpack.c.b16 %v3709, %v3701
        %v3894 = vpack.c.b16 %v3710, %v3702
        %v3895 = vpack.c.b16 %v3711, %v3703
        %v3896 = vpack.c.b16 %v3712, %v3704
        %v3897 = vpack.c.b16 %v3721, %v3713
        %v3898 = vpack.c.b16 %v3722, %v3714
        %v3899 = vpack.c.b16 %v3723, %v3715
        %v3900 = vpack.c.b16 %v3724, %v3716
        %v3901 = vpack.c.b16 %v3725, %v3717
        %v3902 = vpack.c.b16 %v3726, %v3718
        %v3903 = vpack.c.b16 %v3727, %v3719
        %v3904 = vpack.c.b16 %v3728, %v3720
        %v3905 = vpack.c.b16 %v3737, %v3729
        %v3906 = vpack.c.b16 %v3738, %v3730
        %v3907 = vpack.c.b16 %v3739, %v3731
        %v3908 = vpack.c.b16 %v3740, %v3732
        %v3909 = vpack.c.b16 %v3741, %v3733
        %v3910 = vpack.c.b16 %v3742, %v3734
        %v3911 = vpack.c.b16 %v3743, %v3735
        %v3912 = vpack.c.b16 %v3744, %v3736
        %v3913 = vpack.c.b16 %v3753, %v3745
        %v3914 = vpack.c.b16 %v3754, %v3746
        %v3915 = vpack.c.b16 %v3755, %v3747
        %v3916 = vpack.c.b16 %v3756, %v3748
        %v3917 = vpack.c.b16 %v3757, %v3749
        %v3918 = vpack.c.b16 %v3758, %v3750
        %v3919 = vpack.c.b16 %v3759, %v3751
        %v3920 = vpack.c.b16 %v3760, %v3752
        %v3921 = vpack.c.b16 %v3769, %v3761
        %v3922 = vpack.c.b16 %v3770, %v3762
        %v3923 = vpack.c.b16 %v3771, %v3763
        %v3924 = vpack.c.b16 %v3772, %v3764
        %v3925 = vpack.c.b16 %v3773, %v3765
        %v3926 = vpack.c.b16 %v3774, %v3766
        %v3927 = vpack.c.b16 %v3775, %v3767
        %v3928 = vpack.c.b16 %v3776, %v3768
        %v3929 = vpack.c.b16 %v3785, %v3777
        %v3930 = vpack.c.b16 %v3786, %v3778
        %v3931 = vpack.c.b16 %v3787, %v3779
        %v3932 = vpack.c.b16 %v3788, %v3780
        %v3933 = vpack.c.b16 %v3789, %v3781
        %v3934 = vpack.c.b16 %v3790, %v3782
        %v3935 = vpack.c.b16 %v3791, %v3783
        %v3936 = vpack.c.b16 %v3792, %v3784
        %v3937 = vpack.c.b16 %v3801, %v3793
        %v3938 = vpack.c.b16 %v3802, %v3794
        %v3939 = vpack.c.b16 %v3803, %v3795
        %v3940 = vpack.c.b16 %v3804, %v3796
        %v3941 = vpack.c.b16 %v3805, %v3797
        %v3942 = vpack.c.b16 %v3806, %v3798
        %v3943 = vpack.c.b16 %v3807, %v3799
        %v3944 = vpack.c.b16 %v3808, %v3800
        %v3945 = vpack.c.b16 %v3817, %v3809
        %v3946 = vpack.c.b16 %v3818, %v3810
        %v3947 = vpack.c.b16 %v3819, %v3811
        %v3948 = vpack.c.b16 %v3820, %v3812
        %v3949 = vpack.c.b16 %v3821, %v3813
        %v3950 = vpack.c.b16 %v3822, %v3814
        %v3951 = vpack.c.b16 %v3823, %v3815
        %v3952 = vpack.c.b16 %v3824, %v3816
        %4081 = vmatprep.subr.bf16.mxu0 %v3826
        %4082 = vmatpush1.bf16.msra.mxu0 %v3825
        %4083 = vmatprep.subr.bf16.mxu0 %v3834
        %4084 = vmatpush1.bf16.msra.mxu0 %v3833
        %4085 = vmatprep.subr.bf16.mxu0 %v3842
        %4086 = vmatpush1.bf16.msra.mxu0 %v3841
        %4087 = vmatprep.subr.bf16.mxu0 %v3850
        %4088 = vmatpush1.bf16.msra.mxu0 %v3849
        %4089 = vmatprep.subr.bf16.mxu0 %v3858
        %4090 = vmatpush1.bf16.msra.mxu0 %v3857
        %4091 = vmatprep.subr.bf16.mxu0 %v3866
        %4092 = vmatpush1.bf16.msra.mxu0 %v3865
        %4093 = vmatprep.subr.bf16.mxu0 %v3874
        %4094 = vmatpush1.bf16.msra.mxu0 %v3873
        %4095 = vmatprep.subr.bf16.mxu0 %v3882
        %4096 = vmatpush1.bf16.msra.mxu0 %v3881
        %4097 = vmatprep.subr.bf16.mxu0 %v3890
        %4098 = vmatpush1.bf16.msra.mxu0 %v3889
        %4099 = vmatprep.subr.bf16.mxu0 %v3898
        %4100 = vmatpush1.bf16.msra.mxu0 %v3897
        %4101 = vmatprep.subr.bf16.mxu0 %v3906
        %4102 = vmatpush1.bf16.msra.mxu0 %v3905
        %4103 = vmatprep.subr.bf16.mxu0 %v3914
        %4104 = vmatpush1.bf16.msra.mxu0 %v3913
        %4105 = vmatprep.subr.bf16.mxu0 %v3922
        %4106 = vmatpush1.bf16.msra.mxu0 %v3921
        %4107 = vmatprep.subr.bf16.mxu0 %v3930
        %4108 = vmatpush1.bf16.msra.mxu0 %v3929
        %4109 = vmatprep.subr.bf16.mxu0 %v3938
        %4110 = vmatpush1.bf16.msra.mxu0 %v3937
        %4111 = vmatprep.subr.bf16.mxu0 %v3946
        %4112 = vmatpush1.bf16.msra.mxu0 %v3945
        %4113 = vmatprep.mubr.bf16.mxu0 %v3268
        %4114 = vmatmul.mubr.bf16.gmra.mrb[0].mxu0 %v3267
        %v4115 = vpop.f32.mrb[0].mxu0
        %v4116 = vadd.f32 %v3404, %v4115
        %v4117 = vpop.f32.mrb[0].mxu0
        %v4118 = vadd.f32 %v3408, %v4117
        %v4119 = vpop.f32.mrb[0].mxu0
        %v4120 = vadd.f32 %v3404, %v4119
        %v4121 = vpop.f32.mrb[0].mxu0
        %v4122 = vadd.f32 %v3408, %v4121
        %4123 = vmatprep.mubr.bf16.mxu0 %v3270
        %4124 = vmatmul.mubr.bf16.gmra.mrb[0].mxu0 %v3269
        %v4125 = vpop.f32.mrb[0].mxu0
        %v4126 = vadd.f32 %v3404, %v4125
        %v4127 = vpop.f32.mrb[0].mxu0
        %v4128 = vadd.f32 %v3408, %v4127
        %v4129 = vpop.f32.mrb[0].mxu0
        %v4130 = vadd.f32 %v3404, %v4129
        %v4131 = vpop.f32.mrb[0].mxu0
        %v4132 = vadd.f32 %v3408, %v4131
        %4133 = vdwg.mxu0
        %4134 = vmatprep.subr.bf16.mxu0 %v3828
        %4135 = vmatpush1.bf16.msra.mxu0 %v3827
        %4136 = vmatprep.subr.bf16.mxu0 %v3836
        %4137 = vmatpush1.bf16.msra.mxu0 %v3835
        %4138 = vmatprep.subr.bf16.mxu0 %v3844
        %4139 = vmatpush1.bf16.msra.mxu0 %v3843
        %4140 = vmatprep.subr.bf16.mxu0 %v3852
        %4141 = vmatpush1.bf16.msra.mxu0 %v3851
        %4142 = vmatprep.subr.bf16.mxu0 %v3860
        %4143 = vmatpush1.bf16.msra.mxu0 %v3859
        %4144 = vmatprep.subr.bf16.mxu0 %v3868
        %4145 = vmatpush1.bf16.msra.mxu0 %v3867
        %4146 = vmatprep.subr.bf16.mxu0 %v3876
        %4147 = vmatpush1.bf16.msra.mxu0 %v3875
        %4148 = vmatprep.subr.bf16.mxu0 %v3884
        %4149 = vmatpush1.bf16.msra.mxu0 %v3883
        %4150 = vmatprep.subr.bf16.mxu0 %v3892
        %4151 = vmatpush1.bf16.msra.mxu0 %v3891
        %4152 = vmatprep.subr.bf16.mxu0 %v3900
        %4153 = vmatpush1.bf16.msra.mxu0 %v3899
        %4154 = vmatprep.subr.bf16.mxu0 %v3908
        %4155 = vmatpush1.bf16.msra.mxu0 %v3907
        %4156 = vmatprep.subr.bf16.mxu0 %v3916
        %4157 = vmatpush1.bf16.msra.mxu0 %v3915
        %4158 = vmatprep.subr.bf16.mxu0 %v3924
        %4159 = vmatpush1.bf16.msra.mxu0 %v3923
        %4160 = vmatprep.subr.bf16.mxu0 %v3932
        %4161 = vmatpush1.bf16.msra.mxu0 %v3931
        %4162 = vmatprep.subr.bf16.mxu0 %v3940
        %4163 = vmatpush1.bf16.msra.mxu0 %v3939
        %4164 = vmatprep.subr.bf16.mxu0 %v3948
        %4165 = vmatpush1.bf16.msra.mxu0 %v3947
        %4166 = vmatprep.mubr.bf16.mxu0 %v3268
        %4167 = vmatmul.mubr.bf16.gmra.mrb[0].mxu0 %v3267
        %v4168 = vpop.f32.mrb[0].mxu0
        %v4169 = vadd.f32 %v3412, %v4168
        %v4170 = vpop.f32.mrb[0].mxu0
        %v4171 = vadd.f32 %v3416, %v4170
        %v4172 = vpop.f32.mrb[0].mxu0
        %v4173 = vadd.f32 %v3412, %v4172
        %v4174 = vpop.f32.mrb[0].mxu0
        %v4175 = vadd.f32 %v3416, %v4174
        %4176 = vmatprep.mubr.bf16.mxu0 %v3270
        %4177 = vmatmul.mubr.bf16.gmra.mrb[0].mxu0 %v3269
        %v4178 = vpop.f32.mrb[0].mxu0
        %v4179 = vadd.f32 %v3412, %v4178
        %v4180 = vpop.f32.mrb[0].mxu0
        %v4181 = vadd.f32 %v3416, %v4180
        %v4182 = vpop.f32.mrb[0].mxu0
        %v4183 = vadd.f32 %v3412, %v4182
        %v4184 = vpop.f32.mrb[0].mxu0
        %v4185 = vadd.f32 %v3416, %v4184
        %4186 = vdwg.mxu0
        %4187 = vmatprep.subr.bf16.mxu0 %v3830
        %4188 = vmatpush1.bf16.msra.mxu0 %v3829
        %4189 = vmatprep.subr.bf16.mxu0 %v3838
        %4190 = vmatpush1.bf16.msra.mxu0 %v3837
        %4191 = vmatprep.subr.bf16.mxu0 %v3846
        %4192 = vmatpush1.bf16.msra.mxu0 %v3845
        %4193 = vmatprep.subr.bf16.mxu0 %v3854
        %4194 = vmatpush1.bf16.msra.mxu0 %v3853
        %4195 = vmatprep.subr.bf16.mxu0 %v3862
        %4196 = vmatpush1.bf16.msra.mxu0 %v3861
        %4197 = vmatprep.subr.bf16.mxu0 %v3870
        %4198 = vmatpush1.bf16.msra.mxu0 %v3869
        %4199 = vmatprep.subr.bf16.mxu0 %v3878
        %4200 = vmatpush1.bf16.msra.mxu0 %v3877
        %4201 = vmatprep.subr.bf16.mxu0 %v3886
        %4202 = vmatpush1.bf16.msra.mxu0 %v3885
        %4203 = vmatprep.subr.bf16.mxu0 %v3894
        %4204 = vmatpush1.bf16.msra.mxu0 %v3893
        %4205 = vmatprep.subr.bf16.mxu0 %v3902
        %4206 = vmatpush1.bf16.msra.mxu0 %v3901
        %4207 = vmatprep.subr.bf16.mxu0 %v3910
        %4208 = vmatpush1.bf16.msra.mxu0 %v3909
        %4209 = vmatprep.subr.bf16.mxu0 %v3918
        %4210 = vmatpush1.bf16.msra.mxu0 %v3917
        %4211 = vmatprep.subr.bf16.mxu0 %v3926
        %4212 = vmatpush1.bf16.msra.mxu0 %v3925
        %4213 = vmatprep.subr.bf16.mxu0 %v3934
        %4214 = vmatpush1.bf16.msra.mxu0 %v3933
        %4215 = vmatprep.subr.bf16.mxu0 %v3942
        %4216 = vmatpush1.bf16.msra.mxu0 %v3941
        %4217 = vmatprep.subr.bf16.mxu0 %v3950
        %4218 = vmatpush1.bf16.msra.mxu0 %v3949
        %4219 = vmatprep.mubr.bf16.mxu0 %v3268
        %4220 = vmatmul.mubr.bf16.gmra.mrb[0].mxu0 %v3267
        %v4221 = vpop.f32.mrb[0].mxu0
        %v4222 = vadd.f32 %v3420, %v4221
        %v4223 = vpop.f32.mrb[0].mxu0
        %v4224 = vadd.f32 %v3424, %v4223
        %v4225 = vpop.f32.mrb[0].mxu0
        %v4226 = vadd.f32 %v3420, %v4225
        %v4227 = vpop.f32.mrb[0].mxu0
        %v4228 = vadd.f32 %v3424, %v4227
        %4229 = vmatprep.mubr.bf16.mxu0 %v3270
        %4230 = vmatmul.mubr.bf16.gmra.mrb[0].mxu0 %v3269
        %v4231 = vpop.f32.mrb[0].mxu0
        %v4232 = vadd.f32 %v3420, %v4231
        %v4233 = vpop.f32.mrb[0].mxu0
        %v4234 = vadd.f32 %v3424, %v4233
        %v4235 = vpop.f32.mrb[0].mxu0
        %v4236 = vadd.f32 %v3420, %v4235
        %v4237 = vpop.f32.mrb[0].mxu0
        %v4238 = vadd.f32 %v3424, %v4237
        %4239 = vdwg.mxu0
        %4240 = vmatprep.subr.bf16.mxu0 %v3832
        %4241 = vmatpush1.bf16.msra.mxu0 %v3831
        %4242 = vmatprep.subr.bf16.mxu0 %v3840
        %4243 = vmatpush1.bf16.msra.mxu0 %v3839
        %4244 = vmatprep.subr.bf16.mxu0 %v3848
        %4245 = vmatpush1.bf16.msra.mxu0 %v3847
        %4246 = vmatprep.subr.bf16.mxu0 %v3856
        %4247 = vmatpush1.bf16.msra.mxu0 %v3855
        %4248 = vmatprep.subr.bf16.mxu0 %v3864
        %4249 = vmatpush1.bf16.msra.mxu0 %v3863
        %4250 = vmatprep.subr.bf16.mxu0 %v3872
        %4251 = vmatpush1.bf16.msra.mxu0 %v3871
        %4252 = vmatprep.subr.bf16.mxu0 %v3880
        %4253 = vmatpush1.bf16.msra.mxu0 %v3879
        %4254 = vmatprep.subr.bf16.mxu0 %v3888
        %4255 = vmatpush1.bf16.msra.mxu0 %v3887
        %4256 = vmatprep.subr.bf16.mxu0 %v3896
        %4257 = vmatpush1.bf16.msra.mxu0 %v3895
        %4258 = vmatprep.subr.bf16.mxu0 %v3904
        %4259 = vmatpush1.bf16.msra.mxu0 %v3903
        %4260 = vmatprep.subr.bf16.mxu0 %v3912
        %4261 = vmatpush1.bf16.msra.mxu0 %v3911
        %4262 = vmatprep.subr.bf16.mxu0 %v3920
        %4263 = vmatpush1.bf16.msra.mxu0 %v3919
        %4264 = vmatprep.subr.bf16.mxu0 %v3928
        %4265 = vmatpush1.bf16.msra.mxu0 %v3927
        %4266 = vmatprep.subr.bf16.mxu0 %v3936
        %4267 = vmatpush1.bf16.msra.mxu0 %v3935
        %4268 = vmatprep.subr.bf16.mxu0 %v3944
        %4269 = vmatpush1.bf16.msra.mxu0 %v3943
        %4270 = vmatprep.subr.bf16.mxu0 %v3952
        %4271 = vmatpush1.bf16.msra.mxu0 %v3951
        %4272 = vmatprep.mubr.bf16.mxu0 %v3268
        %4273 = vmatmul.mubr.bf16.gmra.mrb[0].mxu0 %v3267
        %v4274 = vpop.f32.mrb[0].mxu0
        %v4275 = vadd.f32 %v3428, %v4274
        %v4276 = vpop.f32.mrb[0].mxu0
        %v4277 = vadd.f32 %v3432, %v4276
        %v4278 = vpop.f32.mrb[0].mxu0
        %v4279 = vadd.f32 %v3428, %v4278
        %v4280 = vpop.f32.mrb[0].mxu0
        %v4281 = vadd.f32 %v3432, %v4280
        %4282 = vmatprep.mubr.bf16.mxu0 %v3270
        %4283 = vmatmul.mubr.bf16.gmra.mrb[0].mxu0 %v3269
        %v4284 = vpop.f32.mrb[0].mxu0
        %v4285 = vadd.f32 %v3428, %v4284
        %v4286 = vpop.f32.mrb[0].mxu0
        %v4287 = vadd.f32 %v3432, %v4286
        %v4288 = vpop.f32.mrb[0].mxu0
        %v4289 = vadd.f32 %v3428, %v4288
        %v4290 = vpop.f32.mrb[0].mxu0
        %v4291 = vadd.f32 %v3432, %v4290
        %4292 = vdwg.mxu0
        %v4293 = vmul.f32 %v4116, 0.5
        %v4294 = vmul.f32 %v4118, 0.5
        %v4295 = vmul.f32 %v4169, 0.5
        %v4296 = vmul.f32 %v4171, 0.5
        %v4297 = vmul.f32 %v4222, 0.5
        %v4298 = vmul.f32 %v4224, 0.5
        %v4299 = vmul.f32 %v4275, 0.5
        %v4300 = vmul.f32 %v4277, 0.5
        %v4301 = vmul.f32 %v4120, 0.5
        %v4302 = vmul.f32 %v4122, 0.5
        %v4303 = vmul.f32 %v4173, 0.5
        %v4304 = vmul.f32 %v4175, 0.5
        %v4305 = vmul.f32 %v4226, 0.5
        %v4306 = vmul.f32 %v4228, 0.5
        %v4307 = vmul.f32 %v4279, 0.5
        %v4308 = vmul.f32 %v4281, 0.5
        %v4309 = vmul.f32 %v4126, 0.5
        %v4310 = vmul.f32 %v4128, 0.5
        %v4311 = vmul.f32 %v4179, 0.5
        %v4312 = vmul.f32 %v4181, 0.5
        %v4313 = vmul.f32 %v4232, 0.5
        %v4314 = vmul.f32 %v4234, 0.5
        %v4315 = vmul.f32 %v4285, 0.5
        %v4316 = vmul.f32 %v4287, 0.5
        %v4317 = vmul.f32 %v4130, 0.5
        %v4318 = vmul.f32 %v4132, 0.5
        %v4319 = vmul.f32 %v4183, 0.5
        %v4320 = vmul.f32 %v4185, 0.5
        %v4321 = vmul.f32 %v4236, 0.5
        %v4322 = vmul.f32 %v4238, 0.5
        %v4323 = vmul.f32 %v4289, 0.5
        %v4324 = vmul.f32 %v4291, 0.5
        %v4325 = vmul.f32 %v4116, 0.044715
        %v4326 = vmul.f32 %v4118, 0.044715
        %v4327 = vmul.f32 %v4169, 0.044715
        %v4328 = vmul.f32 %v4171, 0.044715
        %v4329 = vmul.f32 %v4222, 0.044715
        %v4330 = vmul.f32 %v4224, 0.044715
        %v4331 = vmul.f32 %v4275, 0.044715
        %v4332 = vmul.f32 %v4277, 0.044715
        %v4333 = vmul.f32 %v4120, 0.044715
        %v4334 = vmul.f32 %v4122, 0.044715
        %v4335 = vmul.f32 %v4173, 0.044715
        %v4336 = vmul.f32 %v4175, 0.044715
        %v4337 = vmul.f32 %v4226, 0.044715
        %v4338 = vmul.f32 %v4228, 0.044715
        %v4339 = vmul.f32 %v4279, 0.044715
        %v4340 = vmul.f32 %v4281, 0.044715
        %v4341 = vmul.f32 %v4126, 0.044715
        %v4342 = vmul.f32 %v4128, 0.044715
        %v4343 = vmul.f32 %v4179, 0.044715
        %v4344 = vmul.f32 %v4181, 0.044715
        %v4345 = vmul.f32 %v4232, 0.044715
        %v4346 = vmul.f32 %v4234, 0.044715
        %v4347 = vmul.f32 %v4285, 0.044715
        %v4348 = vmul.f32 %v4287, 0.044715
        %v4349 = vmul.f32 %v4130, 0.044715
        %v4350 = vmul.f32 %v4132, 0.044715
        %v4351 = vmul.f32 %v4183, 0.044715
        %v4352 = vmul.f32 %v4185, 0.044715
        %v4353 = vmul.f32 %v4236, 0.044715
        %v4354 = vmul.f32 %v4238, 0.044715
        %v4355 = vmul.f32 %v4289, 0.044715
        %v4356 = vmul.f32 %v4291, 0.044715
        %v4357 = vmul.f32 %v4325, %v4116
        %v4358 = vmul.f32 %v4326, %v4118
        %v4359 = vmul.f32 %v4327, %v4169
        %v4360 = vmul.f32 %v4328, %v4171
        %v4361 = vmul.f32 %v4329, %v4222
        %v4362 = vmul.f32 %v4330, %v4224
        %v4363 = vmul.f32 %v4331, %v4275
        %v4364 = vmul.f32 %v4332, %v4277
        %v4365 = vmul.f32 %v4333, %v4120
        %v4366 = vmul.f32 %v4334, %v4122
        %v4367 = vmul.f32 %v4335, %v4173
        %v4368 = vmul.f32 %v4336, %v4175
        %v4369 = vmul.f32 %v4337, %v4226
        %v4370 = vmul.f32 %v4338, %v4228
        %v4371 = vmul.f32 %v4339, %v4279
        %v4372 = vmul.f32 %v4340, %v4281
        %v4373 = vmul.f32 %v4341, %v4126
        %v4374 = vmul.f32 %v4342, %v4128
        %v4375 = vmul.f32 %v4343, %v4179
        %v4376 = vmul.f32 %v4344, %v4181
        %v4377 = vmul.f32 %v4345, %v4232
        %v4378 = vmul.f32 %v4346, %v4234
        %v4379 = vmul.f32 %v4347, %v4285
        %v4380 = vmul.f32 %v4348, %v4287
        %v4381 = vmul.f32 %v4349, %v4130
        %v4382 = vmul.f32 %v4350, %v4132
        %v4383 = vmul.f32 %v4351, %v4183
        %v4384 = vmul.f32 %v4352, %v4185
        %v4385 = vmul.f32 %v4353, %v4236
        %v4386 = vmul.f32 %v4354, %v4238
        %v4387 = vmul.f32 %v4355, %v4289
        %v4388 = vmul.f32 %v4356, %v4291
        %v4389 = vmul.f32 %v4357, %v4116
        %v4390 = vmul.f32 %v4358, %v4118
        %v4391 = vmul.f32 %v4359, %v4169
        %v4392 = vmul.f32 %v4360, %v4171
        %v4393 = vmul.f32 %v4361, %v4222
        %v4394 = vmul.f32 %v4362, %v4224
        %v4395 = vmul.f32 %v4363, %v4275
        %v4396 = vmul.f32 %v4364, %v4277
        %v4397 = vmul.f32 %v4365, %v4120
        %v4398 = vmul.f32 %v4366, %v4122
        %v4399 = vmul.f32 %v4367, %v4173
        %v4400 = vmul.f32 %v4368, %v4175
        %v4401 = vmul.f32 %v4369, %v4226
        %v4402 = vmul.f32 %v4370, %v4228
        %v4403 = vmul.f32 %v4371, %v4279
        %v4404 = vmul.f32 %v4372, %v4281
        %v4405 = vmul.f32 %v4373, %v4126
        %v4406 = vmul.f32 %v4374, %v4128
        %v4407 = vmul.f32 %v4375, %v4179
        %v4408 = vmul.f32 %v4376, %v4181
        %v4409 = vmul.f32 %v4377, %v4232
        %v4410 = vmul.f32 %v4378, %v4234
        %v4411 = vmul.f32 %v4379, %v4285
        %v4412 = vmul.f32 %v4380, %v4287
        %v4413 = vmul.f32 %v4381, %v4130
        %v4414 = vmul.f32 %v4382, %v4132
        %v4415 = vmul.f32 %v4383, %v4183
        %v4416 = vmul.f32 %v4384, %v4185
        %v4417 = vmul.f32 %v4385, %v4236
        %v4418 = vmul.f32 %v4386, %v4238
        %v4419 = vmul.f32 %v4387, %v4289
        %v4420 = vmul.f32 %v4388, %v4291
        %v4421 = vadd.f32 %v4116, %v4389
        %v4422 = vadd.f32 %v4118, %v4390
        %v4423 = vadd.f32 %v4169, %v4391
        %v4424 = vadd.f32 %v4171, %v4392
        %v4425 = vadd.f32 %v4222, %v4393
        %v4426 = vadd.f32 %v4224, %v4394
        %v4427 = vadd.f32 %v4275, %v4395
        %v4428 = vadd.f32 %v4277, %v4396
        %v4429 = vadd.f32 %v4120, %v4397
        %v4430 = vadd.f32 %v4122, %v4398
        %v4431 = vadd.f32 %v4173, %v4399
        %v4432 = vadd.f32 %v4175, %v4400
        %v4433 = vadd.f32 %v4226, %v4401
        %v4434 = vadd.f32 %v4228, %v4402
        %v4435 = vadd.f32 %v4279, %v4403
        %v4436 = vadd.f32 %v4281, %v4404
        %v4437 = vadd.f32 %v4126, %v4405
        %v4438 = vadd.f32 %v4128, %v4406
        %v4439 = vadd.f32 %v4179, %v4407
        %v4440 = vadd.f32 %v4181, %v4408
        %v4441 = vadd.f32 %v4232, %v4409
        %v4442 = vadd.f32 %v4234, %v4410
        %v4443 = vadd.f32 %v4285, %v4411
        %v4444 = vadd.f32 %v4287, %v4412
        %v4445 = vadd.f32 %v4130, %v4413
        %v4446 = vadd.f32 %v4132, %v4414
        %v4447 = vadd.f32 %v4183, %v4415
        %v4448 = vadd.f32 %v4185, %v4416
        %v4449 = vadd.f32 %v4236, %v4417
        %v4450 = vadd.f32 %v4238, %v4418
        %v4451 = vadd.f32 %v4289, %v4419
        %v4452 = vadd.f32 %v4291, %v4420
        %v4453 = vmul.f32 %v4421, 0.7978846
        %v4454 = vmul.f32 %v4422, 0.7978846
        %v4455 = vmul.f32 %v4423, 0.7978846
        %v4456 = vmul.f32 %v4424, 0.7978846
        %v4457 = vmul.f32 %v4425, 0.7978846
        %v4458 = vmul.f32 %v4426, 0.7978846
        %v4459 = vmul.f32 %v4427, 0.7978846
        %v4460 = vmul.f32 %v4428, 0.7978846
        %v4461 = vmul.f32 %v4429, 0.7978846
        %v4462 = vmul.f32 %v4430, 0.7978846
        %v4463 = vmul.f32 %v4431, 0.7978846
        %v4464 = vmul.f32 %v4432, 0.7978846
        %v4465 = vmul.f32 %v4433, 0.7978846
        %v4466 = vmul.f32 %v4434, 0.7978846
        %v4467 = vmul.f32 %v4435, 0.7978846
        %v4468 = vmul.f32 %v4436, 0.7978846
        %v4469 = vmul.f32 %v4437, 0.7978846
        %v4470 = vmul.f32 %v4438, 0.7978846
        %v4471 = vmul.f32 %v4439, 0.7978846
        %v4472 = vmul.f32 %v4440, 0.7978846
        %v4473 = vmul.f32 %v4441, 0.7978846
        %v4474 = vmul.f32 %v4442, 0.7978846
        %v4475 = vmul.f32 %v4443, 0.7978846
        %v4476 = vmul.f32 %v4444, 0.7978846
        %v4477 = vmul.f32 %v4445, 0.7978846
        %v4478 = vmul.f32 %v4446, 0.7978846
        %v4479 = vmul.f32 %v4447, 0.7978846
        %v4480 = vmul.f32 %v4448, 0.7978846
        %v4481 = vmul.f32 %v4449, 0.7978846
        %v4482 = vmul.f32 %v4450, 0.7978846
        %v4483 = vmul.f32 %v4451, 0.7978846
        %v4484 = vmul.f32 %v4452, 0.7978846
        %v4485 = vtanh.pop %v4453
        %v4486 = vtanh.pop %v4454
        %v4487 = vtanh.pop %v4455
        %v4488 = vtanh.pop %v4456
        %v4489 = vtanh.pop %v4457
        %v4490 = vtanh.pop %v4458
        %v4491 = vtanh.pop %v4459
        %v4492 = vtanh.pop %v4460
        %v4493 = vtanh.pop %v4461
        %v4494 = vtanh.pop %v4462
        %v4495 = vtanh.pop %v4463
        %v4496 = vtanh.pop %v4464
        %v4497 = vtanh.pop %v4465
        %v4498 = vtanh.pop %v4466
        %v4499 = vtanh.pop %v4467
        %v4500 = vtanh.pop %v4468
        %v4501 = vtanh.pop %v4469
        %v4502 = vtanh.pop %v4470
        %v4503 = vtanh.pop %v4471
        %v4504 = vtanh.pop %v4472
        %v4505 = vtanh.pop %v4473
        %v4506 = vtanh.pop %v4474
        %v4507 = vtanh.pop %v4475
        %v4508 = vtanh.pop %v4476
        %v4509 = vtanh.pop %v4477
        %v4510 = vtanh.pop %v4478
        %v4511 = vtanh.pop %v4479
        %v4512 = vtanh.pop %v4480
        %v4513 = vtanh.pop %v4481
        %v4514 = vtanh.pop %v4482
        %v4515 = vtanh.pop %v4483
        %v4516 = vtanh.pop %v4484
        %v4517 = vadd.f32 %v4485, 1.0
        %v4518 = vadd.f32 %v4486, 1.0
        %v4519 = vadd.f32 %v4487, 1.0
        %v4520 = vadd.f32 %v4488, 1.0
        %v4521 = vadd.f32 %v4489, 1.0
        %v4522 = vadd.f32 %v4490, 1.0
        %v4523 = vadd.f32 %v4491, 1.0
        %v4524 = vadd.f32 %v4492, 1.0
        %v4525 = vadd.f32 %v4493, 1.0
        %v4526 = vadd.f32 %v4494, 1.0
        %v4527 = vadd.f32 %v4495, 1.0
        %v4528 = vadd.f32 %v4496, 1.0
        %v4529 = vadd.f32 %v4497, 1.0
        %v4530 = vadd.f32 %v4498, 1.0
        %v4531 = vadd.f32 %v4499, 1.0
        %v4532 = vadd.f32 %v4500, 1.0
        %v4533 = vadd.f32 %v4501, 1.0
        %v4534 = vadd.f32 %v4502, 1.0
        %v4535 = vadd.f32 %v4503, 1.0
        %v4536 = vadd.f32 %v4504, 1.0
        %v4537 = vadd.f32 %v4505, 1.0
        %v4538 = vadd.f32 %v4506, 1.0
        %v4539 = vadd.f32 %v4507, 1.0
        %v4540 = vadd.f32 %v4508, 1.0
        %v4541 = vadd.f32 %v4509, 1.0
        %v4542 = vadd.f32 %v4510, 1.0
        %v4543 = vadd.f32 %v4511, 1.0
        %v4544 = vadd.f32 %v4512, 1.0
        %v4545 = vadd.f32 %v4513, 1.0
        %v4546 = vadd.f32 %v4514, 1.0
        %v4547 = vadd.f32 %v4515, 1.0
        %v4548 = vadd.f32 %v4516, 1.0
        %v4549 = vmul.f32 %v4293, %v4517
        %v4550 = vmul.f32 %v4294, %v4518
        %v4551 = vmul.f32 %v4295, %v4519
        %v4552 = vmul.f32 %v4296, %v4520
        %v4553 = vmul.f32 %v4297, %v4521
        %v4554 = vmul.f32 %v4298, %v4522
        %v4555 = vmul.f32 %v4299, %v4523
        %v4556 = vmul.f32 %v4300, %v4524
        %v4557 = vmul.f32 %v4301, %v4525
        %v4558 = vmul.f32 %v4302, %v4526
        %v4559 = vmul.f32 %v4303, %v4527
        %v4560 = vmul.f32 %v4304, %v4528
        %v4561 = vmul.f32 %v4305, %v4529
        %v4562 = vmul.f32 %v4306, %v4530
        %v4563 = vmul.f32 %v4307, %v4531
        %v4564 = vmul.f32 %v4308, %v4532
        %v4565 = vmul.f32 %v4309, %v4533
        %v4566 = vmul.f32 %v4310, %v4534
        %v4567 = vmul.f32 %v4311, %v4535
        %v4568 = vmul.f32 %v4312, %v4536
        %v4569 = vmul.f32 %v4313, %v4537
        %v4570 = vmul.f32 %v4314, %v4538
        %v4571 = vmul.f32 %v4315, %v4539
        %v4572 = vmul.f32 %v4316, %v4540
        %v4573 = vmul.f32 %v4317, %v4541
        %v4574 = vmul.f32 %v4318, %v4542
        %v4575 = vmul.f32 %v4319, %v4543
        %v4576 = vmul.f32 %v4320, %v4544
        %v4577 = vmul.f32 %v4321, %v4545
        %v4578 = vmul.f32 %v4322, %v4546
        %v4579 = vmul.f32 %v4323, %v4547
        %v4580 = vmul.f32 %v4324, %v4548
        %v4581 = vpack.c.bf16 %v4557, %v4549
        %v4582 = vpack.c.bf16 %v4558, %v4550
        %v4583 = vpack.c.bf16 %v4559, %v4551
        %v4584 = vpack.c.bf16 %v4560, %v4552
        %v4585 = vpack.c.bf16 %v4561, %v4553
        %v4586 = vpack.c.bf16 %v4562, %v4554
        %v4587 = vpack.c.bf16 %v4563, %v4555
        %v4588 = vpack.c.bf16 %v4564, %v4556
        %v4589 = vpack.c.bf16 %v4573, %v4565
        %v4590 = vpack.c.bf16 %v4574, %v4566
        %v4591 = vpack.c.bf16 %v4575, %v4567
        %v4592 = vpack.c.bf16 %v4576, %v4568
        %v4593 = vpack.c.bf16 %v4577, %v4569
        %v4594 = vpack.c.bf16 %v4578, %v4570
        %v4595 = vpack.c.bf16 %v4579, %v4571
        %v4596 = vpack.c.bf16 %v4580, %v4572
        %v4597 = vld [vmem:[%s815] sm:$0xff]
        %v4598 = vld [vmem:[%s815 + $0x8] sm:$0xff]
        %v4599 = vld [vmem:[%s815 + $0x10] sm:$0xff]
        %v4600 = vld [vmem:[%s815 + $0x18] sm:$0xff]
        %v4601 = vld [vmem:[%s815 + $0x20] sm:$0xff]
        %v4602 = vld [vmem:[%s815 + $0x28] sm:$0xff]
        %v4603 = vld [vmem:[%s815 + $0x30] sm:$0xff]
        %v4604 = vld [vmem:[%s815 + $0x38] sm:$0xff]
        %v4605 = vld [vmem:[%s815 + $0x40] sm:$0xff]
        %v4606 = vld [vmem:[%s815 + $0x48] sm:$0xff]
        %v4607 = vld [vmem:[%s815 + $0x50] sm:$0xff]
        %v4608 = vld [vmem:[%s815 + $0x58] sm:$0xff]
        %v4609 = vld [vmem:[%s815 + $0x60] sm:$0xff]
        %v4610 = vld [vmem:[%s815 + $0x68] sm:$0xff]
        %v4611 = vld [vmem:[%s815 + $0x70] sm:$0xff]
        %v4612 = vld [vmem:[%s815 + $0x78] sm:$0xff]
        %v4613 = vld [vmem:[%s815 + $0x80] sm:$0xff]
        %v4614 = vld [vmem:[%s815 + $0x88] sm:$0xff]
        %v4615 = vld [vmem:[%s815 + $0x90] sm:$0xff]
        %v4616 = vld [vmem:[%s815 + $0x98] sm:$0xff]
        %v4617 = vld [vmem:[%s815 + $0xa0] sm:$0xff]
        %v4618 = vld [vmem:[%s815 + $0xa8] sm:$0xff]
        %v4619 = vld [vmem:[%s815 + $0xb0] sm:$0xff]
        %v4620 = vld [vmem:[%s815 + $0xb8] sm:$0xff]
        %v4621 = vld [vmem:[%s815 + $0xc0] sm:$0xff]
        %v4622 = vld [vmem:[%s815 + $0xc8] sm:$0xff]
        %v4623 = vld [vmem:[%s815 + $0xd0] sm:$0xff]
        %v4624 = vld [vmem:[%s815 + $0xd8] sm:$0xff]
        %v4625 = vld [vmem:[%s815 + $0xe0] sm:$0xff]
        %v4626 = vld [vmem:[%s815 + $0xe8] sm:$0xff]
        %v4627 = vld [vmem:[%s815 + $0xf0] sm:$0xff]
        %v4628 = vld [vmem:[%s815 + $0xf8] sm:$0xff]
        %v4629 = vld [vmem:[%s815 + $0x100] sm:$0xff]
        %v4630 = vld [vmem:[%s815 + $0x108] sm:$0xff]
        %v4631 = vld [vmem:[%s815 + $0x110] sm:$0xff]
        %v4632 = vld [vmem:[%s815 + $0x118] sm:$0xff]
        %v4633 = vld [vmem:[%s815 + $0x120] sm:$0xff]
        %v4634 = vld [vmem:[%s815 + $0x128] sm:$0xff]
        %v4635 = vld [vmem:[%s815 + $0x130] sm:$0xff]
        %v4636 = vld [vmem:[%s815 + $0x138] sm:$0xff]
        %v4637 = vld [vmem:[%s815 + $0x140] sm:$0xff]
        %v4638 = vld [vmem:[%s815 + $0x148] sm:$0xff]
        %v4639 = vld [vmem:[%s815 + $0x150] sm:$0xff]
        %v4640 = vld [vmem:[%s815 + $0x158] sm:$0xff]
        %v4641 = vld [vmem:[%s815 + $0x160] sm:$0xff]
        %v4642 = vld [vmem:[%s815 + $0x168] sm:$0xff]
        %v4643 = vld [vmem:[%s815 + $0x170] sm:$0xff]
        %v4644 = vld [vmem:[%s815 + $0x178] sm:$0xff]
        %v4645 = vld [vmem:[%s815 + $0x180] sm:$0xff]
        %v4646 = vld [vmem:[%s815 + $0x188] sm:$0xff]
        %v4647 = vld [vmem:[%s815 + $0x190] sm:$0xff]
        %v4648 = vld [vmem:[%s815 + $0x198] sm:$0xff]
        %v4649 = vld [vmem:[%s815 + $0x1a0] sm:$0xff]
        %v4650 = vld [vmem:[%s815 + $0x1a8] sm:$0xff]
        %v4651 = vld [vmem:[%s815 + $0x1b0] sm:$0xff]
        %v4652 = vld [vmem:[%s815 + $0x1b8] sm:$0xff]
        %v4653 = vld [vmem:[%s815 + $0x1c0] sm:$0xff]
        %v4654 = vld [vmem:[%s815 + $0x1c8] sm:$0xff]
        %v4655 = vld [vmem:[%s815 + $0x1d0] sm:$0xff]
        %v4656 = vld [vmem:[%s815 + $0x1d8] sm:$0xff]
        %v4657 = vld [vmem:[%s815 + $0x1e0] sm:$0xff]
        %v4658 = vld [vmem:[%s815 + $0x1e8] sm:$0xff]
        %v4659 = vld [vmem:[%s815 + $0x1f0] sm:$0xff]
        %v4660 = vld [vmem:[%s815 + $0x1f8] sm:$0xff]
        %v4661 = vld [vmem:[%s815 + $0x200] sm:$0xff]
        %v4662 = vld [vmem:[%s815 + $0x208] sm:$0xff]
        %v4663 = vld [vmem:[%s815 + $0x210] sm:$0xff]
        %v4664 = vld [vmem:[%s815 + $0x218] sm:$0xff]
        %v4665 = vld [vmem:[%s815 + $0x220] sm:$0xff]
        %v4666 = vld [vmem:[%s815 + $0x228] sm:$0xff]
        %v4667 = vld [vmem:[%s815 + $0x230] sm:$0xff]
        %v4668 = vld [vmem:[%s815 + $0x238] sm:$0xff]
        %v4669 = vld [vmem:[%s815 + $0x240] sm:$0xff]
        %v4670 = vld [vmem:[%s815 + $0x248] sm:$0xff]
        %v4671 = vld [vmem:[%s815 + $0x250] sm:$0xff]
        %v4672 = vld [vmem:[%s815 + $0x258] sm:$0xff]
        %v4673 = vld [vmem:[%s815 + $0x260] sm:$0xff]
        %v4674 = vld [vmem:[%s815 + $0x268] sm:$0xff]
        %v4675 = vld [vmem:[%s815 + $0x270] sm:$0xff]
        %v4676 = vld [vmem:[%s815 + $0x278] sm:$0xff]
        %v4677 = vld [vmem:[%s815 + $0x280] sm:$0xff]
        %v4678 = vld [vmem:[%s815 + $0x288] sm:$0xff]
        %v4679 = vld [vmem:[%s815 + $0x290] sm:$0xff]
        %v4680 = vld [vmem:[%s815 + $0x298] sm:$0xff]
        %v4681 = vld [vmem:[%s815 + $0x2a0] sm:$0xff]
        %v4682 = vld [vmem:[%s815 + $0x2a8] sm:$0xff]
        %v4683 = vld [vmem:[%s815 + $0x2b0] sm:$0xff]
        %v4684 = vld [vmem:[%s815 + $0x2b8] sm:$0xff]
        %v4685 = vld [vmem:[%s815 + $0x2c0] sm:$0xff]
        %v4686 = vld [vmem:[%s815 + $0x2c8] sm:$0xff]
        %v4687 = vld [vmem:[%s815 + $0x2d0] sm:$0xff]
        %v4688 = vld [vmem:[%s815 + $0x2d8] sm:$0xff]
        %v4689 = vld [vmem:[%s815 + $0x2e0] sm:$0xff]
        %v4690 = vld [vmem:[%s815 + $0x2e8] sm:$0xff]
        %v4691 = vld [vmem:[%s815 + $0x2f0] sm:$0xff]
        %v4692 = vld [vmem:[%s815 + $0x2f8] sm:$0xff]
        %v4693 = vld [vmem:[%s815 + $0x300] sm:$0xff]
        %v4694 = vld [vmem:[%s815 + $0x308] sm:$0xff]
        %v4695 = vld [vmem:[%s815 + $0x310] sm:$0xff]
        %v4696 = vld [vmem:[%s815 + $0x318] sm:$0xff]
        %v4697 = vld [vmem:[%s815 + $0x320] sm:$0xff]
        %v4698 = vld [vmem:[%s815 + $0x328] sm:$0xff]
        %v4699 = vld [vmem:[%s815 + $0x330] sm:$0xff]
        %v4700 = vld [vmem:[%s815 + $0x338] sm:$0xff]
        %v4701 = vld [vmem:[%s815 + $0x340] sm:$0xff]
        %v4702 = vld [vmem:[%s815 + $0x348] sm:$0xff]
        %v4703 = vld [vmem:[%s815 + $0x350] sm:$0xff]
        %v4704 = vld [vmem:[%s815 + $0x358] sm:$0xff]
        %v4705 = vld [vmem:[%s815 + $0x360] sm:$0xff]
        %v4706 = vld [vmem:[%s815 + $0x368] sm:$0xff]
        %v4707 = vld [vmem:[%s815 + $0x370] sm:$0xff]
        %v4708 = vld [vmem:[%s815 + $0x378] sm:$0xff]
        %v4709 = vld [vmem:[%s815 + $0x380] sm:$0xff]
        %v4710 = vld [vmem:[%s815 + $0x388] sm:$0xff]
        %v4711 = vld [vmem:[%s815 + $0x390] sm:$0xff]
        %v4712 = vld [vmem:[%s815 + $0x398] sm:$0xff]
        %v4713 = vld [vmem:[%s815 + $0x3a0] sm:$0xff]
        %v4714 = vld [vmem:[%s815 + $0x3a8] sm:$0xff]
        %v4715 = vld [vmem:[%s815 + $0x3b0] sm:$0xff]
        %v4716 = vld [vmem:[%s815 + $0x3b8] sm:$0xff]
        %v4717 = vld [vmem:[%s815 + $0x3c0] sm:$0xff]
        %v4718 = vld [vmem:[%s815 + $0x3c8] sm:$0xff]
        %v4719 = vld [vmem:[%s815 + $0x3d0] sm:$0xff]
        %v4720 = vld [vmem:[%s815 + $0x3d8] sm:$0xff]
        %v4721 = vld [vmem:[%s815 + $0x3e0] sm:$0xff]
        %v4722 = vld [vmem:[%s815 + $0x3e8] sm:$0xff]
        %v4723 = vld [vmem:[%s815 + $0x3f0] sm:$0xff]
        %v4724 = vld [vmem:[%s815 + $0x3f8] sm:$0xff]
        %v4725 = vld [vmem:[%s824] sm:$0x3]
        %v4727 = vlaneseq
        %v4728 = vshrl.u32 %v4727, 7
        %v4729 = vsub.s32 0, %v4728
        %v4730 = vrot.slane %v4725, %v4729
        %v4731 = vlaneseq
        %v4732 = vshrl.u32 %v4731, 7
        %v4733 = vsub.s32 1, %v4732
        %v4734 = vrot.slane %v4725, %v4733
        %v4865 = vunpack.c.l.b16 %v4597
        %v4866 = vunpack.c.h.b16 %v4597
        %v4867 = vunpack.c.l.b16 %v4598
        %v4868 = vunpack.c.h.b16 %v4598
        %v4869 = vunpack.c.l.b16 %v4599
        %v4870 = vunpack.c.h.b16 %v4599
        %v4871 = vunpack.c.l.b16 %v4600
        %v4872 = vunpack.c.h.b16 %v4600
        %v4873 = vunpack.c.l.b16 %v4601
        %v4874 = vunpack.c.h.b16 %v4601
        %v4875 = vunpack.c.l.b16 %v4602
        %v4876 = vunpack.c.h.b16 %v4602
        %v4877 = vunpack.c.l.b16 %v4603
        %v4878 = vunpack.c.h.b16 %v4603
        %v4879 = vunpack.c.l.b16 %v4604
        %v4880 = vunpack.c.h.b16 %v4604
        %v4881 = vunpack.c.l.b16 %v4605
        %v4882 = vunpack.c.h.b16 %v4605
        %v4883 = vunpack.c.l.b16 %v4606
        %v4884 = vunpack.c.h.b16 %v4606
        %v4885 = vunpack.c.l.b16 %v4607
        %v4886 = vunpack.c.h.b16 %v4607
        %v4887 = vunpack.c.l.b16 %v4608
        %v4888 = vunpack.c.h.b16 %v4608
        %v4889 = vunpack.c.l.b16 %v4609
        %v4890 = vunpack.c.h.b16 %v4609
        %v4891 = vunpack.c.l.b16 %v4610
        %v4892 = vunpack.c.h.b16 %v4610
        %v4893 = vunpack.c.l.b16 %v4611
        %v4894 = vunpack.c.h.b16 %v4611
        %v4895 = vunpack.c.l.b16 %v4612
        %v4896 = vunpack.c.h.b16 %v4612
        %v4897 = vunpack.c.l.b16 %v4613
        %v4898 = vunpack.c.h.b16 %v4613
        %v4899 = vunpack.c.l.b16 %v4614
        %v4900 = vunpack.c.h.b16 %v4614
        %v4901 = vunpack.c.l.b16 %v4615
        %v4902 = vunpack.c.h.b16 %v4615
        %v4903 = vunpack.c.l.b16 %v4616
        %v4904 = vunpack.c.h.b16 %v4616
        %v4905 = vunpack.c.l.b16 %v4617
        %v4906 = vunpack.c.h.b16 %v4617
        %v4907 = vunpack.c.l.b16 %v4618
        %v4908 = vunpack.c.h.b16 %v4618
        %v4909 = vunpack.c.l.b16 %v4619
        %v4910 = vunpack.c.h.b16 %v4619
        %v4911 = vunpack.c.l.b16 %v4620
        %v4912 = vunpack.c.h.b16 %v4620
        %v4913 = vunpack.c.l.b16 %v4621
        %v4914 = vunpack.c.h.b16 %v4621
        %v4915 = vunpack.c.l.b16 %v4622
        %v4916 = vunpack.c.h.b16 %v4622
        %v4917 = vunpack.c.l.b16 %v4623
        %v4918 = vunpack.c.h.b16 %v4623
        %v4919 = vunpack.c.l.b16 %v4624
        %v4920 = vunpack.c.h.b16 %v4624
        %v4921 = vunpack.c.l.b16 %v4625
        %v4922 = vunpack.c.h.b16 %v4625
        %v4923 = vunpack.c.l.b16 %v4626
        %v4924 = vunpack.c.h.b16 %v4626
        %v4925 = vunpack.c.l.b16 %v4627
        %v4926 = vunpack.c.h.b16 %v4627
        %v4927 = vunpack.c.l.b16 %v4628
        %v4928 = vunpack.c.h.b16 %v4628
        %v4929 = vunpack.c.l.b16 %v4629
        %v4930 = vunpack.c.h.b16 %v4629
        %v4931 = vunpack.c.l.b16 %v4630
        %v4932 = vunpack.c.h.b16 %v4630
        %v4933 = vunpack.c.l.b16 %v4631
        %v4934 = vunpack.c.h.b16 %v4631
        %v4935 = vunpack.c.l.b16 %v4632
        %v4936 = vunpack.c.h.b16 %v4632
        %v4937 = vunpack.c.l.b16 %v4633
        %v4938 = vunpack.c.h.b16 %v4633
        %v4939 = vunpack.c.l.b16 %v4634
        %v4940 = vunpack.c.h.b16 %v4634
        %v4941 = vunpack.c.l.b16 %v4635
        %v4942 = vunpack.c.h.b16 %v4635
        %v4943 = vunpack.c.l.b16 %v4636
        %v4944 = vunpack.c.h.b16 %v4636
        %v4945 = vunpack.c.l.b16 %v4637
        %v4946 = vunpack.c.h.b16 %v4637
        %v4947 = vunpack.c.l.b16 %v4638
        %v4948 = vunpack.c.h.b16 %v4638
        %v4949 = vunpack.c.l.b16 %v4639
        %v4950 = vunpack.c.h.b16 %v4639
        %v4951 = vunpack.c.l.b16 %v4640
        %v4952 = vunpack.c.h.b16 %v4640
        %v4953 = vunpack.c.l.b16 %v4641
        %v4954 = vunpack.c.h.b16 %v4641
        %v4955 = vunpack.c.l.b16 %v4642
        %v4956 = vunpack.c.h.b16 %v4642
        %v4957 = vunpack.c.l.b16 %v4643
        %v4958 = vunpack.c.h.b16 %v4643
        %v4959 = vunpack.c.l.b16 %v4644
        %v4960 = vunpack.c.h.b16 %v4644
        %v4961 = vunpack.c.l.b16 %v4645
        %v4962 = vunpack.c.h.b16 %v4645
        %v4963 = vunpack.c.l.b16 %v4646
        %v4964 = vunpack.c.h.b16 %v4646
        %v4965 = vunpack.c.l.b16 %v4647
        %v4966 = vunpack.c.h.b16 %v4647
        %v4967 = vunpack.c.l.b16 %v4648
        %v4968 = vunpack.c.h.b16 %v4648
        %v4969 = vunpack.c.l.b16 %v4649
        %v4970 = vunpack.c.h.b16 %v4649
        %v4971 = vunpack.c.l.b16 %v4650
        %v4972 = vunpack.c.h.b16 %v4650
        %v4973 = vunpack.c.l.b16 %v4651
        %v4974 = vunpack.c.h.b16 %v4651
        %v4975 = vunpack.c.l.b16 %v4652
        %v4976 = vunpack.c.h.b16 %v4652
        %v4977 = vunpack.c.l.b16 %v4653
        %v4978 = vunpack.c.h.b16 %v4653
        %v4979 = vunpack.c.l.b16 %v4654
        %v4980 = vunpack.c.h.b16 %v4654
        %v4981 = vunpack.c.l.b16 %v4655
        %v4982 = vunpack.c.h.b16 %v4655
        %v4983 = vunpack.c.l.b16 %v4656
        %v4984 = vunpack.c.h.b16 %v4656
        %v4985 = vunpack.c.l.b16 %v4657
        %v4986 = vunpack.c.h.b16 %v4657
        %v4987 = vunpack.c.l.b16 %v4658
        %v4988 = vunpack.c.h.b16 %v4658
        %v4989 = vunpack.c.l.b16 %v4659
        %v4990 = vunpack.c.h.b16 %v4659
        %v4991 = vunpack.c.l.b16 %v4660
        %v4992 = vunpack.c.h.b16 %v4660
        %v4993 = vunpack.c.l.b16 %v4661
        %v4994 = vunpack.c.h.b16 %v4661
        %v4995 = vunpack.c.l.b16 %v4662
        %v4996 = vunpack.c.h.b16 %v4662
        %v4997 = vunpack.c.l.b16 %v4663
        %v4998 = vunpack.c.h.b16 %v4663
        %v4999 = vunpack.c.l.b16 %v4664
        %v5000 = vunpack.c.h.b16 %v4664
        %v5001 = vunpack.c.l.b16 %v4665
        %v5002 = vunpack.c.h.b16 %v4665
        %v5003 = vunpack.c.l.b16 %v4666
        %v5004 = vunpack.c.h.b16 %v4666
        %v5005 = vunpack.c.l.b16 %v4667
        %v5006 = vunpack.c.h.b16 %v4667
        %v5007 = vunpack.c.l.b16 %v4668
        %v5008 = vunpack.c.h.b16 %v4668
        %v5009 = vunpack.c.l.b16 %v4669
        %v5010 = vunpack.c.h.b16 %v4669
        %v5011 = vunpack.c.l.b16 %v4670
        %v5012 = vunpack.c.h.b16 %v4670
        %v5013 = vunpack.c.l.b16 %v4671
        %v5014 = vunpack.c.h.b16 %v4671
        %v5015 = vunpack.c.l.b16 %v4672
        %v5016 = vunpack.c.h.b16 %v4672
        %v5017 = vunpack.c.l.b16 %v4673
        %v5018 = vunpack.c.h.b16 %v4673
        %v5019 = vunpack.c.l.b16 %v4674
        %v5020 = vunpack.c.h.b16 %v4674
        %v5021 = vunpack.c.l.b16 %v4675
        %v5022 = vunpack.c.h.b16 %v4675
        %v5023 = vunpack.c.l.b16 %v4676
        %v5024 = vunpack.c.h.b16 %v4676
        %v5025 = vunpack.c.l.b16 %v4677
        %v5026 = vunpack.c.h.b16 %v4677
        %v5027 = vunpack.c.l.b16 %v4678
        %v5028 = vunpack.c.h.b16 %v4678
        %v5029 = vunpack.c.l.b16 %v4679
        %v5030 = vunpack.c.h.b16 %v4679
        %v5031 = vunpack.c.l.b16 %v4680
        %v5032 = vunpack.c.h.b16 %v4680
        %v5033 = vunpack.c.l.b16 %v4681
        %v5034 = vunpack.c.h.b16 %v4681
        %v5035 = vunpack.c.l.b16 %v4682
        %v5036 = vunpack.c.h.b16 %v4682
        %v5037 = vunpack.c.l.b16 %v4683
        %v5038 = vunpack.c.h.b16 %v4683
        %v5039 = vunpack.c.l.b16 %v4684
        %v5040 = vunpack.c.h.b16 %v4684
        %v5041 = vunpack.c.l.b16 %v4685
        %v5042 = vunpack.c.h.b16 %v4685
        %v5043 = vunpack.c.l.b16 %v4686
        %v5044 = vunpack.c.h.b16 %v4686
        %v5045 = vunpack.c.l.b16 %v4687
        %v5046 = vunpack.c.h.b16 %v4687
        %v5047 = vunpack.c.l.b16 %v4688
        %v5048 = vunpack.c.h.b16 %v4688
        %v5049 = vunpack.c.l.b16 %v4689
        %v5050 = vunpack.c.h.b16 %v4689
        %v5051 = vunpack.c.l.b16 %v4690
        %v5052 = vunpack.c.h.b16 %v4690
        %v5053 = vunpack.c.l.b16 %v4691
        %v5054 = vunpack.c.h.b16 %v4691
        %v5055 = vunpack.c.l.b16 %v4692
        %v5056 = vunpack.c.h.b16 %v4692
        %v5057 = vunpack.c.l.b16 %v4693
        %v5058 = vunpack.c.h.b16 %v4693
        %v5059 = vunpack.c.l.b16 %v4694
        %v5060 = vunpack.c.h.b16 %v4694
        %v5061 = vunpack.c.l.b16 %v4695
        %v5062 = vunpack.c.h.b16 %v4695
        %v5063 = vunpack.c.l.b16 %v4696
        %v5064 = vunpack.c.h.b16 %v4696
        %v5065 = vunpack.c.l.b16 %v4697
        %v5066 = vunpack.c.h.b16 %v4697
        %v5067 = vunpack.c.l.b16 %v4698
        %v5068 = vunpack.c.h.b16 %v4698
        %v5069 = vunpack.c.l.b16 %v4699
        %v5070 = vunpack.c.h.b16 %v4699
        %v5071 = vunpack.c.l.b16 %v4700
        %v5072 = vunpack.c.h.b16 %v4700
        %v5073 = vunpack.c.l.b16 %v4701
        %v5074 = vunpack.c.h.b16 %v4701
        %v5075 = vunpack.c.l.b16 %v4702
        %v5076 = vunpack.c.h.b16 %v4702
        %v5077 = vunpack.c.l.b16 %v4703
        %v5078 = vunpack.c.h.b16 %v4703
        %v5079 = vunpack.c.l.b16 %v4704
        %v5080 = vunpack.c.h.b16 %v4704
        %v5081 = vunpack.c.l.b16 %v4705
        %v5082 = vunpack.c.h.b16 %v4705
        %v5083 = vunpack.c.l.b16 %v4706
        %v5084 = vunpack.c.h.b16 %v4706
        %v5085 = vunpack.c.l.b16 %v4707
        %v5086 = vunpack.c.h.b16 %v4707
        %v5087 = vunpack.c.l.b16 %v4708
        %v5088 = vunpack.c.h.b16 %v4708
        %v5089 = vunpack.c.l.b16 %v4709
        %v5090 = vunpack.c.h.b16 %v4709
        %v5091 = vunpack.c.l.b16 %v4710
        %v5092 = vunpack.c.h.b16 %v4710
        %v5093 = vunpack.c.l.b16 %v4711
        %v5094 = vunpack.c.h.b16 %v4711
        %v5095 = vunpack.c.l.b16 %v4712
        %v5096 = vunpack.c.h.b16 %v4712
        %v5097 = vunpack.c.l.b16 %v4713
        %v5098 = vunpack.c.h.b16 %v4713
        %v5099 = vunpack.c.l.b16 %v4714
        %v5100 = vunpack.c.h.b16 %v4714
        %v5101 = vunpack.c.l.b16 %v4715
        %v5102 = vunpack.c.h.b16 %v4715
        %v5103 = vunpack.c.l.b16 %v4716
        %v5104 = vunpack.c.h.b16 %v4716
        %v5105 = vunpack.c.l.b16 %v4717
        %v5106 = vunpack.c.h.b16 %v4717
        %v5107 = vunpack.c.l.b16 %v4718
        %v5108 = vunpack.c.h.b16 %v4718
        %v5109 = vunpack.c.l.b16 %v4719
        %v5110 = vunpack.c.h.b16 %v4719
        %v5111 = vunpack.c.l.b16 %v4720
        %v5112 = vunpack.c.h.b16 %v4720
        %v5113 = vunpack.c.l.b16 %v4721
        %v5114 = vunpack.c.h.b16 %v4721
        %v5115 = vunpack.c.l.b16 %v4722
        %v5116 = vunpack.c.h.b16 %v4722
        %v5117 = vunpack.c.l.b16 %v4723
        %v5118 = vunpack.c.h.b16 %v4723
        %v5119 = vunpack.c.l.b16 %v4724
        %v5120 = vunpack.c.h.b16 %v4724
        %v5121 = vpack.c.b16 %v4867, %v4865
        %v5122 = vpack.c.b16 %v4868, %v4866
        %v5123 = vpack.c.b16 %v4871, %v4869
        %v5124 = vpack.c.b16 %v4872, %v4870
        %v5125 = vpack.c.b16 %v4875, %v4873
        %v5126 = vpack.c.b16 %v4876, %v4874
        %v5127 = vpack.c.b16 %v4879, %v4877
        %v5128 = vpack.c.b16 %v4880, %v4878
        %v5129 = vpack.c.b16 %v4883, %v4881
        %v5130 = vpack.c.b16 %v4884, %v4882
        %v5131 = vpack.c.b16 %v4887, %v4885
        %v5132 = vpack.c.b16 %v4888, %v4886
        %v5133 = vpack.c.b16 %v4891, %v4889
        %v5134 = vpack.c.b16 %v4892, %v4890
        %v5135 = vpack.c.b16 %v4895, %v4893
        %v5136 = vpack.c.b16 %v4896, %v4894
        %v5137 = vpack.c.b16 %v4899, %v4897
        %v5138 = vpack.c.b16 %v4900, %v4898
        %v5139 = vpack.c.b16 %v4903, %v4901
        %v5140 = vpack.c.b16 %v4904, %v4902
        %v5141 = vpack.c.b16 %v4907, %v4905
        %v5142 = vpack.c.b16 %v4908, %v4906
        %v5143 = vpack.c.b16 %v4911, %v4909
        %v5144 = vpack.c.b16 %v4912, %v4910
        %v5145 = vpack.c.b16 %v4915, %v4913
        %v5146 = vpack.c.b16 %v4916, %v4914
        %v5147 = vpack.c.b16 %v4919, %v4917
        %v5148 = vpack.c.b16 %v4920, %v4918
        %v5149 = vpack.c.b16 %v4923, %v4921
        %v5150 = vpack.c.b16 %v4924, %v4922
        %v5151 = vpack.c.b16 %v4927, %v4925
        %v5152 = vpack.c.b16 %v4928, %v4926
        %v5153 = vpack.c.b16 %v4931, %v4929
        %v5154 = vpack.c.b16 %v4932, %v4930
        %v5155 = vpack.c.b16 %v4935, %v4933
        %v5156 = vpack.c.b16 %v4936, %v4934
        %v5157 = vpack.c.b16 %v4939, %v4937
        %v5158 = vpack.c.b16 %v4940, %v4938
        %v5159 = vpack.c.b16 %v4943, %v4941
        %v5160 = vpack.c.b16 %v4944, %v4942
        %v5161 = vpack.c.b16 %v4947, %v4945
        %v5162 = vpack.c.b16 %v4948, %v4946
        %v5163 = vpack.c.b16 %v4951, %v4949
        %v5164 = vpack.c.b16 %v4952, %v4950
        %v5165 = vpack.c.b16 %v4955, %v4953
        %v5166 = vpack.c.b16 %v4956, %v4954
        %v5167 = vpack.c.b16 %v4959, %v4957
        %v5168 = vpack.c.b16 %v4960, %v4958
        %v5169 = vpack.c.b16 %v4963, %v4961
        %v5170 = vpack.c.b16 %v4964, %v4962
        %v5171 = vpack.c.b16 %v4967, %v4965
        %v5172 = vpack.c.b16 %v4968, %v4966
        %v5173 = vpack.c.b16 %v4971, %v4969
        %v5174 = vpack.c.b16 %v4972, %v4970
        %v5175 = vpack.c.b16 %v4975, %v4973
        %v5176 = vpack.c.b16 %v4976, %v4974
        %v5177 = vpack.c.b16 %v4979, %v4977
        %v5178 = vpack.c.b16 %v4980, %v4978
        %v5179 = vpack.c.b16 %v4983, %v4981
        %v5180 = vpack.c.b16 %v4984, %v4982
        %v5181 = vpack.c.b16 %v4987, %v4985
        %v5182 = vpack.c.b16 %v4988, %v4986
        %v5183 = vpack.c.b16 %v4991, %v4989
        %v5184 = vpack.c.b16 %v4992, %v4990
        %v5185 = vpack.c.b16 %v4995, %v4993
        %v5186 = vpack.c.b16 %v4996, %v4994
        %v5187 = vpack.c.b16 %v4999, %v4997
        %v5188 = vpack.c.b16 %v5000, %v4998
        %v5189 = vpack.c.b16 %v5003, %v5001
        %v5190 = vpack.c.b16 %v5004, %v5002
        %v5191 = vpack.c.b16 %v5007, %v5005
        %v5192 = vpack.c.b16 %v5008, %v5006
        %v5193 = vpack.c.b16 %v5011, %v5009
        %v5194 = vpack.c.b16 %v5012, %v5010
        %v5195 = vpack.c.b16 %v5015, %v5013
        %v5196 = vpack.c.b16 %v5016, %v5014
        %v5197 = vpack.c.b16 %v5019, %v5017
        %v5198 = vpack.c.b16 %v5020, %v5018
        %v5199 = vpack.c.b16 %v5023, %v5021
        %v5200 = vpack.c.b16 %v5024, %v5022
        %v5201 = vpack.c.b16 %v5027, %v5025
        %v5202 = vpack.c.b16 %v5028, %v5026
        %v5203 = vpack.c.b16 %v5031, %v5029
        %v5204 = vpack.c.b16 %v5032, %v5030
        %v5205 = vpack.c.b16 %v5035, %v5033
        %v5206 = vpack.c.b16 %v5036, %v5034
        %v5207 = vpack.c.b16 %v5039, %v5037
        %v5208 = vpack.c.b16 %v5040, %v5038
        %v5209 = vpack.c.b16 %v5043, %v5041
        %v5210 = vpack.c.b16 %v5044, %v5042
        %v5211 = vpack.c.b16 %v5047, %v5045
        %v5212 = vpack.c.b16 %v5048, %v5046
        %v5213 = vpack.c.b16 %v5051, %v5049
        %v5214 = vpack.c.b16 %v5052, %v5050
        %v5215 = vpack.c.b16 %v5055, %v5053
        %v5216 = vpack.c.b16 %v5056, %v5054
        %v5217 = vpack.c.b16 %v5059, %v5057
        %v5218 = vpack.c.b16 %v5060, %v5058
        %v5219 = vpack.c.b16 %v5063, %v5061
        %v5220 = vpack.c.b16 %v5064, %v5062
        %v5221 = vpack.c.b16 %v5067, %v5065
        %v5222 = vpack.c.b16 %v5068, %v5066
        %v5223 = vpack.c.b16 %v5071, %v5069
        %v5224 = vpack.c.b16 %v5072, %v5070
        %v5225 = vpack.c.b16 %v5075, %v5073
        %v5226 = vpack.c.b16 %v5076, %v5074
        %v5227 = vpack.c.b16 %v5079, %v5077
        %v5228 = vpack.c.b16 %v5080, %v5078
        %v5229 = vpack.c.b16 %v5083, %v5081
        %v5230 = vpack.c.b16 %v5084, %v5082
        %v5231 = vpack.c.b16 %v5087, %v5085
        %v5232 = vpack.c.b16 %v5088, %v5086
        %v5233 = vpack.c.b16 %v5091, %v5089
        %v5234 = vpack.c.b16 %v5092, %v5090
        %v5235 = vpack.c.b16 %v5095, %v5093
        %v5236 = vpack.c.b16 %v5096, %v5094
        %v5237 = vpack.c.b16 %v5099, %v5097
        %v5238 = vpack.c.b16 %v5100, %v5098
        %v5239 = vpack.c.b16 %v5103, %v5101
        %v5240 = vpack.c.b16 %v5104, %v5102
        %v5241 = vpack.c.b16 %v5107, %v5105
        %v5242 = vpack.c.b16 %v5108, %v5106
        %v5243 = vpack.c.b16 %v5111, %v5109
        %v5244 = vpack.c.b16 %v5112, %v5110
        %v5245 = vpack.c.b16 %v5115, %v5113
        %v5246 = vpack.c.b16 %v5116, %v5114
        %v5247 = vpack.c.b16 %v5119, %v5117
        %v5248 = vpack.c.b16 %v5120, %v5118
        %5377 = vmatprep.subr.bf16.mxu0 %v5122
        %5378 = vmatpush1.bf16.msra.mxu0 %v5121
        %5379 = vmatprep.subr.bf16.mxu0 %v5124
        %5380 = vmatpush1.bf16.msra.mxu0 %v5123
        %5381 = vmatprep.subr.bf16.mxu0 %v5126
        %5382 = vmatpush1.bf16.msra.mxu0 %v5125
        %5383 = vmatprep.subr.bf16.mxu0 %v5128
        %5384 = vmatpush1.bf16.msra.mxu0 %v5127
        %5385 = vmatprep.subr.bf16.mxu0 %v5130
        %5386 = vmatpush1.bf16.msra.mxu0 %v5129
        %5387 = vmatprep.subr.bf16.mxu0 %v5132
        %5388 = vmatpush1.bf16.msra.mxu0 %v5131
        %5389 = vmatprep.subr.bf16.mxu0 %v5134
        %5390 = vmatpush1.bf16.msra.mxu0 %v5133
        %5391 = vmatprep.subr.bf16.mxu0 %v5136
        %5392 = vmatpush1.bf16.msra.mxu0 %v5135
        %5393 = vmatprep.subr.bf16.mxu0 %v5138
        %5394 = vmatpush1.bf16.msra.mxu0 %v5137
        %5395 = vmatprep.subr.bf16.mxu0 %v5140
        %5396 = vmatpush1.bf16.msra.mxu0 %v5139
        %5397 = vmatprep.subr.bf16.mxu0 %v5142
        %5398 = vmatpush1.bf16.msra.mxu0 %v5141
        %5399 = vmatprep.subr.bf16.mxu0 %v5144
        %5400 = vmatpush1.bf16.msra.mxu0 %v5143
        %5401 = vmatprep.subr.bf16.mxu0 %v5146
        %5402 = vmatpush1.bf16.msra.mxu0 %v5145
        %5403 = vmatprep.subr.bf16.mxu0 %v5148
        %5404 = vmatpush1.bf16.msra.mxu0 %v5147
        %5405 = vmatprep.subr.bf16.mxu0 %v5150
        %5406 = vmatpush1.bf16.msra.mxu0 %v5149
        %5407 = vmatprep.subr.bf16.mxu0 %v5152
        %5408 = vmatpush1.bf16.msra.mxu0 %v5151
        %5409 = vmatprep.mubr.bf16.mxu0 %v4582
        %5410 = vmatmul.mubr.bf16.gmra.mrb[0].mxu0 %v4581
        %v5411 = vpop.f32.mrb[0].mxu0
        %v5412 = vadd.f32 %v4730, %v5411
        %v5413 = vpop.f32.mrb[0].mxu0
        %v5414 = vadd.f32 %v4734, %v5413
        %v5415 = vpop.f32.mrb[0].mxu0
        %v5416 = vadd.f32 %v4730, %v5415
        %v5417 = vpop.f32.mrb[0].mxu0
        %v5418 = vadd.f32 %v4734, %v5417
        %5419 = vmatprep.mubr.bf16.mxu0 %v4590
        %5420 = vmatmul.mubr.bf16.gmra.mrb[0].mxu0 %v4589
        %v5421 = vpop.f32.mrb[0].mxu0
        %v5422 = vadd.f32 %v4730, %v5421
        %v5423 = vpop.f32.mrb[0].mxu0
        %v5424 = vadd.f32 %v4734, %v5423
        %v5425 = vpop.f32.mrb[0].mxu0
        %v5426 = vadd.f32 %v4730, %v5425
        %v5427 = vpop.f32.mrb[0].mxu0
        %v5428 = vadd.f32 %v4734, %v5427
        %5429 = vdwg.mxu0
        %5430 = vmatprep.subr.bf16.mxu0 %v5154
        %5431 = vmatpush1.bf16.msra.mxu0 %v5153
        %5432 = vmatprep.subr.bf16.mxu0 %v5156
        %5433 = vmatpush1.bf16.msra.mxu0 %v5155
        %5434 = vmatprep.subr.bf16.mxu0 %v5158
        %5435 = vmatpush1.bf16.msra.mxu0 %v5157
        %5436 = vmatprep.subr.bf16.mxu0 %v5160
        %5437 = vmatpush1.bf16.msra.mxu0 %v5159
        %5438 = vmatprep.subr.bf16.mxu0 %v5162
        %5439 = vmatpush1.bf16.msra.mxu0 %v5161
        %5440 = vmatprep.subr.bf16.mxu0 %v5164
        %5441 = vmatpush1.bf16.msra.mxu0 %v5163
        %5442 = vmatprep.subr.bf16.mxu0 %v5166
        %5443 = vmatpush1.bf16.msra.mxu0 %v5165
        %5444 = vmatprep.subr.bf16.mxu0 %v5168
        %5445 = vmatpush1.bf16.msra.mxu0 %v5167
        %5446 = vmatprep.subr.bf16.mxu0 %v5170
        %5447 = vmatpush1.bf16.msra.mxu0 %v5169
        %5448 = vmatprep.subr.bf16.mxu0 %v5172
        %5449 = vmatpush1.bf16.msra.mxu0 %v5171
        %5450 = vmatprep.subr.bf16.mxu0 %v5174
        %5451 = vmatpush1.bf16.msra.mxu0 %v5173
        %5452 = vmatprep.subr.bf16.mxu0 %v5176
        %5453 = vmatpush1.bf16.msra.mxu0 %v5175
        %5454 = vmatprep.subr.bf16.mxu0 %v5178
        %5455 = vmatpush1.bf16.msra.mxu0 %v5177
        %5456 = vmatprep.subr.bf16.mxu0 %v5180
        %5457 = vmatpush1.bf16.msra.mxu0 %v5179
        %5458 = vmatprep.subr.bf16.mxu0 %v5182
        %5459 = vmatpush1.bf16.msra.mxu0 %v5181
        %5460 = vmatprep.subr.bf16.mxu0 %v5184
        %5461 = vmatpush1.bf16.msra.mxu0 %v5183
        %5462 = vmatprep.mubr.bf16.mxu0 %v4584
        %5463 = vmatmul.mubr.bf16.gmra.mrb[0].mxu0 %v4583
        %v5464 = vpop.f32.mrb[0].mxu0
        %v5465 = vadd.f32 %v5412, %v5464
        %v5466 = vpop.f32.mrb[0].mxu0
        %v5467 = vadd.f32 %v5414, %v5466
        %v5468 = vpop.f32.mrb[0].mxu0
        %v5469 = vadd.f32 %v5416, %v5468
        %v5470 = vpop.f32.mrb[0].mxu0
        %v5471 = vadd.f32 %v5418, %v5470
        %5472 = vmatprep.mubr.bf16.mxu0 %v4592
        %5473 = vmatmul.mubr.bf16.gmra.mrb[0].mxu0 %v4591
        %v5474 = vpop.f32.mrb[0].mxu0
        %v5475 = vadd.f32 %v5422, %v5474
        %v5476 = vpop.f32.mrb[0].mxu0
        %v5477 = vadd.f32 %v5424, %v5476
        %v5478 = vpop.f32.mrb[0].mxu0
        %v5479 = vadd.f32 %v5426, %v5478
        %v5480 = vpop.f32.mrb[0].mxu0
        %v5481 = vadd.f32 %v5428, %v5480
        %5482 = vdwg.mxu0
        %5483 = vmatprep.subr.bf16.mxu0 %v5186
        %5484 = vmatpush1.bf16.msra.mxu0 %v5185
        %5485 = vmatprep.subr.bf16.mxu0 %v5188
        %5486 = vmatpush1.bf16.msra.mxu0 %v5187
        %5487 = vmatprep.subr.bf16.mxu0 %v5190
        %5488 = vmatpush1.bf16.msra.mxu0 %v5189
        %5489 = vmatprep.subr.bf16.mxu0 %v5192
        %5490 = vmatpush1.bf16.msra.mxu0 %v5191
        %5491 = vmatprep.subr.bf16.mxu0 %v5194
        %5492 = vmatpush1.bf16.msra.mxu0 %v5193
        %5493 = vmatprep.subr.bf16.mxu0 %v5196
        %5494 = vmatpush1.bf16.msra.mxu0 %v5195
        %5495 = vmatprep.subr.bf16.mxu0 %v5198
        %5496 = vmatpush1.bf16.msra.mxu0 %v5197
        %5497 = vmatprep.subr.bf16.mxu0 %v5200
        %5498 = vmatpush1.bf16.msra.mxu0 %v5199
        %5499 = vmatprep.subr.bf16.mxu0 %v5202
        %5500 = vmatpush1.bf16.msra.mxu0 %v5201
        %5501 = vmatprep.subr.bf16.mxu0 %v5204
        %5502 = vmatpush1.bf16.msra.mxu0 %v5203
        %5503 = vmatprep.subr.bf16.mxu0 %v5206
        %5504 = vmatpush1.bf16.msra.mxu0 %v5205
        %5505 = vmatprep.subr.bf16.mxu0 %v5208
        %5506 = vmatpush1.bf16.msra.mxu0 %v5207
        %5507 = vmatprep.subr.bf16.mxu0 %v5210
        %5508 = vmatpush1.bf16.msra.mxu0 %v5209
        %5509 = vmatprep.subr.bf16.mxu0 %v5212
        %5510 = vmatpush1.bf16.msra.mxu0 %v5211
        %5511 = vmatprep.subr.bf16.mxu0 %v5214
        %5512 = vmatpush1.bf16.msra.mxu0 %v5213
        %5513 = vmatprep.subr.bf16.mxu0 %v5216
        %5514 = vmatpush1.bf16.msra.mxu0 %v5215
        %5515 = vmatprep.mubr.bf16.mxu0 %v4586
        %5516 = vmatmul.mubr.bf16.gmra.mrb[0].mxu0 %v4585
        %v5517 = vpop.f32.mrb[0].mxu0
        %v5518 = vadd.f32 %v5465, %v5517
        %v5519 = vpop.f32.mrb[0].mxu0
        %v5520 = vadd.f32 %v5467, %v5519
        %v5521 = vpop.f32.mrb[0].mxu0
        %v5522 = vadd.f32 %v5469, %v5521
        %v5523 = vpop.f32.mrb[0].mxu0
        %v5524 = vadd.f32 %v5471, %v5523
        %5525 = vmatprep.mubr.bf16.mxu0 %v4594
        %5526 = vmatmul.mubr.bf16.gmra.mrb[0].mxu0 %v4593
        %v5527 = vpop.f32.mrb[0].mxu0
        %v5528 = vadd.f32 %v5475, %v5527
        %v5529 = vpop.f32.mrb[0].mxu0
        %v5530 = vadd.f32 %v5477, %v5529
        %v5531 = vpop.f32.mrb[0].mxu0
        %v5532 = vadd.f32 %v5479, %v5531
        %v5533 = vpop.f32.mrb[0].mxu0
        %v5534 = vadd.f32 %v5481, %v5533
        %5535 = vdwg.mxu0
        %5536 = vmatprep.subr.bf16.mxu0 %v5218
        %5537 = vmatpush1.bf16.msra.mxu0 %v5217
        %5538 = vmatprep.subr.bf16.mxu0 %v5220
        %5539 = vmatpush1.bf16.msra.mxu0 %v5219
        %5540 = vmatprep.subr.bf16.mxu0 %v5222
        %5541 = vmatpush1.bf16.msra.mxu0 %v5221
        %5542 = vmatprep.subr.bf16.mxu0 %v5224
        %5543 = vmatpush1.bf16.msra.mxu0 %v5223
        %5544 = vmatprep.subr.bf16.mxu0 %v5226
        %5545 = vmatpush1.bf16.msra.mxu0 %v5225
        %5546 = vmatprep.subr.bf16.mxu0 %v5228
        %5547 = vmatpush1.bf16.msra.mxu0 %v5227
        %5548 = vmatprep.subr.bf16.mxu0 %v5230
        %5549 = vmatpush1.bf16.msra.mxu0 %v5229
        %5550 = vmatprep.subr.bf16.mxu0 %v5232
        %5551 = vmatpush1.bf16.msra.mxu0 %v5231
        %5552 = vmatprep.subr.bf16.mxu0 %v5234
        %5553 = vmatpush1.bf16.msra.mxu0 %v5233
        %5554 = vmatprep.subr.bf16.mxu0 %v5236
        %5555 = vmatpush1.bf16.msra.mxu0 %v5235
        %5556 = vmatprep.subr.bf16.mxu0 %v5238
        %5557 = vmatpush1.bf16.msra.mxu0 %v5237
        %5558 = vmatprep.subr.bf16.mxu0 %v5240
        %5559 = vmatpush1.bf16.msra.mxu0 %v5239
        %5560 = vmatprep.subr.bf16.mxu0 %v5242
        %5561 = vmatpush1.bf16.msra.mxu0 %v5241
        %5562 = vmatprep.subr.bf16.mxu0 %v5244
        %5563 = vmatpush1.bf16.msra.mxu0 %v5243
        %5564 = vmatprep.subr.bf16.mxu0 %v5246
        %5565 = vmatpush1.bf16.msra.mxu0 %v5245
        %5566 = vmatprep.subr.bf16.mxu0 %v5248
        %5567 = vmatpush1.bf16.msra.mxu0 %v5247
        %5568 = vmatprep.mubr.bf16.mxu0 %v4588
        %5569 = vmatmul.mubr.bf16.gmra.mrb[0].mxu0 %v4587
        %v5570 = vpop.f32.mrb[0].mxu0
        %v5571 = vadd.f32 %v5518, %v5570
        %v5572 = vpop.f32.mrb[0].mxu0
        %v5573 = vadd.f32 %v5520, %v5572
        %v5574 = vpop.f32.mrb[0].mxu0
        %v5575 = vadd.f32 %v5522, %v5574
        %v5576 = vpop.f32.mrb[0].mxu0
        %v5577 = vadd.f32 %v5524, %v5576
        %5578 = vmatprep.mubr.bf16.mxu0 %v4596
        %5579 = vmatmul.mubr.bf16.gmra.mrb[0].mxu0 %v4595
        %v5580 = vpop.f32.mrb[0].mxu0
        %v5581 = vadd.f32 %v5528, %v5580
        %v5582 = vpop.f32.mrb[0].mxu0
        %v5583 = vadd.f32 %v5530, %v5582
        %v5584 = vpop.f32.mrb[0].mxu0
        %v5585 = vadd.f32 %v5532, %v5584
        %v5586 = vpop.f32.mrb[0].mxu0
        %v5587 = vadd.f32 %v5534, %v5586
        %5588 = vdwg.mxu0
        %v5589 = vadd.f32 %v3259, %v5571
        %v5590 = vadd.f32 %v3260, %v5573
        %v5591 = vadd.f32 %v3261, %v5575
        %v5592 = vadd.f32 %v3262, %v5577
        %v5593 = vadd.f32 %v3263, %v5581
        %v5594 = vadd.f32 %v3264, %v5583
        %v5595 = vadd.f32 %v3265, %v5585
        %v5596 = vadd.f32 %v3266, %v5587
        %v5597 = vld [vmem:[%s833] sm:$0x3]
        %v5598 = vld [vmem:[%s842] sm:$0x3]
        %v5599 = vadd.f32 %v5589, %v5590
        %5600 = vadd.xlane.f32.xlu0 %v5599
        %v5601 = vpop.xlane.xlu0 %5600
        %v5602 = vadd.f32 %v5591, %v5592
        %5603 = vadd.xlane.f32.xlu0 %v5602
        %v5604 = vpop.xlane.xlu0 %5603
        %v5605 = vadd.f32 %v5593, %v5594
        %5606 = vadd.xlane.f32.xlu0 %v5605
        %v5607 = vpop.xlane.xlu0 %5606
        %v5608 = vadd.f32 %v5595, %v5596
        %5609 = vadd.xlane.f32.xlu0 %v5608
        %v5610 = vpop.xlane.xlu0 %5609
        %v5611 = vmul.f32 %v5601, %v3176
        %v5612 = vmul.f32 %v5604, %v3176
        %v5613 = vmul.f32 %v5607, %v3176
        %v5614 = vmul.f32 %v5610, %v3176
        %v5615 = vsub.f32 %v5589, %v5611
        %v5616 = vsub.f32 %v5590, %v5611
        %v5617 = vsub.f32 %v5591, %v5612
        %v5618 = vsub.f32 %v5592, %v5612
        %v5619 = vsub.f32 %v5593, %v5613
        %v5620 = vsub.f32 %v5594, %v5613
        %v5621 = vsub.f32 %v5595, %v5614
        %v5622 = vsub.f32 %v5596, %v5614
        %v5623 = vmul.f32 %v5615, %v5615
        %v5624 = vmul.f32 %v5616, %v5616
        %v5625 = vmul.f32 %v5617, %v5617
        %v5626 = vmul.f32 %v5618, %v5618
        %v5627 = vmul.f32 %v5619, %v5619
        %v5628 = vmul.f32 %v5620, %v5620
        %v5629 = vmul.f32 %v5621, %v5621
        %v5630 = vmul.f32 %v5622, %v5622
        %v5631 = vadd.f32 %v5623, %v5624
        %5632 = vadd.xlane.f32.xlu0 %v5631
        %v5633 = vpop.xlane.xlu0 %5632
        %v5634 = vadd.f32 %v5625, %v5626
        %5635 = vadd.xlane.f32.xlu0 %v5634
        %v5636 = vpop.xlane.xlu0 %5635
        %v5637 = vadd.f32 %v5627, %v5628
        %5638 = vadd.xlane.f32.xlu0 %v5637
        %v5639 = vpop.xlane.xlu0 %5638
        %v5640 = vadd.f32 %v5629, %v5630
        %5641 = vadd.xlane.f32.xlu0 %v5640
        %v5642 = vpop.xlane.xlu0 %5641
        %v5643 = vmul.f32 %v5633, %v3176
        %v5644 = vmul.f32 %v5636, %v3176
        %v5645 = vmul.f32 %v5639, %v3176
        %v5646 = vmul.f32 %v5642, %v3176
        %v5647 = vadd.f32 %v5643, 1e-12
        %v5648 = vadd.f32 %v5644, 1e-12
        %v5649 = vadd.f32 %v5645, 1e-12
        %v5650 = vadd.f32 %v5646, 1e-12
        %v5651 = vrsqrt.pop %v5647
        %v5652 = vrsqrt.pop %v5648
        %v5653 = vrsqrt.pop %v5649
        %v5654 = vrsqrt.pop %v5650
        %v5655 = vmul.f32 %v5615, %v5651
        %v5656 = vmul.f32 %v5616, %v5651
        %v5657 = vmul.f32 %v5617, %v5652
        %v5658 = vmul.f32 %v5618, %v5652
        %v5659 = vmul.f32 %v5619, %v5653
        %v5660 = vmul.f32 %v5620, %v5653
        %v5661 = vmul.f32 %v5621, %v5654
        %v5662 = vmul.f32 %v5622, %v5654
        %v5664 = vlaneseq
        %v5665 = vshrl.u32 %v5664, 7
        %v5666 = vsub.s32 0, %v5665
        %v5667 = vrot.slane %v5597, %v5666
        %v5668 = vlaneseq
        %v5669 = vshrl.u32 %v5668, 7
        %v5670 = vsub.s32 1, %v5669
        %v5671 = vrot.slane %v5597, %v5670
        %v5674 = vmul.f32 %v5655, %v5667
        %v5675 = vmul.f32 %v5656, %v5671
        %v5676 = vmul.f32 %v5657, %v5667
        %v5677 = vmul.f32 %v5658, %v5671
        %v5678 = vmul.f32 %v5659, %v5667
        %v5679 = vmul.f32 %v5660, %v5671
        %v5680 = vmul.f32 %v5661, %v5667
        %v5681 = vmul.f32 %v5662, %v5671
        %v5683 = vlaneseq
        %v5684 = vshrl.u32 %v5683, 7
        %v5685 = vsub.s32 0, %v5684
        %v5686 = vrot.slane %v5598, %v5685
        %v5687 = vlaneseq
        %v5688 = vshrl.u32 %v5687, 7
        %v5689 = vsub.s32 1, %v5688
        %v5690 = vrot.slane %v5598, %v5689
        %v5693 = vadd.f32 %v5674, %v5686
        %v5694 = vadd.f32 %v5675, %v5690
        %v5695 = vadd.f32 %v5676, %v5686
        %v5696 = vadd.f32 %v5677, %v5690
        %v5697 = vadd.f32 %v5678, %v5686
        %v5698 = vadd.f32 %v5679, %v5690
        %v5699 = vadd.f32 %v5680, %v5686
        %v5700 = vadd.f32 %v5681, %v5690
        %5701 = vst [vmem:[%s16] sm:$0xff] %v5693
        %5702 = vst [vmem:[%s16 + $0x8] sm:$0xff] %v5694
        %5703 = vst [vmem:[%s16 + $0x10] sm:$0xff] %v5695
        %5704 = vst [vmem:[%s16 + $0x18] sm:$0xff] %v5696
        %5705 = vst [vmem:[%s16 + $0x20] sm:$0xff] %v5697
        %5706 = vst [vmem:[%s16 + $0x28] sm:$0xff] %v5698
        %5707 = vst [vmem:[%s16 + $0x30] sm:$0xff] %v5699
        %5708 = vst [vmem:[%s16 + $0x38] sm:$0xff] %v5700
        // Predicated region
        $region145: #{text_encoder_forward.1} parent=83 // pred_check
          %p5709 = pneg %p438
        $region146: #{text_encoder_forward.1} parent=83 // pred_check_branch
          %5711 = sbr.rel (%p5709) target = $region148
        $region147: #{text_encoder_forward.1} parent=83 // pred_region
          _
        $region148: #{text_encoder_forward.1} parent=83 // pred_fallthru
          _
        // Predicated region
        $region149: #{text_encoder_forward.1} parent=83 // pred_check
          %p5712 = pneg %p438
        $region150: #{text_encoder_forward.1} parent=83 // pred_check_branch
          %5714 = sbr.rel (%p5712) target = $region152
        $region151: #{text_encoder_forward.1} parent=83 // pred_region
          _
        $region152: #{text_encoder_forward.1} parent=83 // pred_fallthru
          _
      $region84: #{text_encoder_forward.1} parent=5 // pred_fallthru
        _
      %p5715 = scmp.le.s32.totalorder 2, %s24
      // Predicated region
      $region153: #{text_encoder_forward.1} parent=5 // pred_check
        %p5716 = pneg %p5715
      $region154: #{text_encoder_forward.1} parent=5 // pred_check_branch
        %5718 = sbr.rel (%p5716) target = $region156
      $region155: #{text_encoder_forward.1} parent=5 // pred_region
        %s5719 = ssub.s32 %s24, 2
      $region156: #{text_encoder_forward.1} parent=5 // pred_fallthru
        _
    $region6: #{text_encoder_forward.1} parent=1 // loop_footer
      %s28 = sadd.s32 1, %s24
    $region7: #{text_encoder_forward.1} parent=1 // loop_footer_branch
      %23 = sbr.rel target = $region3
    $region8: #{text_encoder_forward.1} parent=1 // loop_exit
      _
    %5720 = vsyncpa [#allocation3], 1
    %s5721 = scalar_lea.sflag [#allocation3], 1
    %5722 = vsyncpa %s5721, 1
    %5723 = vsyncpa [#allocation5], 1

</llo_original>
